<compile_context>
chip_gen: v5e
topology: v5e:2x2
jax: 0.10.0
libtpu: 0.0.40
codegen_flags: <defaults>
</compile_context>

<pallas_src>
import jax
import jax.numpy as jnp
import numpy as np
from jax import lax
from jax.experimental import pallas as pl
from jax.experimental.pallas import tpu as pltpu

N_LAYERS = 6
BN_EPS = 1e-5


def _vmem_spec():
    # Whole-array block, resident in VMEM (everything here is tiny).
    return pl.BlockSpec(memory_space=pltpu.MemorySpace.VMEM)


# ---------------------------------------------------------------------------
# Fused forward kernel:
#   conv0(3x3, Cin=1, pad 1) + ReLU + AvgPool2d((3,4))
#   -> 6 x [ conv3x3(pad 1) + ReLU + (residual add every 2nd layer) + BN ]
#   -> global spatial mean.
# ---------------------------------------------------------------------------
def res8_fused_kernel(xslab_ref, w0band_ref, wband_ref, pw_ref, ph_ref,
                      tile_ref, tilet_ref, pb_ref, msk_ref, out_ref, a_scr):
    # xslab_ref : (3, B*H0, W0+2)     pre-shifted, per-batch zero-padded input rows
    # w0band_ref: (3, W0+2, W0*C)     conv0 banded weights (dx + channel taps fused)
    # wband_ref : (6, 3, W1*C, W1*C)  residual conv banded weights
    # pw_ref    : (W0*C, W1*C)        AvgPool over time  (x 1/4)
    # ph_ref    : (B*H1, B*H0)        AvgPool over freq  (x 1/3, block-diag per batch)
    # tile_ref  : (C, W1*C)           per-channel -> lane-tiled broadcast
    # tilet_ref : (W1*C, C)           lane-tiled  -> per-channel reduction
    # pb_ref    : (B, B*H1)           final spatial mean (x 1/(H1*W1), block-diag)
    # msk_ref   : (3, B*H1, 1)        row-validity masks for the dy row shifts
    # out_ref   : (B, C)
    # a_scr     : (B*H1 + 2, W1*C)    activation with one zero row above / below
    f32 = jnp.float32
    RB = a_scr.shape[0] - 2                 # B * H1
    C = tile_ref.shape[0]
    W1 = tile_ref.shape[1] // C
    inv_n = 1.0 / float(RB * W1)            # 1 / (B*H1*W1)

    # ---------------- conv0 + ReLU: 3 banded MXU matmuls ------------------
    y0 = jnp.dot(xslab_ref[0], w0band_ref[0], preferred_element_type=f32)
    y0 = y0 + jnp.dot(xslab_ref[1], w0band_ref[1], preferred_element_type=f32)
    y0 = y0 + jnp.dot(xslab_ref[2], w0band_ref[2], preferred_element_type=f32)
    y0 = jnp.maximum(y0, 0.0)                                     # (B*H0, W0*C)

    # ---------------- AvgPool2d((3,4)) as two pooling matmuls -------------
    x2 = jnp.dot(y0, pw_ref[...], preferred_element_type=f32)     # (B*H0, W1*C)
    x2 = jnp.dot(ph_ref[...], x2, preferred_element_type=f32)     # (B*H1, W1*C)
    old2d = x2                                                    # residual state

    # Padded activation scratch: rows 1..RB hold the activation, borders zero.
    a_scr[...] = jnp.zeros(a_scr.shape, f32)
    a_scr[1:1 + RB, :] = x2

    # ---------------- 6 residual conv layers ------------------------------
    xn = x2
    for l in range(N_LAYERS):
        # conv3x3: dy taps = 3 row-shifted slabs, dx/channel taps fused in wband.
        acc = jnp.dot(msk_ref[0] * a_scr[0:RB, :], wband_ref[l, 0],
                      preferred_element_type=f32)
        acc = acc + jnp.dot(a_scr[1:1 + RB, :], wband_ref[l, 1],
                            preferred_element_type=f32)
        acc = acc + jnp.dot(msk_ref[2] * a_scr[2:2 + RB, :], wband_ref[l, 2],
                            preferred_element_type=f32)
        y = jnp.maximum(acc, 0.0)

        # Residual add every second layer; old_x keeps the PRE-BN sum.
        if (l + 1) % 2 == 0:
            y = y + old2d
            old2d = y

        # BatchNorm2d(affine=False), training-mode batch statistics.
        s1 = jnp.dot(y, tilet_ref[...], preferred_element_type=f32)       # (RB, C)
        mu_t = jnp.sum(jnp.dot(s1, tile_ref[...], preferred_element_type=f32),
                       axis=0, keepdims=True) * inv_n                     # (1, W1*C)
        d = y - mu_t
        s2 = jnp.dot(d * d, tilet_ref[...], preferred_element_type=f32)   # (RB, C)
        var_t = jnp.sum(jnp.dot(s2, tile_ref[...], preferred_element_type=f32),
                        axis=0, keepdims=True) * inv_n                    # (1, W1*C)
        xn = d * lax.rsqrt(var_t + BN_EPS)

        # Write the new activation back into the padded scratch interior.
        if l + 1 < N_LAYERS:
            a_scr[1:1 + RB, :] = xn

    # ---------------- global average over spatial positions ---------------
    sc = jnp.dot(xn, tilet_ref[...], preferred_element_type=f32)          # (RB, C)
    out_ref[...] = jnp.dot(pb_ref[...], sc, preferred_element_type=f32)   # (B, C)


# ---------------------------------------------------------------------------
# Wrapper: one pallas_call for the whole network; only tiny constant / layout
# plumbing (banded weights, pooling / broadcast matrices, masks) is built here.
# ---------------------------------------------------------------------------
def res8_forward(audio, params):
    # audio: (B, T, F); torch does unsqueeze(1).permute(0,1,3,2) -> NCHW (B,1,F,T)
    # so H = freq, W = time.
    x = jnp.transpose(audio, (0, 2, 1)).astype(jnp.float32)       # (B, H0, W0)
    B, H0, W0 = x.shape
    C = params["w0"].shape[-1]
    assert H0 % 3 == 0 and W0 % 4 == 0, "AvgPool2d((3,4)) expects divisible dims"
    H1, W1 = H0 // 3, W0 // 4

    # Pre-shifted conv0 input rows: xslab[dy][b*H0 + h, :] = xpad[b, h + dy, :].
    xpad = jnp.pad(x, ((0, 0), (1, 1), (1, 1)))                   # (B, H0+2, W0+2)
    xslab = jnp.stack([xpad[:, dy:dy + H0, :].reshape(B * H0, W0 + 2)
                       for dy in range(3)])                       # (3, B*H0, W0+2)

    # conv0 banded weights: w0band[dy][w + dx, w*C + c] = w0[3*dy + dx, c].
    w0 = params["w0"].astype(jnp.float32)                         # (9, C)
    p0 = [jnp.asarray(np.eye(W0 + 2, W0, k=-dx, dtype=np.float32)) for dx in range(3)]
    w0band = jnp.stack([
        sum(jnp.kron(p0[dx], w0[3 * dy + dx][None, :]) for dx in range(3))
        for dy in range(3)])                                      # (3, W0+2, W0*C)

    # Residual banded weights:
    #   wband[l, dy][wi*C + ci, wo*C + co] = w[l][3*dy + dx, ci, co],  wi = wo + dx - 1.
    pr = [jnp.asarray(np.eye(W1, W1, k=1 - dx, dtype=np.float32)) for dx in range(3)]
    wband = jnp.stack([
        jnp.stack([
            sum(jnp.kron(pr[dx], params["w"][l][3 * dy + dx].astype(jnp.float32))
                for dx in range(3))
            for dy in range(3)])
        for l in range(N_LAYERS)])                                # (6, 3, W1*C, W1*C)

    # AvgPool2d((3,4)) matrices (channel-preserving).
    aw = np.zeros((W0, W1), np.float32)
    aw[np.arange(W0), np.arange(W0) // 4] = 0.25
    pw = jnp.asarray(np.kron(aw, np.eye(C, dtype=np.float32)))    # (W0*C, W1*C)
    ah = np.zeros((H1, H0), np.float32)
    ah[np.arange(H0) // 3, np.arange(H0)] = 1.0 / 3.0
    ph = jnp.asarray(np.kron(np.eye(B, dtype=np.float32), ah))    # (B*H1, B*H0)

    # Channel broadcast / reduction matrices and final spatial-mean matrix.
    tile = jnp.asarray(np.tile(np.eye(C, dtype=np.float32), (1, W1)))    # (C, W1*C)
    tilet = jnp.asarray(np.tile(np.eye(C, dtype=np.float32), (W1, 1)))   # (W1*C, C)
    pb = jnp.asarray(np.kron(np.eye(B, dtype=np.float32),
                             np.ones((1, H1), np.float32)) / (H1 * W1))  # (B, B*H1)

    # Row-validity masks for the dy = 0 / 2 shifted slabs (kill cross-batch rows).
    msk = np.ones((3, B * H1, 1), np.float32)
    msk[0, 0::H1, 0] = 0.0          # h == 0      has no row above
    msk[2, H1 - 1::H1, 0] = 0.0     # h == H1-1   has no row below
    msk = jnp.asarray(msk)

    return pl.pallas_call(
        res8_fused_kernel,
        out_shape=jax.ShapeDtypeStruct((B, C), jnp.float32),
        in_specs=[_vmem_spec()] * 9,
        out_specs=_vmem_spec(),
        scratch_shapes=[pltpu.VMEM((B * H1 + 2, W1 * C), jnp.float32)],
    )(xslab, w0band, wband, pw, ph, tile, tilet, pb, msk)


# ---------------------------------------------------------------------------
# Pure-JAX reference (correctness check only).
# ---------------------------------------------------------------------------
def ref_forward(audio, params):
    x = jnp.transpose(audio, (0, 2, 1))[..., None].astype(jnp.float32)

    def conv(x, w_hwio):
        return lax.conv_general_dilated(x, w_hwio, (1, 1), 'SAME',
                                        dimension_numbers=('NHWC', 'HWIO', 'NHWC'))

    C = params["w0"].shape[-1]
    y = jax.nn.relu(conv(x, params["w0"].reshape(3, 3, 1, C)))
    B, H, W, _ = y.shape
    y = y.reshape(B, H // 3, 3, W // 4, 4, C).mean(axis=(2, 4))
    old = y
    x = y
    for i in range(1, N_LAYERS + 1):
        y = jax.nn.relu(conv(x, params["w"][i - 1].reshape(3, 3, C, C)))
        if i % 2 == 0:
            x = y + old
            old = x
        else:
            x = y
        m = x.mean(axis=(0, 1, 2), keepdims=True)
        v = ((x - m) ** 2).mean(axis=(0, 1, 2), keepdims=True)
        x = (x - m) * lax.rsqrt(v + BN_EPS)
    return x.mean(axis=(1, 2))


def init_params(key, n_maps):
    k0, k1 = jax.random.split(key)
    w0 = jax.random.normal(k0, (9, n_maps), jnp.float32) / jnp.sqrt(9.0)
    ks = jax.random.split(k1, N_LAYERS)
    ws = [jax.random.normal(k, (9, n_maps, n_maps), jnp.float32) / jnp.sqrt(9.0 * n_maps)
          for k in ks]
    return {"w0": w0, "w": ws}


if __name__ == "__main__":
    key = jax.random.PRNGKey(0)
    kx, kp = jax.random.split(key)

    B, T, F = 2, 16, 12      # batch, time, freq  (freq divisible by 3, time by 4)
    n_maps = 32              # hidden_size

    audio = jax.random.normal(kx, (B, T, F), jnp.float32)
    params = init_params(kp, n_maps)

    out = jax.jit(res8_forward)(audio, params)
    out = jax.block_until_ready(out)

    assert out.shape == (B, n_maps)
    ref = ref_forward(audio, params)
    np.testing.assert_allclose(np.asarray(out), np.asarray(ref), rtol=1e-3, atol=1e-3)

    print("KERNEL_OK")
</pallas_src>

<mosaic_0001>
module attributes {stable_mosaic.version = 11 : i64} {
  func.func @res8_fused_kernel(%arg0: memref<3x24x18xf32, #tpu.memory_space<vmem>>, %arg1: memref<3x18x512xf32, #tpu.memory_space<vmem>>, %arg2: memref<6x3x128x128xf32, #tpu.memory_space<vmem>>, %arg3: memref<512x128xf32, #tpu.memory_space<vmem>>, %arg4: memref<8x24xf32, #tpu.memory_space<vmem>>, %arg5: memref<32x128xf32, #tpu.memory_space<vmem>>, %arg6: memref<128x32xf32, #tpu.memory_space<vmem>>, %arg7: memref<2x8xf32, #tpu.memory_space<vmem>>, %arg8: memref<3x8x1xf32, #tpu.memory_space<vmem>>, %arg9: memref<2x32xf32, #tpu.memory_space<vmem>>, %arg10: memref<10x128xf32, #tpu.memory_space<vmem>>) attributes {dimension_semantics = [], scalar_prefetch = 0 : i64, scratch_operands = 1 : i64, tpu.core_type = #tpu.core_type<tc>} {
    %c0 = arith.constant 0 : index
    %c0_0 = arith.constant 0 : index
    %c0_1 = arith.constant 0 : index
    %0 = vector.load %arg0[%c0, %c0_0, %c0_1] : memref<3x24x18xf32, #tpu.memory_space<vmem>>, vector<1x24x18xf32>
    %1 = vector.shape_cast %0 : vector<1x24x18xf32> to vector<24x18xf32>
    %c0_2 = arith.constant 0 : index
    %c0_3 = arith.constant 0 : index
    %c0_4 = arith.constant 0 : index
    %2 = vector.load %arg1[%c0_2, %c0_3, %c0_4] : memref<3x18x512xf32, #tpu.memory_space<vmem>>, vector<1x18x512xf32>
    %3 = vector.shape_cast %2 : vector<1x18x512xf32> to vector<18x512xf32>
    %cst = arith.constant dense<0.000000e+00> : vector<24x512xf32>
    %4 = tpu.matmul %1, %3, %cst {dimension_numbers = #tpu.dot_dimension_numbers<[1], [0], [0], [1], [0, 0, 1, 1], [], []>} : vector<24x18xf32>, vector<18x512xf32>, vector<24x512xf32> -> vector<24x512xf32>
    %c1 = arith.constant 1 : index
    %c0_5 = arith.constant 0 : index
    %c0_6 = arith.constant 0 : index
    %5 = vector.load %arg0[%c1, %c0_5, %c0_6] : memref<3x24x18xf32, #tpu.memory_space<vmem>>, vector<1x24x18xf32>
    %6 = vector.shape_cast %5 : vector<1x24x18xf32> to vector<24x18xf32>
    %c1_7 = arith.constant 1 : index
    %c0_8 = arith.constant 0 : index
    %c0_9 = arith.constant 0 : index
    %7 = vector.load %arg1[%c1_7, %c0_8, %c0_9] : memref<3x18x512xf32, #tpu.memory_space<vmem>>, vector<1x18x512xf32>
    %8 = vector.shape_cast %7 : vector<1x18x512xf32> to vector<18x512xf32>
    %cst_10 = arith.constant dense<0.000000e+00> : vector<24x512xf32>
    %9 = tpu.matmul %6, %8, %cst_10 {dimension_numbers = #tpu.dot_dimension_numbers<[1], [0], [0], [1], [0, 0, 1, 1], [], []>} : vector<24x18xf32>, vector<18x512xf32>, vector<24x512xf32> -> vector<24x512xf32>
    %10 = arith.addf %4, %9 : vector<24x512xf32>
    %c2 = arith.constant 2 : index
    %c0_11 = arith.constant 0 : index
    %c0_12 = arith.constant 0 : index
    %11 = vector.load %arg0[%c2, %c0_11, %c0_12] : memref<3x24x18xf32, #tpu.memory_space<vmem>>, vector<1x24x18xf32>
    %12 = vector.shape_cast %11 : vector<1x24x18xf32> to vector<24x18xf32>
    %c2_13 = arith.constant 2 : index
    %c0_14 = arith.constant 0 : index
    %c0_15 = arith.constant 0 : index
    %13 = vector.load %arg1[%c2_13, %c0_14, %c0_15] : memref<3x18x512xf32, #tpu.memory_space<vmem>>, vector<1x18x512xf32>
    %14 = vector.shape_cast %13 : vector<1x18x512xf32> to vector<18x512xf32>
    %cst_16 = arith.constant dense<0.000000e+00> : vector<24x512xf32>
    %15 = tpu.matmul %12, %14, %cst_16 {dimension_numbers = #tpu.dot_dimension_numbers<[1], [0], [0], [1], [0, 0, 1, 1], [], []>} : vector<24x18xf32>, vector<18x512xf32>, vector<24x512xf32> -> vector<24x512xf32>
    %16 = arith.addf %10, %15 : vector<24x512xf32>
    %cst_17 = arith.constant 0.000000e+00 : f32
    %17 = vector.broadcast %cst_17 : f32 to vector<24x512xf32>
    %18 = arith.maximumf %16, %17 : vector<24x512xf32>
    %c0_18 = arith.constant 0 : index
    %c0_19 = arith.constant 0 : index
    %19 = vector.load %arg3[%c0_18, %c0_19] : memref<512x128xf32, #tpu.memory_space<vmem>>, vector<512x128xf32>
    %cst_20 = arith.constant dense<0.000000e+00> : vector<24x128xf32>
    %20 = tpu.matmul %18, %19, %cst_20 {dimension_numbers = #tpu.dot_dimension_numbers<[1], [0], [0], [1], [0, 0, 1, 1], [], []>} : vector<24x512xf32>, vector<512x128xf32>, vector<24x128xf32> -> vector<24x128xf32>
    %c0_21 = arith.constant 0 : index
    %c0_22 = arith.constant 0 : index
    %21 = vector.load %arg4[%c0_21, %c0_22] : memref<8x24xf32, #tpu.memory_space<vmem>>, vector<8x24xf32>
    %cst_23 = arith.constant dense<0.000000e+00> : vector<8x128xf32>
    %22 = tpu.matmul %21, %20, %cst_23 {dimension_numbers = #tpu.dot_dimension_numbers<[1], [0], [0], [1], [0, 0, 1, 1], [], []>} : vector<8x24xf32>, vector<24x128xf32>, vector<8x128xf32> -> vector<8x128xf32>
    %cst_24 = arith.constant 0.000000e+00 : f32
    %23 = vector.broadcast %cst_24 : f32 to vector<10x128xf32>
    %c0_25 = arith.constant 0 : index
    %c0_26 = arith.constant 0 : index
    %24 = vector.load %arg10[%c0_25, %c0_26] : memref<10x128xf32, #tpu.memory_space<vmem>>, vector<10x128xf32>
    tpu.vector_store %arg10[%c0_25, %c0_26], %23 {strides = array<i32>} : memref<10x128xf32, #tpu.memory_space<vmem>>, vector<10x128xf32>,
    %c1_27 = arith.constant 1 : index
    %c0_28 = arith.constant 0 : index
    %25 = vector.load %arg10[%c1_27, %c0_28] : memref<10x128xf32, #tpu.memory_space<vmem>>, vector<8x128xf32>
    tpu.vector_store %arg10[%c1_27, %c0_28], %22 {strides = array<i32>} : memref<10x128xf32, #tpu.memory_space<vmem>>, vector<8x128xf32>,
    %c0_29 = arith.constant 0 : index
    %c0_30 = arith.constant 0 : index
    %c0_31 = arith.constant 0 : index
    %26 = vector.load %arg8[%c0_29, %c0_30, %c0_31] : memref<3x8x1xf32, #tpu.memory_space<vmem>>, vector<1x8x1xf32>
    %27 = vector.shape_cast %26 : vector<1x8x1xf32> to vector<8x1xf32>
    %c0_32 = arith.constant 0 : index
    %c0_33 = arith.constant 0 : index
    %28 = vector.load %arg10[%c0_32, %c0_33] : memref<10x128xf32, #tpu.memory_space<vmem>>, vector<8x128xf32>
    %29 = vector.broadcast %27 : vector<8x1xf32> to vector<8x128xf32>
    %30 = arith.mulf %29, %28 : vector<8x128xf32>
    %c0_34 = arith.constant 0 : index
    %c0_35 = arith.constant 0 : index
    %c0_36 = arith.constant 0 : index
    %c0_37 = arith.constant 0 : index
    %31 = vector.load %arg2[%c0_34, %c0_35, %c0_36, %c0_37] : memref<6x3x128x128xf32, #tpu.memory_space<vmem>>, vector<1x1x128x128xf32>
    %32 = vector.shape_cast %31 : vector<1x1x128x128xf32> to vector<128x128xf32>
    %cst_38 = arith.constant dense<0.000000e+00> : vector<8x128xf32>
    %33 = tpu.matmul %30, %32, %cst_38 {dimension_numbers = #tpu.dot_dimension_numbers<[1], [0], [0], [1], [0, 0, 1, 1], [], []>} : vector<8x128xf32>, vector<128x128xf32>, vector<8x128xf32> -> vector<8x128xf32>
    %c1_39 = arith.constant 1 : index
    %c0_40 = arith.constant 0 : index
    %34 = vector.load %arg10[%c1_39, %c0_40] : memref<10x128xf32, #tpu.memory_space<vmem>>, vector<8x128xf32>
    %c0_41 = arith.constant 0 : index
    %c1_42 = arith.constant 1 : index
    %c0_43 = arith.constant 0 : index
    %c0_44 = arith.constant 0 : index
    %35 = vector.load %arg2[%c0_41, %c1_42, %c0_43, %c0_44] : memref<6x3x128x128xf32, #tpu.memory_space<vmem>>, vector<1x1x128x128xf32>
    %36 = vector.shape_cast %35 : vector<1x1x128x128xf32> to vector<128x128xf32>
    %cst_45 = arith.constant dense<0.000000e+00> : vector<8x128xf32>
    %37 = tpu.matmul %34, %36, %cst_45 {dimension_numbers = #tpu.dot_dimension_numbers<[1], [0], [0], [1], [0, 0, 1, 1], [], []>} : vector<8x128xf32>, vector<128x128xf32>, vector<8x128xf32> -> vector<8x128xf32>
    %38 = arith.addf %33, %37 : vector<8x128xf32>
    %c2_46 = arith.constant 2 : index
    %c0_47 = arith.constant 0 : index
    %c0_48 = arith.constant 0 : index
    %39 = vector.load %arg8[%c2_46, %c0_47, %c0_48] : memref<3x8x1xf32, #tpu.memory_space<vmem>>, vector<1x8x1xf32>
    %40 = vector.shape_cast %39 : vector<1x8x1xf32> to vector<8x1xf32>
    %c2_49 = arith.constant 2 : index
    %c0_50 = arith.constant 0 : index
    %41 = vector.load %arg10[%c2_49, %c0_50] : memref<10x128xf32, #tpu.memory_space<vmem>>, vector<8x128xf32>
    %42 = vector.broadcast %40 : vector<8x1xf32> to vector<8x128xf32>
    %43 = arith.mulf %42, %41 : vector<8x128xf32>
    %c0_51 = arith.constant 0 : index
    %c2_52 = arith.constant 2 : index
    %c0_53 = arith.constant 0 : index
    %c0_54 = arith.constant 0 : index
    %44 = vector.load %arg2[%c0_51, %c2_52, %c0_53, %c0_54] : memref<6x3x128x128xf32, #tpu.memory_space<vmem>>, vector<1x1x128x128xf32>
    %45 = vector.shape_cast %44 : vector<1x1x128x128xf32> to vector<128x128xf32>
    %cst_55 = arith.constant dense<0.000000e+00> : vector<8x128xf32>
    %46 = tpu.matmul %43, %45, %cst_55 {dimension_numbers = #tpu.dot_dimension_numbers<[1], [0], [0], [1], [0, 0, 1, 1], [], []>} : vector<8x128xf32>, vector<128x128xf32>, vector<8x128xf32> -> vector<8x128xf32>
    %47 = arith.addf %38, %46 : vector<8x128xf32>
    %cst_56 = arith.constant 0.000000e+00 : f32
    %48 = vector.broadcast %cst_56 : f32 to vector<8x128xf32>
    %49 = arith.maximumf %47, %48 : vector<8x128xf32>
    %c0_57 = arith.constant 0 : index
    %c0_58 = arith.constant 0 : index
    %50 = vector.load %arg6[%c0_57, %c0_58] : memref<128x32xf32, #tpu.memory_space<vmem>>, vector<128x32xf32>
    %cst_59 = arith.constant dense<0.000000e+00> : vector<8x32xf32>
    %51 = tpu.matmul %49, %50, %cst_59 {dimension_numbers = #tpu.dot_dimension_numbers<[1], [0], [0], [1], [0, 0, 1, 1], [], []>} : vector<8x128xf32>, vector<128x32xf32>, vector<8x32xf32> -> vector<8x32xf32>
    %c0_60 = arith.constant 0 : index
    %c0_61 = arith.constant 0 : index
    %52 = vector.load %arg5[%c0_60, %c0_61] : memref<32x128xf32, #tpu.memory_space<vmem>>, vector<32x128xf32>
    %cst_62 = arith.constant dense<0.000000e+00> : vector<8x128xf32>
    %53 = tpu.matmul %51, %52, %cst_62 {dimension_numbers = #tpu.dot_dimension_numbers<[1], [0], [0], [1], [0, 0, 1, 1], [], []>} : vector<8x32xf32>, vector<32x128xf32>, vector<8x128xf32> -> vector<8x128xf32>
    %cst_63 = arith.constant dense<0.000000e+00> : vector<128xf32>
    %54 = vector.multi_reduction <add>, %53, %cst_63 [0] : vector<8x128xf32> to vector<128xf32>
    %55 = vector.shape_cast %54 : vector<128xf32> to vector<1x128xf32>
    %cst_64 = arith.constant 3.125000e-02 : f32
    %56 = vector.broadcast %cst_64 : f32 to vector<1x128xf32>
    %57 = arith.mulf %55, %56 : vector<1x128xf32>
    %58 = vector.broadcast %57 : vector<1x128xf32> to vector<8x128xf32>
    %59 = arith.subf %49, %58 : vector<8x128xf32>
    %60 = arith.mulf %59, %59 : vector<8x128xf32>
    %c0_65 = arith.constant 0 : index
    %c0_66 = arith.constant 0 : index
    %61 = vector.load %arg6[%c0_65, %c0_66] : memref<128x32xf32, #tpu.memory_space<vmem>>, vector<128x32xf32>
    %cst_67 = arith.constant dense<0.000000e+00> : vector<8x32xf32>
    %62 = tpu.matmul %60, %61, %cst_67 {dimension_numbers = #tpu.dot_dimension_numbers<[1], [0], [0], [1], [0, 0, 1, 1], [], []>} : vector<8x128xf32>, vector<128x32xf32>, vector<8x32xf32> -> vector<8x32xf32>
    %c0_68 = arith.constant 0 : index
    %c0_69 = arith.constant 0 : index
    %63 = vector.load %arg5[%c0_68, %c0_69] : memref<32x128xf32, #tpu.memory_space<vmem>>, vector<32x128xf32>
    %cst_70 = arith.constant dense<0.000000e+00> : vector<8x128xf32>
    %64 = tpu.matmul %62, %63, %cst_70 {dimension_numbers = #tpu.dot_dimension_numbers<[1], [0], [0], [1], [0, 0, 1, 1], [], []>} : vector<8x32xf32>, vector<32x128xf32>, vector<8x128xf32> -> vector<8x128xf32>
    %cst_71 = arith.constant dense<0.000000e+00> : vector<128xf32>
    %65 = vector.multi_reduction <add>, %64, %cst_71 [0] : vector<8x128xf32> to vector<128xf32>
    %66 = vector.shape_cast %65 : vector<128xf32> to vector<1x128xf32>
    %cst_72 = arith.constant 3.125000e-02 : f32
    %67 = vector.broadcast %cst_72 : f32 to vector<1x128xf32>
    %68 = arith.mulf %66, %67 : vector<1x128xf32>
    %cst_73 = arith.constant 9.99999974E-6 : f32
    %69 = vector.broadcast %cst_73 : f32 to vector<1x128xf32>
    %70 = arith.addf %68, %69 : vector<1x128xf32>
    %71 = math.rsqrt %70 : vector<1x128xf32>
    %72 = vector.broadcast %71 : vector<1x128xf32> to vector<8x128xf32>
    %73 = arith.mulf %59, %72 : vector<8x128xf32>
    %c1_74 = arith.constant 1 : index
    %c0_75 = arith.constant 0 : index
    %74 = vector.load %arg10[%c1_74, %c0_75] : memref<10x128xf32, #tpu.memory_space<vmem>>, vector<8x128xf32>
    tpu.vector_store %arg10[%c1_74, %c0_75], %73 {strides = array<i32>} : memref<10x128xf32, #tpu.memory_space<vmem>>, vector<8x128xf32>,
    %c0_76 = arith.constant 0 : index
    %c0_77 = arith.constant 0 : index
    %c0_78 = arith.constant 0 : index
    %75 = vector.load %arg8[%c0_76, %c0_77, %c0_78] : memref<3x8x1xf32, #tpu.memory_space<vmem>>, vector<1x8x1xf32>
    %76 = vector.shape_cast %75 : vector<1x8x1xf32> to vector<8x1xf32>
    %c0_79 = arith.constant 0 : index
    %c0_80 = arith.constant 0 : index
    %77 = vector.load %arg10[%c0_79, %c0_80] : memref<10x128xf32, #tpu.memory_space<vmem>>, vector<8x128xf32>
    %78 = vector.broadcast %76 : vector<8x1xf32> to vector<8x128xf32>
    %79 = arith.mulf %78, %77 : vector<8x128xf32>
    %c1_81 = arith.constant 1 : index
    %c0_82 = arith.constant 0 : index
    %c0_83 = arith.constant 0 : index
    %c0_84 = arith.constant 0 : index
    %80 = vector.load %arg2[%c1_81, %c0_82, %c0_83, %c0_84] : memref<6x3x128x128xf32, #tpu.memory_space<vmem>>, vector<1x1x128x128xf32>
    %81 = vector.shape_cast %80 : vector<1x1x128x128xf32> to vector<128x128xf32>
    %cst_85 = arith.constant dense<0.000000e+00> : vector<8x128xf32>
    %82 = tpu.matmul %79, %81, %cst_85 {dimension_numbers = #tpu.dot_dimension_numbers<[1], [0], [0], [1], [0, 0, 1, 1], [], []>} : vector<8x128xf32>, vector<128x128xf32>, vector<8x128xf32> -> vector<8x128xf32>
    %c1_86 = arith.constant 1 : index
    %c0_87 = arith.constant 0 : index
    %83 = vector.load %arg10[%c1_86, %c0_87] : memref<10x128xf32, #tpu.memory_space<vmem>>, vector<8x128xf32>
    %c1_88 = arith.constant 1 : index
    %c1_89 = arith.constant 1 : index
    %c0_90 = arith.constant 0 : index
    %c0_91 = arith.constant 0 : index
    %84 = vector.load %arg2[%c1_88, %c1_89, %c0_90, %c0_91] : memref<6x3x128x128xf32, #tpu.memory_space<vmem>>, vector<1x1x128x128xf32>
    %85 = vector.shape_cast %84 : vector<1x1x128x128xf32> to vector<128x128xf32>
    %cst_92 = arith.constant dense<0.000000e+00> : vector<8x128xf32>
    %86 = tpu.matmul %83, %85, %cst_92 {dimension_numbers = #tpu.dot_dimension_numbers<[1], [0], [0], [1], [0, 0, 1, 1], [], []>} : vector<8x128xf32>, vector<128x128xf32>, vector<8x128xf32> -> vector<8x128xf32>
    %87 = arith.addf %82, %86 : vector<8x128xf32>
    %c2_93 = arith.constant 2 : index
    %c0_94 = arith.constant 0 : index
    %c0_95 = arith.constant 0 : index
    %88 = vector.load %arg8[%c2_93, %c0_94, %c0_95] : memref<3x8x1xf32, #tpu.memory_space<vmem>>, vector<1x8x1xf32>
    %89 = vector.shape_cast %88 : vector<1x8x1xf32> to vector<8x1xf32>
    %c2_96 = arith.constant 2 : index
    %c0_97 = arith.constant 0 : index
    %90 = vector.load %arg10[%c2_96, %c0_97] : memref<10x128xf32, #tpu.memory_space<vmem>>, vector<8x128xf32>
    %91 = vector.broadcast %89 : vector<8x1xf32> to vector<8x128xf32>
    %92 = arith.mulf %91, %90 : vector<8x128xf32>
    %c1_98 = arith.constant 1 : index
    %c2_99 = arith.constant 2 : index
    %c0_100 = arith.constant 0 : index
    %c0_101 = arith.constant 0 : index
    %93 = vector.load %arg2[%c1_98, %c2_99, %c0_100, %c0_101] : memref<6x3x128x128xf32, #tpu.memory_space<vmem>>, vector<1x1x128x128xf32>
    %94 = vector.shape_cast %93 : vector<1x1x128x128xf32> to vector<128x128xf32>
    %cst_102 = arith.constant dense<0.000000e+00> : vector<8x128xf32>
    %95 = tpu.matmul %92, %94, %cst_102 {dimension_numbers = #tpu.dot_dimension_numbers<[1], [0], [0], [1], [0, 0, 1, 1], [], []>} : vector<8x128xf32>, vector<128x128xf32>, vector<8x128xf32> -> vector<8x128xf32>
    %96 = arith.addf %87, %95 : vector<8x128xf32>
    %cst_103 = arith.constant 0.000000e+00 : f32
    %97 = vector.broadcast %cst_103 : f32 to vector<8x128xf32>
    %98 = arith.maximumf %96, %97 : vector<8x128xf32>
    %99 = arith.addf %98, %22 : vector<8x128xf32>
    %c0_104 = arith.constant 0 : index
    %c0_105 = arith.constant 0 : index
    %100 = vector.load %arg6[%c0_104, %c0_105] : memref<128x32xf32, #tpu.memory_space<vmem>>, vector<128x32xf32>
    %cst_106 = arith.constant dense<0.000000e+00> : vector<8x32xf32>
    %101 = tpu.matmul %99, %100, %cst_106 {dimension_numbers = #tpu.dot_dimension_numbers<[1], [0], [0], [1], [0, 0, 1, 1], [], []>} : vector<8x128xf32>, vector<128x32xf32>, vector<8x32xf32> -> vector<8x32xf32>
    %c0_107 = arith.constant 0 : index
    %c0_108 = arith.constant 0 : index
    %102 = vector.load %arg5[%c0_107, %c0_108] : memref<32x128xf32, #tpu.memory_space<vmem>>, vector<32x128xf32>
    %cst_109 = arith.constant dense<0.000000e+00> : vector<8x128xf32>
    %103 = tpu.matmul %101, %102, %cst_109 {dimension_numbers = #tpu.dot_dimension_numbers<[1], [0], [0], [1], [0, 0, 1, 1], [], []>} : vector<8x32xf32>, vector<32x128xf32>, vector<8x128xf32> -> vector<8x128xf32>
    %cst_110 = arith.constant dense<0.000000e+00> : vector<128xf32>
    %104 = vector.multi_reduction <add>, %103, %cst_110 [0] : vector<8x128xf32> to vector<128xf32>
    %105 = vector.shape_cast %104 : vector<128xf32> to vector<1x128xf32>
    %cst_111 = arith.constant 3.125000e-02 : f32
    %106 = vector.broadcast %cst_111 : f32 to vector<1x128xf32>
    %107 = arith.mulf %105, %106 : vector<1x128xf32>
    %108 = vector.broadcast %107 : vector<1x128xf32> to vector<8x128xf32>
    %109 = arith.subf %99, %108 : vector<8x128xf32>
    %110 = arith.mulf %109, %109 : vector<8x128xf32>
    %c0_112 = arith.constant 0 : index
    %c0_113 = arith.constant 0 : index
    %111 = vector.load %arg6[%c0_112, %c0_113] : memref<128x32xf32, #tpu.memory_space<vmem>>, vector<128x32xf32>
    %cst_114 = arith.constant dense<0.000000e+00> : vector<8x32xf32>
    %112 = tpu.matmul %110, %111, %cst_114 {dimension_numbers = #tpu.dot_dimension_numbers<[1], [0], [0], [1], [0, 0, 1, 1], [], []>} : vector<8x128xf32>, vector<128x32xf32>, vector<8x32xf32> -> vector<8x32xf32>
    %c0_115 = arith.constant 0 : index
    %c0_116 = arith.constant 0 : index
    %113 = vector.load %arg5[%c0_115, %c0_116] : memref<32x128xf32, #tpu.memory_space<vmem>>, vector<32x128xf32>
    %cst_117 = arith.constant dense<0.000000e+00> : vector<8x128xf32>
    %114 = tpu.matmul %112, %113, %cst_117 {dimension_numbers = #tpu.dot_dimension_numbers<[1], [0], [0], [1], [0, 0, 1, 1], [], []>} : vector<8x32xf32>, vector<32x128xf32>, vector<8x128xf32> -> vector<8x128xf32>
    %cst_118 = arith.constant dense<0.000000e+00> : vector<128xf32>
    %115 = vector.multi_reduction <add>, %114, %cst_118 [0] : vector<8x128xf32> to vector<128xf32>
    %116 = vector.shape_cast %115 : vector<128xf32> to vector<1x128xf32>
    %cst_119 = arith.constant 3.125000e-02 : f32
    %117 = vector.broadcast %cst_119 : f32 to vector<1x128xf32>
    %118 = arith.mulf %116, %117 : vector<1x128xf32>
    %cst_120 = arith.constant 9.99999974E-6 : f32
    %119 = vector.broadcast %cst_120 : f32 to vector<1x128xf32>
    %120 = arith.addf %118, %119 : vector<1x128xf32>
    %121 = math.rsqrt %120 : vector<1x128xf32>
    %122 = vector.broadcast %121 : vector<1x128xf32> to vector<8x128xf32>
    %123 = arith.mulf %109, %122 : vector<8x128xf32>
    %c1_121 = arith.constant 1 : index
    %c0_122 = arith.constant 0 : index
    %124 = vector.load %arg10[%c1_121, %c0_122] : memref<10x128xf32, #tpu.memory_space<vmem>>, vector<8x128xf32>
    tpu.vector_store %arg10[%c1_121, %c0_122], %123 {strides = array<i32>} : memref<10x128xf32, #tpu.memory_space<vmem>>, vector<8x128xf32>,
    %c0_123 = arith.constant 0 : index
    %c0_124 = arith.constant 0 : index
    %c0_125 = arith.constant 0 : index
    %125 = vector.load %arg8[%c0_123, %c0_124, %c0_125] : memref<3x8x1xf32, #tpu.memory_space<vmem>>, vector<1x8x1xf32>
    %126 = vector.shape_cast %125 : vector<1x8x1xf32> to vector<8x1xf32>
    %c0_126 = arith.constant 0 : index
    %c0_127 = arith.constant 0 : index
    %127 = vector.load %arg10[%c0_126, %c0_127] : memref<10x128xf32, #tpu.memory_space<vmem>>, vector<8x128xf32>
    %128 = vector.broadcast %126 : vector<8x1xf32> to vector<8x128xf32>
    %129 = arith.mulf %128, %127 : vector<8x128xf32>
    %c2_128 = arith.constant 2 : index
    %c0_129 = arith.constant 0 : index
    %c0_130 = arith.constant 0 : index
    %c0_131 = arith.constant 0 : index
    %130 = vector.load %arg2[%c2_128, %c0_129, %c0_130, %c0_131] : memref<6x3x128x128xf32, #tpu.memory_space<vmem>>, vector<1x1x128x128xf32>
    %131 = vector.shape_cast %130 : vector<1x1x128x128xf32> to vector<128x128xf32>
    %cst_132 = arith.constant dense<0.000000e+00> : vector<8x128xf32>
    %132 = tpu.matmul %129, %131, %cst_132 {dimension_numbers = #tpu.dot_dimension_numbers<[1], [0], [0], [1], [0, 0, 1, 1], [], []>} : vector<8x128xf32>, vector<128x128xf32>, vector<8x128xf32> -> vector<8x128xf32>
    %c1_133 = arith.constant 1 : index
    %c0_134 = arith.constant 0 : index
    %133 = vector.load %arg10[%c1_133, %c0_134] : memref<10x128xf32, #tpu.memory_space<vmem>>, vector<8x128xf32>
    %c2_135 = arith.constant 2 : index
    %c1_136 = arith.constant 1 : index
    %c0_137 = arith.constant 0 : index
    %c0_138 = arith.constant 0 : index
    %134 = vector.load %arg2[%c2_135, %c1_136, %c0_137, %c0_138] : memref<6x3x128x128xf32, #tpu.memory_space<vmem>>, vector<1x1x128x128xf32>
    %135 = vector.shape_cast %134 : vector<1x1x128x128xf32> to vector<128x128xf32>
    %cst_139 = arith.constant dense<0.000000e+00> : vector<8x128xf32>
    %136 = tpu.matmul %133, %135, %cst_139 {dimension_numbers = #tpu.dot_dimension_numbers<[1], [0], [0], [1], [0, 0, 1, 1], [], []>} : vector<8x128xf32>, vector<128x128xf32>, vector<8x128xf32> -> vector<8x128xf32>
    %137 = arith.addf %132, %136 : vector<8x128xf32>
    %c2_140 = arith.constant 2 : index
    %c0_141 = arith.constant 0 : index
    %c0_142 = arith.constant 0 : index
    %138 = vector.load %arg8[%c2_140, %c0_141, %c0_142] : memref<3x8x1xf32, #tpu.memory_space<vmem>>, vector<1x8x1xf32>
    %139 = vector.shape_cast %138 : vector<1x8x1xf32> to vector<8x1xf32>
    %c2_143 = arith.constant 2 : index
    %c0_144 = arith.constant 0 : index
    %140 = vector.load %arg10[%c2_143, %c0_144] : memref<10x128xf32, #tpu.memory_space<vmem>>, vector<8x128xf32>
    %141 = vector.broadcast %139 : vector<8x1xf32> to vector<8x128xf32>
    %142 = arith.mulf %141, %140 : vector<8x128xf32>
    %c2_145 = arith.constant 2 : index
    %c2_146 = arith.constant 2 : index
    %c0_147 = arith.constant 0 : index
    %c0_148 = arith.constant 0 : index
    %143 = vector.load %arg2[%c2_145, %c2_146, %c0_147, %c0_148] : memref<6x3x128x128xf32, #tpu.memory_space<vmem>>, vector<1x1x128x128xf32>
    %144 = vector.shape_cast %143 : vector<1x1x128x128xf32> to vector<128x128xf32>
    %cst_149 = arith.constant dense<0.000000e+00> : vector<8x128xf32>
    %145 = tpu.matmul %142, %144, %cst_149 {dimension_numbers = #tpu.dot_dimension_numbers<[1], [0], [0], [1], [0, 0, 1, 1], [], []>} : vector<8x128xf32>, vector<128x128xf32>, vector<8x128xf32> -> vector<8x128xf32>
    %146 = arith.addf %137, %145 : vector<8x128xf32>
    %cst_150 = arith.constant 0.000000e+00 : f32
    %147 = vector.broadcast %cst_150 : f32 to vector<8x128xf32>
    %148 = arith.maximumf %146, %147 : vector<8x128xf32>
    %c0_151 = arith.constant 0 : index
    %c0_152 = arith.constant 0 : index
    %149 = vector.load %arg6[%c0_151, %c0_152] : memref<128x32xf32, #tpu.memory_space<vmem>>, vector<128x32xf32>
    %cst_153 = arith.constant dense<0.000000e+00> : vector<8x32xf32>
    %150 = tpu.matmul %148, %149, %cst_153 {dimension_numbers = #tpu.dot_dimension_numbers<[1], [0], [0], [1], [0, 0, 1, 1], [], []>} : vector<8x128xf32>, vector<128x32xf32>, vector<8x32xf32> -> vector<8x32xf32>
    %c0_154 = arith.constant 0 : index
    %c0_155 = arith.constant 0 : index
    %151 = vector.load %arg5[%c0_154, %c0_155] : memref<32x128xf32, #tpu.memory_space<vmem>>, vector<32x128xf32>
    %cst_156 = arith.constant dense<0.000000e+00> : vector<8x128xf32>
    %152 = tpu.matmul %150, %151, %cst_156 {dimension_numbers = #tpu.dot_dimension_numbers<[1], [0], [0], [1], [0, 0, 1, 1], [], []>} : vector<8x32xf32>, vector<32x128xf32>, vector<8x128xf32> -> vector<8x128xf32>
    %cst_157 = arith.constant dense<0.000000e+00> : vector<128xf32>
    %153 = vector.multi_reduction <add>, %152, %cst_157 [0] : vector<8x128xf32> to vector<128xf32>
    %154 = vector.shape_cast %153 : vector<128xf32> to vector<1x128xf32>
    %cst_158 = arith.constant 3.125000e-02 : f32
    %155 = vector.broadcast %cst_158 : f32 to vector<1x128xf32>
    %156 = arith.mulf %154, %155 : vector<1x128xf32>
    %157 = vector.broadcast %156 : vector<1x128xf32> to vector<8x128xf32>
    %158 = arith.subf %148, %157 : vector<8x128xf32>
    %159 = arith.mulf %158, %158 : vector<8x128xf32>
    %c0_159 = arith.constant 0 : index
    %c0_160 = arith.constant 0 : index
    %160 = vector.load %arg6[%c0_159, %c0_160] : memref<128x32xf32, #tpu.memory_space<vmem>>, vector<128x32xf32>
    %cst_161 = arith.constant dense<0.000000e+00> : vector<8x32xf32>
    %161 = tpu.matmul %159, %160, %cst_161 {dimension_numbers = #tpu.dot_dimension_numbers<[1], [0], [0], [1], [0, 0, 1, 1], [], []>} : vector<8x128xf32>, vector<128x32xf32>, vector<8x32xf32> -> vector<8x32xf32>
    %c0_162 = arith.constant 0 : index
    %c0_163 = arith.constant 0 : index
    %162 = vector.load %arg5[%c0_162, %c0_163] : memref<32x128xf32, #tpu.memory_space<vmem>>, vector<32x128xf32>
    %cst_164 = arith.constant dense<0.000000e+00> : vector<8x128xf32>
    %163 = tpu.matmul %161, %162, %cst_164 {dimension_numbers = #tpu.dot_dimension_numbers<[1], [0], [0], [1], [0, 0, 1, 1], [], []>} : vector<8x32xf32>, vector<32x128xf32>, vector<8x128xf32> -> vector<8x128xf32>
    %cst_165 = arith.constant dense<0.000000e+00> : vector<128xf32>
    %164 = vector.multi_reduction <add>, %163, %cst_165 [0] : vector<8x128xf32> to vector<128xf32>
    %165 = vector.shape_cast %164 : vector<128xf32> to vector<1x128xf32>
    %cst_166 = arith.constant 3.125000e-02 : f32
    %166 = vector.broadcast %cst_166 : f32 to vector<1x128xf32>
    %167 = arith.mulf %165, %166 : vector<1x128xf32>
    %cst_167 = arith.constant 9.99999974E-6 : f32
    %168 = vector.broadcast %cst_167 : f32 to vector<1x128xf32>
    %169 = arith.addf %167, %168 : vector<1x128xf32>
    %170 = math.rsqrt %169 : vector<1x128xf32>
    %171 = vector.broadcast %170 : vector<1x128xf32> to vector<8x128xf32>
    %172 = arith.mulf %158, %171 : vector<8x128xf32>
    %c1_168 = arith.constant 1 : index
    %c0_169 = arith.constant 0 : index
    %173 = vector.load %arg10[%c1_168, %c0_169] : memref<10x128xf32, #tpu.memory_space<vmem>>, vector<8x128xf32>
    tpu.vector_store %arg10[%c1_168, %c0_169], %172 {strides = array<i32>} : memref<10x128xf32, #tpu.memory_space<vmem>>, vector<8x128xf32>,
    %c0_170 = arith.constant 0 : index
    %c0_171 = arith.constant 0 : index
    %c0_172 = arith.constant 0 : index
    %174 = vector.load %arg8[%c0_170, %c0_171, %c0_172] : memref<3x8x1xf32, #tpu.memory_space<vmem>>, vector<1x8x1xf32>
    %175 = vector.shape_cast %174 : vector<1x8x1xf32> to vector<8x1xf32>
    %c0_173 = arith.constant 0 : index
    %c0_174 = arith.constant 0 : index
    %176 = vector.load %arg10[%c0_173, %c0_174] : memref<10x128xf32, #tpu.memory_space<vmem>>, vector<8x128xf32>
    %177 = vector.broadcast %175 : vector<8x1xf32> to vector<8x128xf32>
    %178 = arith.mulf %177, %176 : vector<8x128xf32>
    %c3 = arith.constant 3 : index
    %c0_175 = arith.constant 0 : index
    %c0_176 = arith.constant 0 : index
    %c0_177 = arith.constant 0 : index
    %179 = vector.load %arg2[%c3, %c0_175, %c0_176, %c0_177] : memref<6x3x128x128xf32, #tpu.memory_space<vmem>>, vector<1x1x128x128xf32>
    %180 = vector.shape_cast %179 : vector<1x1x128x128xf32> to vector<128x128xf32>
    %cst_178 = arith.constant dense<0.000000e+00> : vector<8x128xf32>
    %181 = tpu.matmul %178, %180, %cst_178 {dimension_numbers = #tpu.dot_dimension_numbers<[1], [0], [0], [1], [0, 0, 1, 1], [], []>} : vector<8x128xf32>, vector<128x128xf32>, vector<8x128xf32> -> vector<8x128xf32>
    %c1_179 = arith.constant 1 : index
    %c0_180 = arith.constant 0 : index
    %182 = vector.load %arg10[%c1_179, %c0_180] : memref<10x128xf32, #tpu.memory_space<vmem>>, vector<8x128xf32>
    %c3_181 = arith.constant 3 : index
    %c1_182 = arith.constant 1 : index
    %c0_183 = arith.constant 0 : index
    %c0_184 = arith.constant 0 : index
    %183 = vector.load %arg2[%c3_181, %c1_182, %c0_183, %c0_184] : memref<6x3x128x128xf32, #tpu.memory_space<vmem>>, vector<1x1x128x128xf32>
    %184 = vector.shape_cast %183 : vector<1x1x128x128xf32> to vector<128x128xf32>
    %cst_185 = arith.constant dense<0.000000e+00> : vector<8x128xf32>
    %185 = tpu.matmul %182, %184, %cst_185 {dimension_numbers = #tpu.dot_dimension_numbers<[1], [0], [0], [1], [0, 0, 1, 1], [], []>} : vector<8x128xf32>, vector<128x128xf32>, vector<8x128xf32> -> vector<8x128xf32>
    %186 = arith.addf %181, %185 : vector<8x128xf32>
    %c2_186 = arith.constant 2 : index
    %c0_187 = arith.constant 0 : index
    %c0_188 = arith.constant 0 : index
    %187 = vector.load %arg8[%c2_186, %c0_187, %c0_188] : memref<3x8x1xf32, #tpu.memory_space<vmem>>, vector<1x8x1xf32>
    %188 = vector.shape_cast %187 : vector<1x8x1xf32> to vector<8x1xf32>
    %c2_189 = arith.constant 2 : index
    %c0_190 = arith.constant 0 : index
    %189 = vector.load %arg10[%c2_189, %c0_190] : memref<10x128xf32, #tpu.memory_space<vmem>>, vector<8x128xf32>
    %190 = vector.broadcast %188 : vector<8x1xf32> to vector<8x128xf32>
    %191 = arith.mulf %190, %189 : vector<8x128xf32>
    %c3_191 = arith.constant 3 : index
    %c2_192 = arith.constant 2 : index
    %c0_193 = arith.constant 0 : index
    %c0_194 = arith.constant 0 : index
    %192 = vector.load %arg2[%c3_191, %c2_192, %c0_193, %c0_194] : memref<6x3x128x128xf32, #tpu.memory_space<vmem>>, vector<1x1x128x128xf32>
    %193 = vector.shape_cast %192 : vector<1x1x128x128xf32> to vector<128x128xf32>
    %cst_195 = arith.constant dense<0.000000e+00> : vector<8x128xf32>
    %194 = tpu.matmul %191, %193, %cst_195 {dimension_numbers = #tpu.dot_dimension_numbers<[1], [0], [0], [1], [0, 0, 1, 1], [], []>} : vector<8x128xf32>, vector<128x128xf32>, vector<8x128xf32> -> vector<8x128xf32>
    %195 = arith.addf %186, %194 : vector<8x128xf32>
    %cst_196 = arith.constant 0.000000e+00 : f32
    %196 = vector.broadcast %cst_196 : f32 to vector<8x128xf32>
    %197 = arith.maximumf %195, %196 : vector<8x128xf32>
    %198 = arith.addf %197, %99 : vector<8x128xf32>
    %c0_197 = arith.constant 0 : index
    %c0_198 = arith.constant 0 : index
    %199 = vector.load %arg6[%c0_197, %c0_198] : memref<128x32xf32, #tpu.memory_space<vmem>>, vector<128x32xf32>
    %cst_199 = arith.constant dense<0.000000e+00> : vector<8x32xf32>
    %200 = tpu.matmul %198, %199, %cst_199 {dimension_numbers = #tpu.dot_dimension_numbers<[1], [0], [0], [1], [0, 0, 1, 1], [], []>} : vector<8x128xf32>, vector<128x32xf32>, vector<8x32xf32> -> vector<8x32xf32>
    %c0_200 = arith.constant 0 : index
    %c0_201 = arith.constant 0 : index
    %201 = vector.load %arg5[%c0_200, %c0_201] : memref<32x128xf32, #tpu.memory_space<vmem>>, vector<32x128xf32>
    %cst_202 = arith.constant dense<0.000000e+00> : vector<8x128xf32>
    %202 = tpu.matmul %200, %201, %cst_202 {dimension_numbers = #tpu.dot_dimension_numbers<[1], [0], [0], [1], [0, 0, 1, 1], [], []>} : vector<8x32xf32>, vector<32x128xf32>, vector<8x128xf32> -> vector<8x128xf32>
    %cst_203 = arith.constant dense<0.000000e+00> : vector<128xf32>
    %203 = vector.multi_reduction <add>, %202, %cst_203 [0] : vector<8x128xf32> to vector<128xf32>
    %204 = vector.shape_cast %203 : vector<128xf32> to vector<1x128xf32>
    %cst_204 = arith.constant 3.125000e-02 : f32
    %205 = vector.broadcast %cst_204 : f32 to vector<1x128xf32>
    %206 = arith.mulf %204, %205 : vector<1x128xf32>
    %207 = vector.broadcast %206 : vector<1x128xf32> to vector<8x128xf32>
    %208 = arith.subf %198, %207 : vector<8x128xf32>
    %209 = arith.mulf %208, %208 : vector<8x128xf32>
    %c0_205 = arith.constant 0 : index
    %c0_206 = arith.constant 0 : index
    %210 = vector.load %arg6[%c0_205, %c0_206] : memref<128x32xf32, #tpu.memory_space<vmem>>, vector<128x32xf32>
    %cst_207 = arith.constant dense<0.000000e+00> : vector<8x32xf32>
    %211 = tpu.matmul %209, %210, %cst_207 {dimension_numbers = #tpu.dot_dimension_numbers<[1], [0], [0], [1], [0, 0, 1, 1], [], []>} : vector<8x128xf32>, vector<128x32xf32>, vector<8x32xf32> -> vector<8x32xf32>
    %c0_208 = arith.constant 0 : index
    %c0_209 = arith.constant 0 : index
    %212 = vector.load %arg5[%c0_208, %c0_209] : memref<32x128xf32, #tpu.memory_space<vmem>>, vector<32x128xf32>
    %cst_210 = arith.constant dense<0.000000e+00> : vector<8x128xf32>
    %213 = tpu.matmul %211, %212, %cst_210 {dimension_numbers = #tpu.dot_dimension_numbers<[1], [0], [0], [1], [0, 0, 1, 1], [], []>} : vector<8x32xf32>, vector<32x128xf32>, vector<8x128xf32> -> vector<8x128xf32>
    %cst_211 = arith.constant dense<0.000000e+00> : vector<128xf32>
    %214 = vector.multi_reduction <add>, %213, %cst_211 [0] : vector<8x128xf32> to vector<128xf32>
    %215 = vector.shape_cast %214 : vector<128xf32> to vector<1x128xf32>
    %cst_212 = arith.constant 3.125000e-02 : f32
    %216 = vector.broadcast %cst_212 : f32 to vector<1x128xf32>
    %217 = arith.mulf %215, %216 : vector<1x128xf32>
    %cst_213 = arith.constant 9.99999974E-6 : f32
    %218 = vector.broadcast %cst_213 : f32 to vector<1x128xf32>
    %219 = arith.addf %217, %218 : vector<1x128xf32>
    %220 = math.rsqrt %219 : vector<1x128xf32>
    %221 = vector.broadcast %220 : vector<1x128xf32> to vector<8x128xf32>
    %222 = arith.mulf %208, %221 : vector<8x128xf32>
    %c1_214 = arith.constant 1 : index
    %c0_215 = arith.constant 0 : index
    %223 = vector.load %arg10[%c1_214, %c0_215] : memref<10x128xf32, #tpu.memory_space<vmem>>, vector<8x128xf32>
    tpu.vector_store %arg10[%c1_214, %c0_215], %222 {strides = array<i32>} : memref<10x128xf32, #tpu.memory_space<vmem>>, vector<8x128xf32>,
    %c0_216 = arith.constant 0 : index
    %c0_217 = arith.constant 0 : index
    %c0_218 = arith.constant 0 : index
    %224 = vector.load %arg8[%c0_216, %c0_217, %c0_218] : memref<3x8x1xf32, #tpu.memory_space<vmem>>, vector<1x8x1xf32>
    %225 = vector.shape_cast %224 : vector<1x8x1xf32> to vector<8x1xf32>
    %c0_219 = arith.constant 0 : index
    %c0_220 = arith.constant 0 : index
    %226 = vector.load %arg10[%c0_219, %c0_220] : memref<10x128xf32, #tpu.memory_space<vmem>>, vector<8x128xf32>
    %227 = vector.broadcast %225 : vector<8x1xf32> to vector<8x128xf32>
    %228 = arith.mulf %227, %226 : vector<8x128xf32>
    %c4 = arith.constant 4 : index
    %c0_221 = arith.constant 0 : index
    %c0_222 = arith.constant 0 : index
    %c0_223 = arith.constant 0 : index
    %229 = vector.load %arg2[%c4, %c0_221, %c0_222, %c0_223] : memref<6x3x128x128xf32, #tpu.memory_space<vmem>>, vector<1x1x128x128xf32>
    %230 = vector.shape_cast %229 : vector<1x1x128x128xf32> to vector<128x128xf32>
    %cst_224 = arith.constant dense<0.000000e+00> : vector<8x128xf32>
    %231 = tpu.matmul %228, %230, %cst_224 {dimension_numbers = #tpu.dot_dimension_numbers<[1], [0], [0], [1], [0, 0, 1, 1], [], []>} : vector<8x128xf32>, vector<128x128xf32>, vector<8x128xf32> -> vector<8x128xf32>
    %c1_225 = arith.constant 1 : index
    %c0_226 = arith.constant 0 : index
    %232 = vector.load %arg10[%c1_225, %c0_226] : memref<10x128xf32, #tpu.memory_space<vmem>>, vector<8x128xf32>
    %c4_227 = arith.constant 4 : index
    %c1_228 = arith.constant 1 : index
    %c0_229 = arith.constant 0 : index
    %c0_230 = arith.constant 0 : index
    %233 = vector.load %arg2[%c4_227, %c1_228, %c0_229, %c0_230] : memref<6x3x128x128xf32, #tpu.memory_space<vmem>>, vector<1x1x128x128xf32>
    %234 = vector.shape_cast %233 : vector<1x1x128x128xf32> to vector<128x128xf32>
    %cst_231 = arith.constant dense<0.000000e+00> : vector<8x128xf32>
    %235 = tpu.matmul %232, %234, %cst_231 {dimension_numbers = #tpu.dot_dimension_numbers<[1], [0], [0], [1], [0, 0, 1, 1], [], []>} : vector<8x128xf32>, vector<128x128xf32>, vector<8x128xf32> -> vector<8x128xf32>
    %236 = arith.addf %231, %235 : vector<8x128xf32>
    %c2_232 = arith.constant 2 : index
    %c0_233 = arith.constant 0 : index
    %c0_234 = arith.constant 0 : index
    %237 = vector.load %arg8[%c2_232, %c0_233, %c0_234] : memref<3x8x1xf32, #tpu.memory_space<vmem>>, vector<1x8x1xf32>
    %238 = vector.shape_cast %237 : vector<1x8x1xf32> to vector<8x1xf32>
    %c2_235 = arith.constant 2 : index
    %c0_236 = arith.constant 0 : index
    %239 = vector.load %arg10[%c2_235, %c0_236] : memref<10x128xf32, #tpu.memory_space<vmem>>, vector<8x128xf32>
    %240 = vector.broadcast %238 : vector<8x1xf32> to vector<8x128xf32>
    %241 = arith.mulf %240, %239 : vector<8x128xf32>
    %c4_237 = arith.constant 4 : index
    %c2_238 = arith.constant 2 : index
    %c0_239 = arith.constant 0 : index
    %c0_240 = arith.constant 0 : index
    %242 = vector.load %arg2[%c4_237, %c2_238, %c0_239, %c0_240] : memref<6x3x128x128xf32, #tpu.memory_space<vmem>>, vector<1x1x128x128xf32>
    %243 = vector.shape_cast %242 : vector<1x1x128x128xf32> to vector<128x128xf32>
    %cst_241 = arith.constant dense<0.000000e+00> : vector<8x128xf32>
    %244 = tpu.matmul %241, %243, %cst_241 {dimension_numbers = #tpu.dot_dimension_numbers<[1], [0], [0], [1], [0, 0, 1, 1], [], []>} : vector<8x128xf32>, vector<128x128xf32>, vector<8x128xf32> -> vector<8x128xf32>
    %245 = arith.addf %236, %244 : vector<8x128xf32>
    %cst_242 = arith.constant 0.000000e+00 : f32
    %246 = vector.broadcast %cst_242 : f32 to vector<8x128xf32>
    %247 = arith.maximumf %245, %246 : vector<8x128xf32>
    %c0_243 = arith.constant 0 : index
    %c0_244 = arith.constant 0 : index
    %248 = vector.load %arg6[%c0_243, %c0_244] : memref<128x32xf32, #tpu.memory_space<vmem>>, vector<128x32xf32>
    %cst_245 = arith.constant dense<0.000000e+00> : vector<8x32xf32>
    %249 = tpu.matmul %247, %248, %cst_245 {dimension_numbers = #tpu.dot_dimension_numbers<[1], [0], [0], [1], [0, 0, 1, 1], [], []>} : vector<8x128xf32>, vector<128x32xf32>, vector<8x32xf32> -> vector<8x32xf32>
    %c0_246 = arith.constant 0 : index
    %c0_247 = arith.constant 0 : index
    %250 = vector.load %arg5[%c0_246, %c0_247] : memref<32x128xf32, #tpu.memory_space<vmem>>, vector<32x128xf32>
    %cst_248 = arith.constant dense<0.000000e+00> : vector<8x128xf32>
    %251 = tpu.matmul %249, %250, %cst_248 {dimension_numbers = #tpu.dot_dimension_numbers<[1], [0], [0], [1], [0, 0, 1, 1], [], []>} : vector<8x32xf32>, vector<32x128xf32>, vector<8x128xf32> -> vector<8x128xf32>
    %cst_249 = arith.constant dense<0.000000e+00> : vector<128xf32>
    %252 = vector.multi_reduction <add>, %251, %cst_249 [0] : vector<8x128xf32> to vector<128xf32>
    %253 = vector.shape_cast %252 : vector<128xf32> to vector<1x128xf32>
    %cst_250 = arith.constant 3.125000e-02 : f32
    %254 = vector.broadcast %cst_250 : f32 to vector<1x128xf32>
    %255 = arith.mulf %253, %254 : vector<1x128xf32>
    %256 = vector.broadcast %255 : vector<1x128xf32> to vector<8x128xf32>
    %257 = arith.subf %247, %256 : vector<8x128xf32>
    %258 = arith.mulf %257, %257 : vector<8x128xf32>
    %c0_251 = arith.constant 0 : index
    %c0_252 = arith.constant 0 : index
    %259 = vector.load %arg6[%c0_251, %c0_252] : memref<128x32xf32, #tpu.memory_space<vmem>>, vector<128x32xf32>
    %cst_253 = arith.constant dense<0.000000e+00> : vector<8x32xf32>
    %260 = tpu.matmul %258, %259, %cst_253 {dimension_numbers = #tpu.dot_dimension_numbers<[1], [0], [0], [1], [0, 0, 1, 1], [], []>} : vector<8x128xf32>, vector<128x32xf32>, vector<8x32xf32> -> vector<8x32xf32>
    %c0_254 = arith.constant 0 : index
    %c0_255 = arith.constant 0 : index
    %261 = vector.load %arg5[%c0_254, %c0_255] : memref<32x128xf32, #tpu.memory_space<vmem>>, vector<32x128xf32>
    %cst_256 = arith.constant dense<0.000000e+00> : vector<8x128xf32>
    %262 = tpu.matmul %260, %261, %cst_256 {dimension_numbers = #tpu.dot_dimension_numbers<[1], [0], [0], [1], [0, 0, 1, 1], [], []>} : vector<8x32xf32>, vector<32x128xf32>, vector<8x128xf32> -> vector<8x128xf32>
    %cst_257 = arith.constant dense<0.000000e+00> : vector<128xf32>
    %263 = vector.multi_reduction <add>, %262, %cst_257 [0] : vector<8x128xf32> to vector<128xf32>
    %264 = vector.shape_cast %263 : vector<128xf32> to vector<1x128xf32>
    %cst_258 = arith.constant 3.125000e-02 : f32
    %265 = vector.broadcast %cst_258 : f32 to vector<1x128xf32>
    %266 = arith.mulf %264, %265 : vector<1x128xf32>
    %cst_259 = arith.constant 9.99999974E-6 : f32
    %267 = vector.broadcast %cst_259 : f32 to vector<1x128xf32>
    %268 = arith.addf %266, %267 : vector<1x128xf32>
    %269 = math.rsqrt %268 : vector<1x128xf32>
    %270 = vector.broadcast %269 : vector<1x128xf32> to vector<8x128xf32>
    %271 = arith.mulf %257, %270 : vector<8x128xf32>
    %c1_260 = arith.constant 1 : index
    %c0_261 = arith.constant 0 : index
    %272 = vector.load %arg10[%c1_260, %c0_261] : memref<10x128xf32, #tpu.memory_space<vmem>>, vector<8x128xf32>
    tpu.vector_store %arg10[%c1_260, %c0_261], %271 {strides = array<i32>} : memref<10x128xf32, #tpu.memory_space<vmem>>, vector<8x128xf32>,
    %c0_262 = arith.constant 0 : index
    %c0_263 = arith.constant 0 : index
    %c0_264 = arith.constant 0 : index
    %273 = vector.load %arg8[%c0_262, %c0_263, %c0_264] : memref<3x8x1xf32, #tpu.memory_space<vmem>>, vector<1x8x1xf32>
    %274 = vector.shape_cast %273 : vector<1x8x1xf32> to vector<8x1xf32>
    %c0_265 = arith.constant 0 : index
    %c0_266 = arith.constant 0 : index
    %275 = vector.load %arg10[%c0_265, %c0_266] : memref<10x128xf32, #tpu.memory_space<vmem>>, vector<8x128xf32>
    %276 = vector.broadcast %274 : vector<8x1xf32> to vector<8x128xf32>
    %277 = arith.mulf %276, %275 : vector<8x128xf32>
    %c5 = arith.constant 5 : index
    %c0_267 = arith.constant 0 : index
    %c0_268 = arith.constant 0 : index
    %c0_269 = arith.constant 0 : index
    %278 = vector.load %arg2[%c5, %c0_267, %c0_268, %c0_269] : memref<6x3x128x128xf32, #tpu.memory_space<vmem>>, vector<1x1x128x128xf32>
    %279 = vector.shape_cast %278 : vector<1x1x128x128xf32> to vector<128x128xf32>
    %cst_270 = arith.constant dense<0.000000e+00> : vector<8x128xf32>
    %280 = tpu.matmul %277, %279, %cst_270 {dimension_numbers = #tpu.dot_dimension_numbers<[1], [0], [0], [1], [0, 0, 1, 1], [], []>} : vector<8x128xf32>, vector<128x128xf32>, vector<8x128xf32> -> vector<8x128xf32>
    %c1_271 = arith.constant 1 : index
    %c0_272 = arith.constant 0 : index
    %281 = vector.load %arg10[%c1_271, %c0_272] : memref<10x128xf32, #tpu.memory_space<vmem>>, vector<8x128xf32>
    %c5_273 = arith.constant 5 : index
    %c1_274 = arith.constant 1 : index
    %c0_275 = arith.constant 0 : index
    %c0_276 = arith.constant 0 : index
    %282 = vector.load %arg2[%c5_273, %c1_274, %c0_275, %c0_276] : memref<6x3x128x128xf32, #tpu.memory_space<vmem>>, vector<1x1x128x128xf32>
    %283 = vector.shape_cast %282 : vector<1x1x128x128xf32> to vector<128x128xf32>
    %cst_277 = arith.constant dense<0.000000e+00> : vector<8x128xf32>
    %284 = tpu.matmul %281, %283, %cst_277 {dimension_numbers = #tpu.dot_dimension_numbers<[1], [0], [0], [1], [0, 0, 1, 1], [], []>} : vector<8x128xf32>, vector<128x128xf32>, vector<8x128xf32> -> vector<8x128xf32>
    %285 = arith.addf %280, %284 : vector<8x128xf32>
    %c2_278 = arith.constant 2 : index
    %c0_279 = arith.constant 0 : index
    %c0_280 = arith.constant 0 : index
    %286 = vector.load %arg8[%c2_278, %c0_279, %c0_280] : memref<3x8x1xf32, #tpu.memory_space<vmem>>, vector<1x8x1xf32>
    %287 = vector.shape_cast %286 : vector<1x8x1xf32> to vector<8x1xf32>
    %c2_281 = arith.constant 2 : index
    %c0_282 = arith.constant 0 : index
    %288 = vector.load %arg10[%c2_281, %c0_282] : memref<10x128xf32, #tpu.memory_space<vmem>>, vector<8x128xf32>
    %289 = vector.broadcast %287 : vector<8x1xf32> to vector<8x128xf32>
    %290 = arith.mulf %289, %288 : vector<8x128xf32>
    %c5_283 = arith.constant 5 : index
    %c2_284 = arith.constant 2 : index
    %c0_285 = arith.constant 0 : index
    %c0_286 = arith.constant 0 : index
    %291 = vector.load %arg2[%c5_283, %c2_284, %c0_285, %c0_286] : memref<6x3x128x128xf32, #tpu.memory_space<vmem>>, vector<1x1x128x128xf32>
    %292 = vector.shape_cast %291 : vector<1x1x128x128xf32> to vector<128x128xf32>
    %cst_287 = arith.constant dense<0.000000e+00> : vector<8x128xf32>
    %293 = tpu.matmul %290, %292, %cst_287 {dimension_numbers = #tpu.dot_dimension_numbers<[1], [0], [0], [1], [0, 0, 1, 1], [], []>} : vector<8x128xf32>, vector<128x128xf32>, vector<8x128xf32> -> vector<8x128xf32>
    %294 = arith.addf %285, %293 : vector<8x128xf32>
    %cst_288 = arith.constant 0.000000e+00 : f32
    %295 = vector.broadcast %cst_288 : f32 to vector<8x128xf32>
    %296 = arith.maximumf %294, %295 : vector<8x128xf32>
    %297 = arith.addf %296, %198 : vector<8x128xf32>
    %c0_289 = arith.constant 0 : index
    %c0_290 = arith.constant 0 : index
    %298 = vector.load %arg6[%c0_289, %c0_290] : memref<128x32xf32, #tpu.memory_space<vmem>>, vector<128x32xf32>
    %cst_291 = arith.constant dense<0.000000e+00> : vector<8x32xf32>
    %299 = tpu.matmul %297, %298, %cst_291 {dimension_numbers = #tpu.dot_dimension_numbers<[1], [0], [0], [1], [0, 0, 1, 1], [], []>} : vector<8x128xf32>, vector<128x32xf32>, vector<8x32xf32> -> vector<8x32xf32>
    %c0_292 = arith.constant 0 : index
    %c0_293 = arith.constant 0 : index
    %300 = vector.load %arg5[%c0_292, %c0_293] : memref<32x128xf32, #tpu.memory_space<vmem>>, vector<32x128xf32>
    %cst_294 = arith.constant dense<0.000000e+00> : vector<8x128xf32>
    %301 = tpu.matmul %299, %300, %cst_294 {dimension_numbers = #tpu.dot_dimension_numbers<[1], [0], [0], [1], [0, 0, 1, 1], [], []>} : vector<8x32xf32>, vector<32x128xf32>, vector<8x128xf32> -> vector<8x128xf32>
    %cst_295 = arith.constant dense<0.000000e+00> : vector<128xf32>
    %302 = vector.multi_reduction <add>, %301, %cst_295 [0] : vector<8x128xf32> to vector<128xf32>
    %303 = vector.shape_cast %302 : vector<128xf32> to vector<1x128xf32>
    %cst_296 = arith.constant 3.125000e-02 : f32
    %304 = vector.broadcast %cst_296 : f32 to vector<1x128xf32>
    %305 = arith.mulf %303, %304 : vector<1x128xf32>
    %306 = vector.broadcast %305 : vector<1x128xf32> to vector<8x128xf32>
    %307 = arith.subf %297, %306 : vector<8x128xf32>
    %308 = arith.mulf %307, %307 : vector<8x128xf32>
    %c0_297 = arith.constant 0 : index
    %c0_298 = arith.constant 0 : index
    %309 = vector.load %arg6[%c0_297, %c0_298] : memref<128x32xf32, #tpu.memory_space<vmem>>, vector<128x32xf32>
    %cst_299 = arith.constant dense<0.000000e+00> : vector<8x32xf32>
    %310 = tpu.matmul %308, %309, %cst_299 {dimension_numbers = #tpu.dot_dimension_numbers<[1], [0], [0], [1], [0, 0, 1, 1], [], []>} : vector<8x128xf32>, vector<128x32xf32>, vector<8x32xf32> -> vector<8x32xf32>
    %c0_300 = arith.constant 0 : index
    %c0_301 = arith.constant 0 : index
    %311 = vector.load %arg5[%c0_300, %c0_301] : memref<32x128xf32, #tpu.memory_space<vmem>>, vector<32x128xf32>
    %cst_302 = arith.constant dense<0.000000e+00> : vector<8x128xf32>
    %312 = tpu.matmul %310, %311, %cst_302 {dimension_numbers = #tpu.dot_dimension_numbers<[1], [0], [0], [1], [0, 0, 1, 1], [], []>} : vector<8x32xf32>, vector<32x128xf32>, vector<8x128xf32> -> vector<8x128xf32>
    %cst_303 = arith.constant dense<0.000000e+00> : vector<128xf32>
    %313 = vector.multi_reduction <add>, %312, %cst_303 [0] : vector<8x128xf32> to vector<128xf32>
    %314 = vector.shape_cast %313 : vector<128xf32> to vector<1x128xf32>
    %cst_304 = arith.constant 3.125000e-02 : f32
    %315 = vector.broadcast %cst_304 : f32 to vector<1x128xf32>
    %316 = arith.mulf %314, %315 : vector<1x128xf32>
    %cst_305 = arith.constant 9.99999974E-6 : f32
    %317 = vector.broadcast %cst_305 : f32 to vector<1x128xf32>
    %318 = arith.addf %316, %317 : vector<1x128xf32>
    %319 = math.rsqrt %318 : vector<1x128xf32>
    %320 = vector.broadcast %319 : vector<1x128xf32> to vector<8x128xf32>
    %321 = arith.mulf %307, %320 : vector<8x128xf32>
    %c0_306 = arith.constant 0 : index
    %c0_307 = arith.constant 0 : index
    %322 = vector.load %arg6[%c0_306, %c0_307] : memref<128x32xf32, #tpu.memory_space<vmem>>, vector<128x32xf32>
    %cst_308 = arith.constant dense<0.000000e+00> : vector<8x32xf32>
    %323 = tpu.matmul %321, %322, %cst_308 {dimension_numbers = #tpu.dot_dimension_numbers<[1], [0], [0], [1], [0, 0, 1, 1], [], []>} : vector<8x128xf32>, vector<128x32xf32>, vector<8x32xf32> -> vector<8x32xf32>
    %c0_309 = arith.constant 0 : index
    %c0_310 = arith.constant 0 : index
    %324 = vector.load %arg7[%c0_309, %c0_310] : memref<2x8xf32, #tpu.memory_space<vmem>>, vector<2x8xf32>
    %cst_311 = arith.constant dense<0.000000e+00> : vector<2x32xf32>
    %325 = tpu.matmul %324, %323, %cst_311 {dimension_numbers = #tpu.dot_dimension_numbers<[1], [0], [0], [1], [0, 0, 1, 1], [], []>} : vector<2x8xf32>, vector<8x32xf32>, vector<2x32xf32> -> vector<2x32xf32>
    %c0_312 = arith.constant 0 : index
    %c0_313 = arith.constant 0 : index
    %326 = vector.load %arg9[%c0_312, %c0_313] : memref<2x32xf32, #tpu.memory_space<vmem>>, vector<2x32xf32>
    tpu.vector_store %arg9[%c0_312, %c0_313], %325 {strides = array<i32>} : memref<2x32xf32, #tpu.memory_space<vmem>>, vector<2x32xf32>,
    return
  }
}

</mosaic_0001>

<llo_original>
// kernel: res8_forward.1
$region0: #{res8_forward.1}
  #allocation0 [shape = 'u32[]', space=smem, size = 0x4, offset = 0x4, fixed_abs, tag = 'smem constant byte address 0x4 - core index']
  #allocation1 [shape = 'u32[72,128]{1,0:T(1,128)}', space=vmem, size = 0x9000, scoped, tag = 'internal scratch']
  #allocation2 [shape = 'f32[10,128]{1,0:T(8,128)}', space=vmem, size = 0x2000, scoped, tag = 'scratch operand']
  %s0 = inlined_call_operand.vmem [shape: f32[3,24,18], index: 0, kind: input, shape index: {}]
  %s1 = inlined_call_operand.vmem [shape: f32[3,18,512], index: 1, kind: input, shape index: {}]
  %s2 = inlined_call_operand.vmem [shape: f32[6,3,128,128], index: 2, kind: input, shape index: {}]
  %s3 = inlined_call_operand.vmem [shape: f32[512,128], index: 3, kind: input, shape index: {}]
  %s4 = inlined_call_operand.vmem [shape: f32[8,24], index: 4, kind: input, shape index: {}]
  %s5 = inlined_call_operand.vmem [shape: f32[32,128], index: 5, kind: input, shape index: {}]
  %s6 = inlined_call_operand.vmem [shape: f32[128,32], index: 6, kind: input, shape index: {}]
  %s7 = inlined_call_operand.vmem [shape: f32[2,8], index: 7, kind: input, shape index: {}]
  %s8 = inlined_call_operand.vmem [shape: f32[3,8,1], index: 8, kind: input, shape index: {}]
  %s9 = inlined_call_operand.hbm [shape: f32[2,32], index: 9, kind: output, shape index: {}]
  %s10 = sld [smem:[#allocation0]]
  $region46: #{res8_forward.1} parent=0
    _
  %s12 = ssub.s32 1, %s10
  %s13 = scalar_select 0, %s12, %s10
  $region1: #{res8_forward.1} parent=0
    #allocation3 [shape = 'u8[1024]{0}', space=vmem, size = 0x400, scoped, tag = 'output window, operand 0, single buffered']
    #allocation4 [shape = 's32[1]{0}', space=sflag, size = 0x4, scoped, tag = 'scoped memory for res8_forward.1']
    %14 = vsyncpa [#allocation4], 0
    // Predicated region
    $region2: #{res8_forward.1} parent=1 // pred_check
      _
    $region3: #{res8_forward.1} parent=1 // pred_check_branch
      %16 = sbr.rel (0) target = $region5
    $region4: #{res8_forward.1} parent=1 // pred_region
      _
    $region5: #{res8_forward.1} parent=1 // pred_fallthru
      _
    // Predicated region
    $region6: #{res8_forward.1} parent=1 // pred_check
      _
    $region7: #{res8_forward.1} parent=1 // pred_check_branch
      %18 = sbr.rel (0) target = $region9
    $region8: #{res8_forward.1} parent=1 // pred_region
      _
    $region9: #{res8_forward.1} parent=1 // pred_fallthru
      _
    // Predicated region
    $region10: #{res8_forward.1} parent=1 // pred_check
      _
    $region11: #{res8_forward.1} parent=1 // pred_check_branch
      %20 = sbr.rel (0) target = $region13
    $region12: #{res8_forward.1} parent=1 // pred_region
      _
    $region13: #{res8_forward.1} parent=1 // pred_fallthru
      _
    // Predicated region
    $region14: #{res8_forward.1} parent=1 // pred_check
      _
    $region15: #{res8_forward.1} parent=1 // pred_check_branch
      %22 = sbr.rel (0) target = $region17
    $region16: #{res8_forward.1} parent=1 // pred_region
      _
    $region17: #{res8_forward.1} parent=1 // pred_fallthru
      _
    // Predicated region
    $region18: #{res8_forward.1} parent=1 // pred_check
      _
    $region19: #{res8_forward.1} parent=1 // pred_check_branch
      %24 = sbr.rel (0) target = $region21
    $region20: #{res8_forward.1} parent=1 // pred_region
      _
    $region21: #{res8_forward.1} parent=1 // pred_fallthru
      _
    // Predicated region
    $region22: #{res8_forward.1} parent=1 // pred_check
      _
    $region23: #{res8_forward.1} parent=1 // pred_check_branch
      %26 = sbr.rel (0) target = $region25
    $region24: #{res8_forward.1} parent=1 // pred_region
      _
    $region25: #{res8_forward.1} parent=1 // pred_fallthru
      _
    // Predicated region
    $region26: #{res8_forward.1} parent=1 // pred_check
      _
    $region27: #{res8_forward.1} parent=1 // pred_check_branch
      %28 = sbr.rel (0) target = $region29
    $region28: #{res8_forward.1} parent=1 // pred_region
      _
    $region29: #{res8_forward.1} parent=1 // pred_fallthru
      _
    // Predicated region
    $region30: #{res8_forward.1} parent=1 // pred_check
      _
    $region31: #{res8_forward.1} parent=1 // pred_check_branch
      %30 = sbr.rel (0) target = $region33
    $region32: #{res8_forward.1} parent=1 // pred_region
      _
    $region33: #{res8_forward.1} parent=1 // pred_fallthru
      _
    // Predicated region
    $region34: #{res8_forward.1} parent=1 // pred_check
      _
    $region35: #{res8_forward.1} parent=1 // pred_check_branch
      %32 = sbr.rel (0) target = $region37
    $region36: #{res8_forward.1} parent=1 // pred_region
      _
    $region37: #{res8_forward.1} parent=1 // pred_fallthru
      _
    %v33 = vld [vmem:[%s0] sm:$0xff]
    %v34 = vld [vmem:[%s0 + $0x8] sm:$0xff]
    %v35 = vld [vmem:[%s0 + $0x10] sm:$0xff]
    %v36 = vld [vmem:[%s1] sm:$0xff]
    %v37 = vld [vmem:[%s1 + $0x8] sm:$0xff]
    %v38 = vld [vmem:[%s1 + $0x10] sm:$0xff]
    %v39 = vld [vmem:[%s1 + $0x18] sm:$0xff]
    %v40 = vld [vmem:[%s1 + $0x20] sm:$0xff]
    %v41 = vld [vmem:[%s1 + $0x28] sm:$0xff]
    %v42 = vld [vmem:[%s1 + $0x30] sm:$0xff]
    %v43 = vld [vmem:[%s1 + $0x38] sm:$0xff]
    %v44 = vld [vmem:[%s1 + $0x40] sm:$0x3]
    %v45 = vld [vmem:[%s1 + $0x48] sm:$0x3]
    %v46 = vld [vmem:[%s1 + $0x50] sm:$0x3]
    %v47 = vld [vmem:[%s1 + $0x58] sm:$0x3]
    %s48 = scalar_lea.vmem %s0, 24
    %v49 = vld [vmem:[%s48] sm:$0xff]
    %v50 = vld [vmem:[%s48 + $0x8] sm:$0xff]
    %v51 = vld [vmem:[%s48 + $0x10] sm:$0xff]
    %s52 = scalar_lea.vmem %s1, 96
    %v53 = vld [vmem:[%s52] sm:$0xff]
    %v54 = vld [vmem:[%s52 + $0x8] sm:$0xff]
    %v55 = vld [vmem:[%s52 + $0x10] sm:$0xff]
    %v56 = vld [vmem:[%s52 + $0x18] sm:$0xff]
    %v57 = vld [vmem:[%s52 + $0x20] sm:$0xff]
    %v58 = vld [vmem:[%s52 + $0x28] sm:$0xff]
    %v59 = vld [vmem:[%s52 + $0x30] sm:$0xff]
    %v60 = vld [vmem:[%s52 + $0x38] sm:$0xff]
    %v61 = vld [vmem:[%s52 + $0x40] sm:$0x3]
    %v62 = vld [vmem:[%s52 + $0x48] sm:$0x3]
    %v63 = vld [vmem:[%s52 + $0x50] sm:$0x3]
    %v64 = vld [vmem:[%s52 + $0x58] sm:$0x3]
    %vm65 = vcmask 146432
    %v67 = vsel %vm65, %v49, 0
    %v70 = vsel %vm65, %v50, 0
    %v73 = vsel %vm65, %v51, 0
    %vm75 = vcmask 1041408
    %v77 = vsel %vm75, %v61, 0
    %v80 = vsel %vm75, %v62, 0
    %v83 = vsel %vm75, %v63, 0
    %v86 = vsel %vm75, %v64, 0
    %88 = vmatpush.msra.mxu0 0.0
    %89 = vmatpush.msra.mxu0 0.0
    %90 = vmatpush.msra.mxu0 0.0
    %91 = vmatpush.msra.mxu0 0.0
    %92 = vmatpush.msra.mxu0 0.0
    %93 = vmatpush.msra.mxu0 0.0
    %94 = vmatpush.msra.mxu0 0.0
    %95 = vmatpush.msra.mxu0 0.0
    %96 = vmatpush.msra.mxu0 0.0
    %97 = vmatpush.msra.mxu0 0.0
    %98 = vmatpush.msra.mxu0 0.0
    %99 = vmatpush.msra.mxu0 0.0
    %100 = vmatpush.msra.mxu0 0.0
    %101 = vmatpush.msra.mxu0 %v77
    %102 = vmatpush.msra.mxu0 %v57
    %103 = vmatpush.msra.mxu0 %v53
    %104 = vmatmul.f32.gmra.mxu0 %v67
    %v105 = vpop.f32.mrf.mxu0
    %v106 = vadd.f32 0.0, %v105
    %107 = vmatmul.f32.gmra.mxu0 %v70
    %v108 = vpop.f32.mrf.mxu0
    %v109 = vadd.f32 0.0, %v108
    %110 = vmatmul.f32.gmra.mxu0 %v73
    %v111 = vpop.f32.mrf.mxu0
    %v112 = vadd.f32 0.0, %v111
    %113 = vdwg.mxu0
    %114 = vmatpush.msra.mxu0 0.0
    %115 = vmatpush.msra.mxu0 0.0
    %116 = vmatpush.msra.mxu0 0.0
    %117 = vmatpush.msra.mxu0 0.0
    %118 = vmatpush.msra.mxu0 0.0
    %119 = vmatpush.msra.mxu0 0.0
    %120 = vmatpush.msra.mxu0 0.0
    %121 = vmatpush.msra.mxu0 0.0
    %122 = vmatpush.msra.mxu0 0.0
    %123 = vmatpush.msra.mxu0 0.0
    %124 = vmatpush.msra.mxu0 0.0
    %125 = vmatpush.msra.mxu0 0.0
    %126 = vmatpush.msra.mxu0 0.0
    %127 = vmatpush.msra.mxu0 %v80
    %128 = vmatpush.msra.mxu0 %v58
    %129 = vmatpush.msra.mxu0 %v54
    %130 = vmatmul.f32.gmra.mxu0 %v67
    %v131 = vpop.f32.mrf.mxu0
    %v132 = vadd.f32 0.0, %v131
    %133 = vmatmul.f32.gmra.mxu0 %v70
    %v134 = vpop.f32.mrf.mxu0
    %v135 = vadd.f32 0.0, %v134
    %136 = vmatmul.f32.gmra.mxu0 %v73
    %v137 = vpop.f32.mrf.mxu0
    %v138 = vadd.f32 0.0, %v137
    %139 = vdwg.mxu0
    %140 = vmatpush.msra.mxu0 0.0
    %141 = vmatpush.msra.mxu0 0.0
    %142 = vmatpush.msra.mxu0 0.0
    %143 = vmatpush.msra.mxu0 0.0
    %144 = vmatpush.msra.mxu0 0.0
    %145 = vmatpush.msra.mxu0 0.0
    %146 = vmatpush.msra.mxu0 0.0
    %147 = vmatpush.msra.mxu0 0.0
    %148 = vmatpush.msra.mxu0 0.0
    %149 = vmatpush.msra.mxu0 0.0
    %150 = vmatpush.msra.mxu0 0.0
    %151 = vmatpush.msra.mxu0 0.0
    %152 = vmatpush.msra.mxu0 0.0
    %153 = vmatpush.msra.mxu0 %v83
    %154 = vmatpush.msra.mxu0 %v59
    %155 = vmatpush.msra.mxu0 %v55
    %156 = vmatmul.f32.gmra.mxu0 %v67
    %v157 = vpop.f32.mrf.mxu0
    %v158 = vadd.f32 0.0, %v157
    %159 = vmatmul.f32.gmra.mxu0 %v70
    %v160 = vpop.f32.mrf.mxu0
    %v161 = vadd.f32 0.0, %v160
    %162 = vmatmul.f32.gmra.mxu0 %v73
    %v163 = vpop.f32.mrf.mxu0
    %v164 = vadd.f32 0.0, %v163
    %165 = vdwg.mxu0
    %166 = vmatpush.msra.mxu0 0.0
    %167 = vmatpush.msra.mxu0 0.0
    %168 = vmatpush.msra.mxu0 0.0
    %169 = vmatpush.msra.mxu0 0.0
    %170 = vmatpush.msra.mxu0 0.0
    %171 = vmatpush.msra.mxu0 0.0
    %172 = vmatpush.msra.mxu0 0.0
    %173 = vmatpush.msra.mxu0 0.0
    %174 = vmatpush.msra.mxu0 0.0
    %175 = vmatpush.msra.mxu0 0.0
    %176 = vmatpush.msra.mxu0 0.0
    %177 = vmatpush.msra.mxu0 0.0
    %178 = vmatpush.msra.mxu0 0.0
    %179 = vmatpush.msra.mxu0 %v86
    %180 = vmatpush.msra.mxu0 %v60
    %181 = vmatpush.msra.mxu0 %v56
    %182 = vmatmul.f32.gmra.mxu0 %v67
    %v183 = vpop.f32.mrf.mxu0
    %v184 = vadd.f32 0.0, %v183
    %185 = vmatmul.f32.gmra.mxu0 %v70
    %v186 = vpop.f32.mrf.mxu0
    %v187 = vadd.f32 0.0, %v186
    %188 = vmatmul.f32.gmra.mxu0 %v73
    %v189 = vpop.f32.mrf.mxu0
    %v190 = vadd.f32 0.0, %v189
    %191 = vdwg.mxu0
    %v193 = vsel %vm65, %v33, 0
    %v196 = vsel %vm65, %v34, 0
    %v199 = vsel %vm65, %v35, 0
    %v202 = vsel %vm75, %v44, 0
    %v205 = vsel %vm75, %v45, 0
    %v208 = vsel %vm75, %v46, 0
    %v211 = vsel %vm75, %v47, 0
    %213 = vmatpush.msra.mxu0 0.0
    %214 = vmatpush.msra.mxu0 0.0
    %215 = vmatpush.msra.mxu0 0.0
    %216 = vmatpush.msra.mxu0 0.0
    %217 = vmatpush.msra.mxu0 0.0
    %218 = vmatpush.msra.mxu0 0.0
    %219 = vmatpush.msra.mxu0 0.0
    %220 = vmatpush.msra.mxu0 0.0
    %221 = vmatpush.msra.mxu0 0.0
    %222 = vmatpush.msra.mxu0 0.0
    %223 = vmatpush.msra.mxu0 0.0
    %224 = vmatpush.msra.mxu0 0.0
    %225 = vmatpush.msra.mxu0 0.0
    %226 = vmatpush.msra.mxu0 %v202
    %227 = vmatpush.msra.mxu0 %v40
    %228 = vmatpush.msra.mxu0 %v36
    %229 = vmatmul.f32.gmra.mxu0 %v193
    %v230 = vpop.f32.mrf.mxu0
    %v231 = vadd.f32 %v106, %v230
    %232 = vmatmul.f32.gmra.mxu0 %v196
    %v233 = vpop.f32.mrf.mxu0
    %v234 = vadd.f32 %v109, %v233
    %235 = vmatmul.f32.gmra.mxu0 %v199
    %v236 = vpop.f32.mrf.mxu0
    %v237 = vadd.f32 %v112, %v236
    %238 = vdwg.mxu0
    %239 = vmatpush.msra.mxu0 0.0
    %240 = vmatpush.msra.mxu0 0.0
    %241 = vmatpush.msra.mxu0 0.0
    %242 = vmatpush.msra.mxu0 0.0
    %243 = vmatpush.msra.mxu0 0.0
    %244 = vmatpush.msra.mxu0 0.0
    %245 = vmatpush.msra.mxu0 0.0
    %246 = vmatpush.msra.mxu0 0.0
    %247 = vmatpush.msra.mxu0 0.0
    %248 = vmatpush.msra.mxu0 0.0
    %249 = vmatpush.msra.mxu0 0.0
    %250 = vmatpush.msra.mxu0 0.0
    %251 = vmatpush.msra.mxu0 0.0
    %252 = vmatpush.msra.mxu0 %v205
    %253 = vmatpush.msra.mxu0 %v41
    %254 = vmatpush.msra.mxu0 %v37
    %255 = vmatmul.f32.gmra.mxu0 %v193
    %v256 = vpop.f32.mrf.mxu0
    %v257 = vadd.f32 %v132, %v256
    %258 = vmatmul.f32.gmra.mxu0 %v196
    %v259 = vpop.f32.mrf.mxu0
    %v260 = vadd.f32 %v135, %v259
    %261 = vmatmul.f32.gmra.mxu0 %v199
    %v262 = vpop.f32.mrf.mxu0
    %v263 = vadd.f32 %v138, %v262
    %264 = vdwg.mxu0
    %265 = vmatpush.msra.mxu0 0.0
    %266 = vmatpush.msra.mxu0 0.0
    %267 = vmatpush.msra.mxu0 0.0
    %268 = vmatpush.msra.mxu0 0.0
    %269 = vmatpush.msra.mxu0 0.0
    %270 = vmatpush.msra.mxu0 0.0
    %271 = vmatpush.msra.mxu0 0.0
    %272 = vmatpush.msra.mxu0 0.0
    %273 = vmatpush.msra.mxu0 0.0
    %274 = vmatpush.msra.mxu0 0.0
    %275 = vmatpush.msra.mxu0 0.0
    %276 = vmatpush.msra.mxu0 0.0
    %277 = vmatpush.msra.mxu0 0.0
    %278 = vmatpush.msra.mxu0 %v208
    %279 = vmatpush.msra.mxu0 %v42
    %280 = vmatpush.msra.mxu0 %v38
    %281 = vmatmul.f32.gmra.mxu0 %v193
    %v282 = vpop.f32.mrf.mxu0
    %v283 = vadd.f32 %v158, %v282
    %284 = vmatmul.f32.gmra.mxu0 %v196
    %v285 = vpop.f32.mrf.mxu0
    %v286 = vadd.f32 %v161, %v285
    %287 = vmatmul.f32.gmra.mxu0 %v199
    %v288 = vpop.f32.mrf.mxu0
    %v289 = vadd.f32 %v164, %v288
    %290 = vdwg.mxu0
    %291 = vmatpush.msra.mxu0 0.0
    %292 = vmatpush.msra.mxu0 0.0
    %293 = vmatpush.msra.mxu0 0.0
    %294 = vmatpush.msra.mxu0 0.0
    %295 = vmatpush.msra.mxu0 0.0
    %296 = vmatpush.msra.mxu0 0.0
    %297 = vmatpush.msra.mxu0 0.0
    %298 = vmatpush.msra.mxu0 0.0
    %299 = vmatpush.msra.mxu0 0.0
    %300 = vmatpush.msra.mxu0 0.0
    %301 = vmatpush.msra.mxu0 0.0
    %302 = vmatpush.msra.mxu0 0.0
    %303 = vmatpush.msra.mxu0 0.0
    %304 = vmatpush.msra.mxu0 %v211
    %305 = vmatpush.msra.mxu0 %v43
    %306 = vmatpush.msra.mxu0 %v39
    %307 = vmatmul.f32.gmra.mxu0 %v193
    %v308 = vpop.f32.mrf.mxu0
    %v309 = vadd.f32 %v184, %v308
    %310 = vmatmul.f32.gmra.mxu0 %v196
    %v311 = vpop.f32.mrf.mxu0
    %v312 = vadd.f32 %v187, %v311
    %313 = vmatmul.f32.gmra.mxu0 %v199
    %v314 = vpop.f32.mrf.mxu0
    %v315 = vadd.f32 %v190, %v314
    %316 = vdwg.mxu0
    %s317 = scalar_lea.vmem %s0, 48
    %v318 = vld [vmem:[%s317] sm:$0xff]
    %v319 = vld [vmem:[%s317 + $0x8] sm:$0xff]
    %v320 = vld [vmem:[%s317 + $0x10] sm:$0xff]
    %s321 = scalar_lea.vmem %s1, 192
    %v322 = vld [vmem:[%s321] sm:$0xff]
    %v323 = vld [vmem:[%s321 + $0x8] sm:$0xff]
    %v324 = vld [vmem:[%s321 + $0x10] sm:$0xff]
    %v325 = vld [vmem:[%s321 + $0x18] sm:$0xff]
    %v326 = vld [vmem:[%s321 + $0x20] sm:$0xff]
    %v327 = vld [vmem:[%s321 + $0x28] sm:$0xff]
    %v328 = vld [vmem:[%s321 + $0x30] sm:$0xff]
    %v329 = vld [vmem:[%s321 + $0x38] sm:$0xff]
    %v330 = vld [vmem:[%s321 + $0x40] sm:$0x3]
    %v331 = vld [vmem:[%s321 + $0x48] sm:$0x3]
    %v332 = vld [vmem:[%s321 + $0x50] sm:$0x3]
    %v333 = vld [vmem:[%s321 + $0x58] sm:$0x3]
    %v335 = vsel %vm65, %v318, 0
    %v338 = vsel %vm65, %v319, 0
    %v341 = vsel %vm65, %v320, 0
    %v344 = vsel %vm75, %v330, 0
    %v347 = vsel %vm75, %v331, 0
    %v350 = vsel %vm75, %v332, 0
    %v353 = vsel %vm75, %v333, 0
    %355 = vmatpush.msra.mxu0 0.0
    %356 = vmatpush.msra.mxu0 0.0
    %357 = vmatpush.msra.mxu0 0.0
    %358 = vmatpush.msra.mxu0 0.0
    %359 = vmatpush.msra.mxu0 0.0
    %360 = vmatpush.msra.mxu0 0.0
    %361 = vmatpush.msra.mxu0 0.0
    %362 = vmatpush.msra.mxu0 0.0
    %363 = vmatpush.msra.mxu0 0.0
    %364 = vmatpush.msra.mxu0 0.0
    %365 = vmatpush.msra.mxu0 0.0
    %366 = vmatpush.msra.mxu0 0.0
    %367 = vmatpush.msra.mxu0 0.0
    %368 = vmatpush.msra.mxu0 %v344
    %369 = vmatpush.msra.mxu0 %v326
    %370 = vmatpush.msra.mxu0 %v322
    %371 = vmatmul.f32.gmra.mxu0 %v335
    %v372 = vpop.f32.mrf.mxu0
    %v373 = vadd.f32 0.0, %v372
    %374 = vmatmul.f32.gmra.mxu0 %v338
    %v375 = vpop.f32.mrf.mxu0
    %v376 = vadd.f32 0.0, %v375
    %377 = vmatmul.f32.gmra.mxu0 %v341
    %v378 = vpop.f32.mrf.mxu0
    %v379 = vadd.f32 0.0, %v378
    %380 = vdwg.mxu0
    %381 = vmatpush.msra.mxu0 0.0
    %382 = vmatpush.msra.mxu0 0.0
    %383 = vmatpush.msra.mxu0 0.0
    %384 = vmatpush.msra.mxu0 0.0
    %385 = vmatpush.msra.mxu0 0.0
    %386 = vmatpush.msra.mxu0 0.0
    %387 = vmatpush.msra.mxu0 0.0
    %388 = vmatpush.msra.mxu0 0.0
    %389 = vmatpush.msra.mxu0 0.0
    %390 = vmatpush.msra.mxu0 0.0
    %391 = vmatpush.msra.mxu0 0.0
    %392 = vmatpush.msra.mxu0 0.0
    %393 = vmatpush.msra.mxu0 0.0
    %394 = vmatpush.msra.mxu0 %v347
    %395 = vmatpush.msra.mxu0 %v327
    %396 = vmatpush.msra.mxu0 %v323
    %397 = vmatmul.f32.gmra.mxu0 %v335
    %v398 = vpop.f32.mrf.mxu0
    %v399 = vadd.f32 0.0, %v398
    %400 = vmatmul.f32.gmra.mxu0 %v338
    %v401 = vpop.f32.mrf.mxu0
    %v402 = vadd.f32 0.0, %v401
    %403 = vmatmul.f32.gmra.mxu0 %v341
    %v404 = vpop.f32.mrf.mxu0
    %v405 = vadd.f32 0.0, %v404
    %406 = vdwg.mxu0
    %407 = vmatpush.msra.mxu0 0.0
    %408 = vmatpush.msra.mxu0 0.0
    %409 = vmatpush.msra.mxu0 0.0
    %410 = vmatpush.msra.mxu0 0.0
    %411 = vmatpush.msra.mxu0 0.0
    %412 = vmatpush.msra.mxu0 0.0
    %413 = vmatpush.msra.mxu0 0.0
    %414 = vmatpush.msra.mxu0 0.0
    %415 = vmatpush.msra.mxu0 0.0
    %416 = vmatpush.msra.mxu0 0.0
    %417 = vmatpush.msra.mxu0 0.0
    %418 = vmatpush.msra.mxu0 0.0
    %419 = vmatpush.msra.mxu0 0.0
    %420 = vmatpush.msra.mxu0 %v350
    %421 = vmatpush.msra.mxu0 %v328
    %422 = vmatpush.msra.mxu0 %v324
    %423 = vmatmul.f32.gmra.mxu0 %v335
    %v424 = vpop.f32.mrf.mxu0
    %v425 = vadd.f32 0.0, %v424
    %426 = vmatmul.f32.gmra.mxu0 %v338
    %v427 = vpop.f32.mrf.mxu0
    %v428 = vadd.f32 0.0, %v427
    %429 = vmatmul.f32.gmra.mxu0 %v341
    %v430 = vpop.f32.mrf.mxu0
    %v431 = vadd.f32 0.0, %v430
    %432 = vdwg.mxu0
    %433 = vmatpush.msra.mxu0 0.0
    %434 = vmatpush.msra.mxu0 0.0
    %435 = vmatpush.msra.mxu0 0.0
    %436 = vmatpush.msra.mxu0 0.0
    %437 = vmatpush.msra.mxu0 0.0
    %438 = vmatpush.msra.mxu0 0.0
    %439 = vmatpush.msra.mxu0 0.0
    %440 = vmatpush.msra.mxu0 0.0
    %441 = vmatpush.msra.mxu0 0.0
    %442 = vmatpush.msra.mxu0 0.0
    %443 = vmatpush.msra.mxu0 0.0
    %444 = vmatpush.msra.mxu0 0.0
    %445 = vmatpush.msra.mxu0 0.0
    %446 = vmatpush.msra.mxu0 %v353
    %447 = vmatpush.msra.mxu0 %v329
    %448 = vmatpush.msra.mxu0 %v325
    %449 = vmatmul.f32.gmra.mxu0 %v335
    %v450 = vpop.f32.mrf.mxu0
    %v451 = vadd.f32 0.0, %v450
    %452 = vmatmul.f32.gmra.mxu0 %v338
    %v453 = vpop.f32.mrf.mxu0
    %v454 = vadd.f32 0.0, %v453
    %455 = vmatmul.f32.gmra.mxu0 %v341
    %v456 = vpop.f32.mrf.mxu0
    %v457 = vadd.f32 0.0, %v456
    %458 = vdwg.mxu0
    %v459 = vadd.f32 %v231, %v373
    %v460 = vadd.f32 %v257, %v399
    %v461 = vadd.f32 %v283, %v425
    %v462 = vadd.f32 %v309, %v451
    %v463 = vadd.f32 %v234, %v376
    %v464 = vadd.f32 %v260, %v402
    %v465 = vadd.f32 %v286, %v428
    %v466 = vadd.f32 %v312, %v454
    %v467 = vadd.f32 %v237, %v379
    %v468 = vadd.f32 %v263, %v405
    %v469 = vadd.f32 %v289, %v431
    %v470 = vadd.f32 %v315, %v457
    %v471 = vmax.f32 %v459, 0.0
    %v472 = vmax.f32 %v460, 0.0
    %v473 = vmax.f32 %v461, 0.0
    %v474 = vmax.f32 %v462, 0.0
    %v475 = vmax.f32 %v463, 0.0
    %v476 = vmax.f32 %v464, 0.0
    %v477 = vmax.f32 %v465, 0.0
    %v478 = vmax.f32 %v466, 0.0
    %v479 = vmax.f32 %v467, 0.0
    %v480 = vmax.f32 %v468, 0.0
    %v481 = vmax.f32 %v469, 0.0
    %v482 = vmax.f32 %v470, 0.0
    %v483 = vld [vmem:[%s3] sm:$0xff]
    %v484 = vld [vmem:[%s3 + $0x8] sm:$0xff]
    %v485 = vld [vmem:[%s3 + $0x10] sm:$0xff]
    %v486 = vld [vmem:[%s3 + $0x18] sm:$0xff]
    %v487 = vld [vmem:[%s3 + $0x20] sm:$0xff]
    %v488 = vld [vmem:[%s3 + $0x28] sm:$0xff]
    %v489 = vld [vmem:[%s3 + $0x30] sm:$0xff]
    %v490 = vld [vmem:[%s3 + $0x38] sm:$0xff]
    %v491 = vld [vmem:[%s3 + $0x40] sm:$0xff]
    %v492 = vld [vmem:[%s3 + $0x48] sm:$0xff]
    %v493 = vld [vmem:[%s3 + $0x50] sm:$0xff]
    %v494 = vld [vmem:[%s3 + $0x58] sm:$0xff]
    %v495 = vld [vmem:[%s3 + $0x60] sm:$0xff]
    %v496 = vld [vmem:[%s3 + $0x68] sm:$0xff]
    %v497 = vld [vmem:[%s3 + $0x70] sm:$0xff]
    %v498 = vld [vmem:[%s3 + $0x78] sm:$0xff]
    %v499 = vld [vmem:[%s3 + $0x80] sm:$0xff]
    %v500 = vld [vmem:[%s3 + $0x88] sm:$0xff]
    %v501 = vld [vmem:[%s3 + $0x90] sm:$0xff]
    %v502 = vld [vmem:[%s3 + $0x98] sm:$0xff]
    %v503 = vld [vmem:[%s3 + $0xa0] sm:$0xff]
    %v504 = vld [vmem:[%s3 + $0xa8] sm:$0xff]
    %v505 = vld [vmem:[%s3 + $0xb0] sm:$0xff]
    %v506 = vld [vmem:[%s3 + $0xb8] sm:$0xff]
    %v507 = vld [vmem:[%s3 + $0xc0] sm:$0xff]
    %v508 = vld [vmem:[%s3 + $0xc8] sm:$0xff]
    %v509 = vld [vmem:[%s3 + $0xd0] sm:$0xff]
    %v510 = vld [vmem:[%s3 + $0xd8] sm:$0xff]
    %v511 = vld [vmem:[%s3 + $0xe0] sm:$0xff]
    %v512 = vld [vmem:[%s3 + $0xe8] sm:$0xff]
    %v513 = vld [vmem:[%s3 + $0xf0] sm:$0xff]
    %v514 = vld [vmem:[%s3 + $0xf8] sm:$0xff]
    %v515 = vld [vmem:[%s3 + $0x100] sm:$0xff]
    %v516 = vld [vmem:[%s3 + $0x108] sm:$0xff]
    %v517 = vld [vmem:[%s3 + $0x110] sm:$0xff]
    %v518 = vld [vmem:[%s3 + $0x118] sm:$0xff]
    %v519 = vld [vmem:[%s3 + $0x120] sm:$0xff]
    %v520 = vld [vmem:[%s3 + $0x128] sm:$0xff]
    %v521 = vld [vmem:[%s3 + $0x130] sm:$0xff]
    %v522 = vld [vmem:[%s3 + $0x138] sm:$0xff]
    %v523 = vld [vmem:[%s3 + $0x140] sm:$0xff]
    %v524 = vld [vmem:[%s3 + $0x148] sm:$0xff]
    %v525 = vld [vmem:[%s3 + $0x150] sm:$0xff]
    %v526 = vld [vmem:[%s3 + $0x158] sm:$0xff]
    %v527 = vld [vmem:[%s3 + $0x160] sm:$0xff]
    %v528 = vld [vmem:[%s3 + $0x168] sm:$0xff]
    %v529 = vld [vmem:[%s3 + $0x170] sm:$0xff]
    %v530 = vld [vmem:[%s3 + $0x178] sm:$0xff]
    %v531 = vld [vmem:[%s3 + $0x180] sm:$0xff]
    %v532 = vld [vmem:[%s3 + $0x188] sm:$0xff]
    %v533 = vld [vmem:[%s3 + $0x190] sm:$0xff]
    %v534 = vld [vmem:[%s3 + $0x198] sm:$0xff]
    %v535 = vld [vmem:[%s3 + $0x1a0] sm:$0xff]
    %v536 = vld [vmem:[%s3 + $0x1a8] sm:$0xff]
    %v537 = vld [vmem:[%s3 + $0x1b0] sm:$0xff]
    %v538 = vld [vmem:[%s3 + $0x1b8] sm:$0xff]
    %v539 = vld [vmem:[%s3 + $0x1c0] sm:$0xff]
    %v540 = vld [vmem:[%s3 + $0x1c8] sm:$0xff]
    %v541 = vld [vmem:[%s3 + $0x1d0] sm:$0xff]
    %v542 = vld [vmem:[%s3 + $0x1d8] sm:$0xff]
    %v543 = vld [vmem:[%s3 + $0x1e0] sm:$0xff]
    %v544 = vld [vmem:[%s3 + $0x1e8] sm:$0xff]
    %v545 = vld [vmem:[%s3 + $0x1f0] sm:$0xff]
    %v546 = vld [vmem:[%s3 + $0x1f8] sm:$0xff]
    %547 = vmatpush.msra.mxu0 %v498
    %548 = vmatpush.msra.mxu0 %v497
    %549 = vmatpush.msra.mxu0 %v496
    %550 = vmatpush.msra.mxu0 %v495
    %551 = vmatpush.msra.mxu0 %v494
    %552 = vmatpush.msra.mxu0 %v493
    %553 = vmatpush.msra.mxu0 %v492
    %554 = vmatpush.msra.mxu0 %v491
    %555 = vmatpush.msra.mxu0 %v490
    %556 = vmatpush.msra.mxu0 %v489
    %557 = vmatpush.msra.mxu0 %v488
    %558 = vmatpush.msra.mxu0 %v487
    %559 = vmatpush.msra.mxu0 %v486
    %560 = vmatpush.msra.mxu0 %v485
    %561 = vmatpush.msra.mxu0 %v484
    %562 = vmatpush.msra.mxu0 %v483
    %563 = vmatmul.f32.gmra.mxu0 %v471
    %v564 = vpop.f32.mrf.mxu0
    %v565 = vadd.f32 0.0, %v564
    %566 = vmatmul.f32.gmra.mxu0 %v475
    %v567 = vpop.f32.mrf.mxu0
    %v568 = vadd.f32 0.0, %v567
    %569 = vmatmul.f32.gmra.mxu0 %v479
    %v570 = vpop.f32.mrf.mxu0
    %v571 = vadd.f32 0.0, %v570
    %572 = vdwg.mxu0
    %573 = vmatpush.msra.mxu0 %v514
    %574 = vmatpush.msra.mxu0 %v513
    %575 = vmatpush.msra.mxu0 %v512
    %576 = vmatpush.msra.mxu0 %v511
    %577 = vmatpush.msra.mxu0 %v510
    %578 = vmatpush.msra.mxu0 %v509
    %579 = vmatpush.msra.mxu0 %v508
    %580 = vmatpush.msra.mxu0 %v507
    %581 = vmatpush.msra.mxu0 %v506
    %582 = vmatpush.msra.mxu0 %v505
    %583 = vmatpush.msra.mxu0 %v504
    %584 = vmatpush.msra.mxu0 %v503
    %585 = vmatpush.msra.mxu0 %v502
    %586 = vmatpush.msra.mxu0 %v501
    %587 = vmatpush.msra.mxu0 %v500
    %588 = vmatpush.msra.mxu0 %v499
    %589 = vmatmul.f32.gmra.mxu0 %v472
    %v590 = vpop.f32.mrf.mxu0
    %v591 = vadd.f32 %v565, %v590
    %592 = vmatmul.f32.gmra.mxu0 %v476
    %v593 = vpop.f32.mrf.mxu0
    %v594 = vadd.f32 %v568, %v593
    %595 = vmatmul.f32.gmra.mxu0 %v480
    %v596 = vpop.f32.mrf.mxu0
    %v597 = vadd.f32 %v571, %v596
    %598 = vdwg.mxu0
    %599 = vmatpush.msra.mxu0 %v530
    %600 = vmatpush.msra.mxu0 %v529
    %601 = vmatpush.msra.mxu0 %v528
    %602 = vmatpush.msra.mxu0 %v527
    %603 = vmatpush.msra.mxu0 %v526
    %604 = vmatpush.msra.mxu0 %v525
    %605 = vmatpush.msra.mxu0 %v524
    %606 = vmatpush.msra.mxu0 %v523
    %607 = vmatpush.msra.mxu0 %v522
    %608 = vmatpush.msra.mxu0 %v521
    %609 = vmatpush.msra.mxu0 %v520
    %610 = vmatpush.msra.mxu0 %v519
    %611 = vmatpush.msra.mxu0 %v518
    %612 = vmatpush.msra.mxu0 %v517
    %613 = vmatpush.msra.mxu0 %v516
    %614 = vmatpush.msra.mxu0 %v515
    %615 = vmatmul.f32.gmra.mxu0 %v473
    %v616 = vpop.f32.mrf.mxu0
    %v617 = vadd.f32 %v591, %v616
    %618 = vmatmul.f32.gmra.mxu0 %v477
    %v619 = vpop.f32.mrf.mxu0
    %v620 = vadd.f32 %v594, %v619
    %621 = vmatmul.f32.gmra.mxu0 %v481
    %v622 = vpop.f32.mrf.mxu0
    %v623 = vadd.f32 %v597, %v622
    %624 = vdwg.mxu0
    %625 = vmatpush.msra.mxu0 %v546
    %626 = vmatpush.msra.mxu0 %v545
    %627 = vmatpush.msra.mxu0 %v544
    %628 = vmatpush.msra.mxu0 %v543
    %629 = vmatpush.msra.mxu0 %v542
    %630 = vmatpush.msra.mxu0 %v541
    %631 = vmatpush.msra.mxu0 %v540
    %632 = vmatpush.msra.mxu0 %v539
    %633 = vmatpush.msra.mxu0 %v538
    %634 = vmatpush.msra.mxu0 %v537
    %635 = vmatpush.msra.mxu0 %v536
    %636 = vmatpush.msra.mxu0 %v535
    %637 = vmatpush.msra.mxu0 %v534
    %638 = vmatpush.msra.mxu0 %v533
    %639 = vmatpush.msra.mxu0 %v532
    %640 = vmatpush.msra.mxu0 %v531
    %641 = vmatmul.f32.gmra.mxu0 %v474
    %v642 = vpop.f32.mrf.mxu0
    %v643 = vadd.f32 %v617, %v642
    %644 = vmatmul.f32.gmra.mxu0 %v478
    %v645 = vpop.f32.mrf.mxu0
    %v646 = vadd.f32 %v620, %v645
    %647 = vmatmul.f32.gmra.mxu0 %v482
    %v648 = vpop.f32.mrf.mxu0
    %v649 = vadd.f32 %v623, %v648
    %650 = vdwg.mxu0
    %v651 = vld [vmem:[%s4] sm:$0xff]
    %vm652 = vcmask 195584
    %v654 = vsel %vm652, %v651, 0
    %656 = vmatpush.msra.mxu0 0.0
    %657 = vmatpush.msra.mxu0 0.0
    %658 = vmatpush.msra.mxu0 0.0
    %659 = vmatpush.msra.mxu0 0.0
    %660 = vmatpush.msra.mxu0 0.0
    %661 = vmatpush.msra.mxu0 0.0
    %662 = vmatpush.msra.mxu0 0.0
    %663 = vmatpush.msra.mxu0 0.0
    %664 = vmatpush.msra.mxu0 0.0
    %665 = vmatpush.msra.mxu0 0.0
    %666 = vmatpush.msra.mxu0 0.0
    %667 = vmatpush.msra.mxu0 0.0
    %668 = vmatpush.msra.mxu0 0.0
    %669 = vmatpush.msra.mxu0 %v649
    %670 = vmatpush.msra.mxu0 %v646
    %671 = vmatpush.msra.mxu0 %v643
    %672 = vmatmul.f32.gmra.mxu0 %v654
    %v673 = vpop.f32.mrf.mxu0
    %v674 = vadd.f32 0.0, %v673
    %675 = vdwg.mxu0
    %676 = vst [vmem:[#allocation2] sm:$0xff] 0.0
    %677 = vst [vmem:[#allocation2 + $0x8] sm:$0x3] 0.0
    %678 = vst [vmem:[#allocation2 + $0x1] sm:$0xff] %v674
    %v679 = vld [vmem:[%s8] sm:$0xff]
    %v680 = vld [vmem:[#allocation2] sm:$0xff]
    %682 = vset.pattern.permute.xlu0 0
    %683 = vperm.xlu0 %682, %v679
    %v684 = vpop.permute.xlu0 %683
    %v686 = vmul.f32 %v684, %v680
    %v687 = vld [vmem:[%s2] sm:$0xff]
    %v688 = vld [vmem:[%s2 + $0x8] sm:$0xff]
    %v689 = vld [vmem:[%s2 + $0x10] sm:$0xff]
    %v690 = vld [vmem:[%s2 + $0x18] sm:$0xff]
    %v691 = vld [vmem:[%s2 + $0x20] sm:$0xff]
    %v692 = vld [vmem:[%s2 + $0x28] sm:$0xff]
    %v693 = vld [vmem:[%s2 + $0x30] sm:$0xff]
    %v694 = vld [vmem:[%s2 + $0x38] sm:$0xff]
    %v695 = vld [vmem:[%s2 + $0x40] sm:$0xff]
    %v696 = vld [vmem:[%s2 + $0x48] sm:$0xff]
    %v697 = vld [vmem:[%s2 + $0x50] sm:$0xff]
    %v698 = vld [vmem:[%s2 + $0x58] sm:$0xff]
    %v699 = vld [vmem:[%s2 + $0x60] sm:$0xff]
    %v700 = vld [vmem:[%s2 + $0x68] sm:$0xff]
    %v701 = vld [vmem:[%s2 + $0x70] sm:$0xff]
    %v702 = vld [vmem:[%s2 + $0x78] sm:$0xff]
    %v703 = vld [vmem:[#allocation2 + $0x1] sm:$0xff]
    %s704 = scalar_lea.vmem %s2, 128
    %v705 = vld [vmem:[%s704] sm:$0xff]
    %v706 = vld [vmem:[%s704 + $0x8] sm:$0xff]
    %v707 = vld [vmem:[%s704 + $0x10] sm:$0xff]
    %v708 = vld [vmem:[%s704 + $0x18] sm:$0xff]
    %v709 = vld [vmem:[%s704 + $0x20] sm:$0xff]
    %v710 = vld [vmem:[%s704 + $0x28] sm:$0xff]
    %v711 = vld [vmem:[%s704 + $0x30] sm:$0xff]
    %v712 = vld [vmem:[%s704 + $0x38] sm:$0xff]
    %v713 = vld [vmem:[%s704 + $0x40] sm:$0xff]
    %v714 = vld [vmem:[%s704 + $0x48] sm:$0xff]
    %v715 = vld [vmem:[%s704 + $0x50] sm:$0xff]
    %v716 = vld [vmem:[%s704 + $0x58] sm:$0xff]
    %v717 = vld [vmem:[%s704 + $0x60] sm:$0xff]
    %v718 = vld [vmem:[%s704 + $0x68] sm:$0xff]
    %v719 = vld [vmem:[%s704 + $0x70] sm:$0xff]
    %v720 = vld [vmem:[%s704 + $0x78] sm:$0xff]
    %721 = vmatpush.msra.mxu0 %v720
    %722 = vmatpush.msra.mxu0 %v719
    %723 = vmatpush.msra.mxu0 %v718
    %724 = vmatpush.msra.mxu0 %v717
    %725 = vmatpush.msra.mxu0 %v716
    %726 = vmatpush.msra.mxu0 %v715
    %727 = vmatpush.msra.mxu0 %v714
    %728 = vmatpush.msra.mxu0 %v713
    %729 = vmatpush.msra.mxu0 %v712
    %730 = vmatpush.msra.mxu0 %v711
    %731 = vmatpush.msra.mxu0 %v710
    %732 = vmatpush.msra.mxu0 %v709
    %733 = vmatpush.msra.mxu0 %v708
    %734 = vmatpush.msra.mxu0 %v707
    %735 = vmatpush.msra.mxu0 %v706
    %736 = vmatpush.msra.mxu0 %v705
    %737 = vmatmul.f32.gmra.mxu0 %v703
    %v738 = vpop.f32.mrf.mxu0
    %v739 = vadd.f32 0.0, %v738
    %740 = vdwg.mxu0
    %741 = vmatpush.msra.mxu0 %v702
    %742 = vmatpush.msra.mxu0 %v701
    %743 = vmatpush.msra.mxu0 %v700
    %744 = vmatpush.msra.mxu0 %v699
    %745 = vmatpush.msra.mxu0 %v698
    %746 = vmatpush.msra.mxu0 %v697
    %747 = vmatpush.msra.mxu0 %v696
    %748 = vmatpush.msra.mxu0 %v695
    %749 = vmatpush.msra.mxu0 %v694
    %750 = vmatpush.msra.mxu0 %v693
    %751 = vmatpush.msra.mxu0 %v692
    %752 = vmatpush.msra.mxu0 %v691
    %753 = vmatpush.msra.mxu0 %v690
    %754 = vmatpush.msra.mxu0 %v689
    %755 = vmatpush.msra.mxu0 %v688
    %756 = vmatpush.msra.mxu0 %v687
    %757 = vmatmul.f32.gmra.mxu0 %v686
    %v758 = vpop.f32.mrf.mxu0
    %v759 = vadd.f32 %v739, %v758
    %760 = vdwg.mxu0
    %s761 = scalar_lea.vmem %s8, 16
    %v762 = vld [vmem:[%s761] sm:$0xff]
    %v763 = vld [vmem:[#allocation2 + $0x2] sm:$0xff]
    %765 = vset.pattern.permute.xlu0 0
    %766 = vperm.xlu0 %765, %v762
    %v767 = vpop.permute.xlu0 %766
    %v769 = vmul.f32 %v767, %v763
    %s770 = scalar_lea.vmem %s2, 256
    %v771 = vld [vmem:[%s770] sm:$0xff]
    %v772 = vld [vmem:[%s770 + $0x8] sm:$0xff]
    %v773 = vld [vmem:[%s770 + $0x10] sm:$0xff]
    %v774 = vld [vmem:[%s770 + $0x18] sm:$0xff]
    %v775 = vld [vmem:[%s770 + $0x20] sm:$0xff]
    %v776 = vld [vmem:[%s770 + $0x28] sm:$0xff]
    %v777 = vld [vmem:[%s770 + $0x30] sm:$0xff]
    %v778 = vld [vmem:[%s770 + $0x38] sm:$0xff]
    %v779 = vld [vmem:[%s770 + $0x40] sm:$0xff]
    %v780 = vld [vmem:[%s770 + $0x48] sm:$0xff]
    %v781 = vld [vmem:[%s770 + $0x50] sm:$0xff]
    %v782 = vld [vmem:[%s770 + $0x58] sm:$0xff]
    %v783 = vld [vmem:[%s770 + $0x60] sm:$0xff]
    %v784 = vld [vmem:[%s770 + $0x68] sm:$0xff]
    %v785 = vld [vmem:[%s770 + $0x70] sm:$0xff]
    %v786 = vld [vmem:[%s770 + $0x78] sm:$0xff]
    %787 = vmatpush.msra.mxu0 %v786
    %788 = vmatpush.msra.mxu0 %v785
    %789 = vmatpush.msra.mxu0 %v784
    %790 = vmatpush.msra.mxu0 %v783
    %791 = vmatpush.msra.mxu0 %v782
    %792 = vmatpush.msra.mxu0 %v781
    %793 = vmatpush.msra.mxu0 %v780
    %794 = vmatpush.msra.mxu0 %v779
    %795 = vmatpush.msra.mxu0 %v778
    %796 = vmatpush.msra.mxu0 %v777
    %797 = vmatpush.msra.mxu0 %v776
    %798 = vmatpush.msra.mxu0 %v775
    %799 = vmatpush.msra.mxu0 %v774
    %800 = vmatpush.msra.mxu0 %v773
    %801 = vmatpush.msra.mxu0 %v772
    %802 = vmatpush.msra.mxu0 %v771
    %803 = vmatmul.f32.gmra.mxu0 %v769
    %v804 = vpop.f32.mrf.mxu0
    %v805 = vadd.f32 0.0, %v804
    %806 = vdwg.mxu0
    %v807 = vadd.f32 %v759, %v805
    %v808 = vmax.f32 %v807, 0.0
    %v809 = vld [vmem:[%s6] sm:$0xff]
    %v810 = vld [vmem:[%s6 + $0x8] sm:$0xff]
    %v811 = vld [vmem:[%s6 + $0x10] sm:$0xff]
    %v812 = vld [vmem:[%s6 + $0x18] sm:$0xff]
    %v813 = vld [vmem:[%s6 + $0x20] sm:$0xff]
    %v814 = vld [vmem:[%s6 + $0x28] sm:$0xff]
    %v815 = vld [vmem:[%s6 + $0x30] sm:$0xff]
    %v816 = vld [vmem:[%s6 + $0x38] sm:$0xff]
    %v817 = vld [vmem:[%s6 + $0x40] sm:$0xff]
    %v818 = vld [vmem:[%s6 + $0x48] sm:$0xff]
    %v819 = vld [vmem:[%s6 + $0x50] sm:$0xff]
    %v820 = vld [vmem:[%s6 + $0x58] sm:$0xff]
    %v821 = vld [vmem:[%s6 + $0x60] sm:$0xff]
    %v822 = vld [vmem:[%s6 + $0x68] sm:$0xff]
    %v823 = vld [vmem:[%s6 + $0x70] sm:$0xff]
    %v824 = vld [vmem:[%s6 + $0x78] sm:$0xff]
    %825 = vmatpush.msra.mxu0 %v824
    %826 = vmatpush.msra.mxu0 %v823
    %827 = vmatpush.msra.mxu0 %v822
    %828 = vmatpush.msra.mxu0 %v821
    %829 = vmatpush.msra.mxu0 %v820
    %830 = vmatpush.msra.mxu0 %v819
    %831 = vmatpush.msra.mxu0 %v818
    %832 = vmatpush.msra.mxu0 %v817
    %833 = vmatpush.msra.mxu0 %v816
    %834 = vmatpush.msra.mxu0 %v815
    %835 = vmatpush.msra.mxu0 %v814
    %836 = vmatpush.msra.mxu0 %v813
    %837 = vmatpush.msra.mxu0 %v812
    %838 = vmatpush.msra.mxu0 %v811
    %839 = vmatpush.msra.mxu0 %v810
    %840 = vmatpush.msra.mxu0 %v809
    %841 = vmatmul.f32.gmra.mxu0 %v808
    %v842 = vpop.f32.mrf.mxu0
    %v843 = vadd.f32 0.0, %v842
    %844 = vdwg.mxu0
    %v845 = vld [vmem:[%s5] sm:$0xff]
    %v846 = vld [vmem:[%s5 + $0x8] sm:$0xff]
    %v847 = vld [vmem:[%s5 + $0x10] sm:$0xff]
    %v848 = vld [vmem:[%s5 + $0x18] sm:$0xff]
    %vm849 = vcmask 261120
    %v851 = vsel %vm849, %v843, 0
    %853 = vmatpush.msra.mxu0 0.0
    %854 = vmatpush.msra.mxu0 0.0
    %855 = vmatpush.msra.mxu0 0.0
    %856 = vmatpush.msra.mxu0 0.0
    %857 = vmatpush.msra.mxu0 0.0
    %858 = vmatpush.msra.mxu0 0.0
    %859 = vmatpush.msra.mxu0 0.0
    %860 = vmatpush.msra.mxu0 0.0
    %861 = vmatpush.msra.mxu0 0.0
    %862 = vmatpush.msra.mxu0 0.0
    %863 = vmatpush.msra.mxu0 0.0
    %864 = vmatpush.msra.mxu0 0.0
    %865 = vmatpush.msra.mxu0 %v848
    %866 = vmatpush.msra.mxu0 %v847
    %867 = vmatpush.msra.mxu0 %v846
    %868 = vmatpush.msra.mxu0 %v845
    %869 = vmatmul.f32.gmra.mxu0 %v851
    %v870 = vpop.f32.mrf.mxu0
    %v871 = vadd.f32 0.0, %v870
    %872 = vdwg.mxu0
    %v873 = vrot.slane %v871, 4
    %v874 = vadd.f32 %v871, %v873
    %v875 = vrot.slane %v874, 2
    %v876 = vadd.f32 %v874, %v875
    %v877 = vrot.slane %v876, 1
    %v878 = vadd.f32 %v876, %v877
    %v879 = vmul.f32 %v878, 0.03125
    %v880 = vsub.f32 %v808, %v879
    %v881 = vmul.f32 %v880, %v880
    %882 = vmatpush.msra.mxu0 %v824
    %883 = vmatpush.msra.mxu0 %v823
    %884 = vmatpush.msra.mxu0 %v822
    %885 = vmatpush.msra.mxu0 %v821
    %886 = vmatpush.msra.mxu0 %v820
    %887 = vmatpush.msra.mxu0 %v819
    %888 = vmatpush.msra.mxu0 %v818
    %889 = vmatpush.msra.mxu0 %v817
    %890 = vmatpush.msra.mxu0 %v816
    %891 = vmatpush.msra.mxu0 %v815
    %892 = vmatpush.msra.mxu0 %v814
    %893 = vmatpush.msra.mxu0 %v813
    %894 = vmatpush.msra.mxu0 %v812
    %895 = vmatpush.msra.mxu0 %v811
    %896 = vmatpush.msra.mxu0 %v810
    %897 = vmatpush.msra.mxu0 %v809
    %898 = vmatmul.f32.gmra.mxu0 %v881
    %v899 = vpop.f32.mrf.mxu0
    %v900 = vadd.f32 0.0, %v899
    %901 = vdwg.mxu0
    %v903 = vsel %vm849, %v900, 0
    %905 = vmatpush.msra.mxu0 0.0
    %906 = vmatpush.msra.mxu0 0.0
    %907 = vmatpush.msra.mxu0 0.0
    %908 = vmatpush.msra.mxu0 0.0
    %909 = vmatpush.msra.mxu0 0.0
    %910 = vmatpush.msra.mxu0 0.0
    %911 = vmatpush.msra.mxu0 0.0
    %912 = vmatpush.msra.mxu0 0.0
    %913 = vmatpush.msra.mxu0 0.0
    %914 = vmatpush.msra.mxu0 0.0
    %915 = vmatpush.msra.mxu0 0.0
    %916 = vmatpush.msra.mxu0 0.0
    %917 = vmatpush.msra.mxu0 %v848
    %918 = vmatpush.msra.mxu0 %v847
    %919 = vmatpush.msra.mxu0 %v846
    %920 = vmatpush.msra.mxu0 %v845
    %921 = vmatmul.f32.gmra.mxu0 %v903
    %v922 = vpop.f32.mrf.mxu0
    %v923 = vadd.f32 0.0, %v922
    %924 = vdwg.mxu0
    %v925 = vrot.slane %v923, 4
    %v926 = vadd.f32 %v923, %v925
    %v927 = vrot.slane %v926, 2
    %v928 = vadd.f32 %v926, %v927
    %v929 = vrot.slane %v928, 1
    %v930 = vadd.f32 %v928, %v929
    %v931 = vmul.f32 %v930, 0.03125
    %v932 = vadd.f32 %v931, 1e-05
    %v933 = vrsqrt.pop %v932
    %v934 = vmul.f32 %v933, %v932
    %v935 = vmul.f32 %v934, %v933
    %v936 = vmul.f32 0.5, %v935
    %v937 = vsub.f32 1.5, %v936
    %v938 = vmul.f32 %v933, %v937
    %vm939 = vweird.f32 %v932
    %vm940 = vweird.f32 %v933
    %vm941 = vmor %vm939, %vm940
    %v942 = vsel %vm941, %v933, %v938
    %v943 = vmul.f32 %v880, %v942
    %944 = vst [vmem:[#allocation2 + $0x1] sm:$0xff] %v943
    %v945 = vld [vmem:[%s8] sm:$0xff]
    %v946 = vld [vmem:[#allocation2] sm:$0xff]
    %948 = vset.pattern.permute.xlu0 0
    %949 = vperm.xlu0 %948, %v945
    %v950 = vpop.permute.xlu0 %949
    %v952 = vmul.f32 %v950, %v946
    %s953 = scalar_lea.vmem %s2, 384
    %v954 = vld [vmem:[%s953] sm:$0xff]
    %v955 = vld [vmem:[%s953 + $0x8] sm:$0xff]
    %v956 = vld [vmem:[%s953 + $0x10] sm:$0xff]
    %v957 = vld [vmem:[%s953 + $0x18] sm:$0xff]
    %v958 = vld [vmem:[%s953 + $0x20] sm:$0xff]
    %v959 = vld [vmem:[%s953 + $0x28] sm:$0xff]
    %v960 = vld [vmem:[%s953 + $0x30] sm:$0xff]
    %v961 = vld [vmem:[%s953 + $0x38] sm:$0xff]
    %v962 = vld [vmem:[%s953 + $0x40] sm:$0xff]
    %v963 = vld [vmem:[%s953 + $0x48] sm:$0xff]
    %v964 = vld [vmem:[%s953 + $0x50] sm:$0xff]
    %v965 = vld [vmem:[%s953 + $0x58] sm:$0xff]
    %v966 = vld [vmem:[%s953 + $0x60] sm:$0xff]
    %v967 = vld [vmem:[%s953 + $0x68] sm:$0xff]
    %v968 = vld [vmem:[%s953 + $0x70] sm:$0xff]
    %v969 = vld [vmem:[%s953 + $0x78] sm:$0xff]
    %v970 = vld [vmem:[#allocation2 + $0x1] sm:$0xff]
    %s971 = scalar_lea.vmem %s2, 512
    %v972 = vld [vmem:[%s971] sm:$0xff]
    %v973 = vld [vmem:[%s971 + $0x8] sm:$0xff]
    %v974 = vld [vmem:[%s971 + $0x10] sm:$0xff]
    %v975 = vld [vmem:[%s971 + $0x18] sm:$0xff]
    %v976 = vld [vmem:[%s971 + $0x20] sm:$0xff]
    %v977 = vld [vmem:[%s971 + $0x28] sm:$0xff]
    %v978 = vld [vmem:[%s971 + $0x30] sm:$0xff]
    %v979 = vld [vmem:[%s971 + $0x38] sm:$0xff]
    %v980 = vld [vmem:[%s971 + $0x40] sm:$0xff]
    %v981 = vld [vmem:[%s971 + $0x48] sm:$0xff]
    %v982 = vld [vmem:[%s971 + $0x50] sm:$0xff]
    %v983 = vld [vmem:[%s971 + $0x58] sm:$0xff]
    %v984 = vld [vmem:[%s971 + $0x60] sm:$0xff]
    %v985 = vld [vmem:[%s971 + $0x68] sm:$0xff]
    %v986 = vld [vmem:[%s971 + $0x70] sm:$0xff]
    %v987 = vld [vmem:[%s971 + $0x78] sm:$0xff]
    %988 = vmatpush.msra.mxu0 %v987
    %989 = vmatpush.msra.mxu0 %v986
    %990 = vmatpush.msra.mxu0 %v985
    %991 = vmatpush.msra.mxu0 %v984
    %992 = vmatpush.msra.mxu0 %v983
    %993 = vmatpush.msra.mxu0 %v982
    %994 = vmatpush.msra.mxu0 %v981
    %995 = vmatpush.msra.mxu0 %v980
    %996 = vmatpush.msra.mxu0 %v979
    %997 = vmatpush.msra.mxu0 %v978
    %998 = vmatpush.msra.mxu0 %v977
    %999 = vmatpush.msra.mxu0 %v976
    %1000 = vmatpush.msra.mxu0 %v975
    %1001 = vmatpush.msra.mxu0 %v974
    %1002 = vmatpush.msra.mxu0 %v973
    %1003 = vmatpush.msra.mxu0 %v972
    %1004 = vmatmul.f32.gmra.mxu0 %v970
    %v1005 = vpop.f32.mrf.mxu0
    %v1006 = vadd.f32 0.0, %v1005
    %1007 = vdwg.mxu0
    %1008 = vmatpush.msra.mxu0 %v969
    %1009 = vmatpush.msra.mxu0 %v968
    %1010 = vmatpush.msra.mxu0 %v967
    %1011 = vmatpush.msra.mxu0 %v966
    %1012 = vmatpush.msra.mxu0 %v965
    %1013 = vmatpush.msra.mxu0 %v964
    %1014 = vmatpush.msra.mxu0 %v963
    %1015 = vmatpush.msra.mxu0 %v962
    %1016 = vmatpush.msra.mxu0 %v961
    %1017 = vmatpush.msra.mxu0 %v960
    %1018 = vmatpush.msra.mxu0 %v959
    %1019 = vmatpush.msra.mxu0 %v958
    %1020 = vmatpush.msra.mxu0 %v957
    %1021 = vmatpush.msra.mxu0 %v956
    %1022 = vmatpush.msra.mxu0 %v955
    %1023 = vmatpush.msra.mxu0 %v954
    %1024 = vmatmul.f32.gmra.mxu0 %v952
    %v1025 = vpop.f32.mrf.mxu0
    %v1026 = vadd.f32 %v1006, %v1025
    %1027 = vdwg.mxu0
    %v1028 = vld [vmem:[%s761] sm:$0xff]
    %v1029 = vld [vmem:[#allocation2 + $0x2] sm:$0xff]
    %1031 = vset.pattern.permute.xlu0 0
    %1032 = vperm.xlu0 %1031, %v1028
    %v1033 = vpop.permute.xlu0 %1032
    %v1035 = vmul.f32 %v1033, %v1029
    %s1036 = scalar_lea.vmem %s2, 640
    %v1037 = vld [vmem:[%s1036] sm:$0xff]
    %v1038 = vld [vmem:[%s1036 + $0x8] sm:$0xff]
    %v1039 = vld [vmem:[%s1036 + $0x10] sm:$0xff]
    %v1040 = vld [vmem:[%s1036 + $0x18] sm:$0xff]
    %v1041 = vld [vmem:[%s1036 + $0x20] sm:$0xff]
    %v1042 = vld [vmem:[%s1036 + $0x28] sm:$0xff]
    %v1043 = vld [vmem:[%s1036 + $0x30] sm:$0xff]
    %v1044 = vld [vmem:[%s1036 + $0x38] sm:$0xff]
    %v1045 = vld [vmem:[%s1036 + $0x40] sm:$0xff]
    %v1046 = vld [vmem:[%s1036 + $0x48] sm:$0xff]
    %v1047 = vld [vmem:[%s1036 + $0x50] sm:$0xff]
    %v1048 = vld [vmem:[%s1036 + $0x58] sm:$0xff]
    %v1049 = vld [vmem:[%s1036 + $0x60] sm:$0xff]
    %v1050 = vld [vmem:[%s1036 + $0x68] sm:$0xff]
    %v1051 = vld [vmem:[%s1036 + $0x70] sm:$0xff]
    %v1052 = vld [vmem:[%s1036 + $0x78] sm:$0xff]
    %1053 = vmatpush.msra.mxu0 %v1052
    %1054 = vmatpush.msra.mxu0 %v1051
    %1055 = vmatpush.msra.mxu0 %v1050
    %1056 = vmatpush.msra.mxu0 %v1049
    %1057 = vmatpush.msra.mxu0 %v1048
    %1058 = vmatpush.msra.mxu0 %v1047
    %1059 = vmatpush.msra.mxu0 %v1046
    %1060 = vmatpush.msra.mxu0 %v1045
    %1061 = vmatpush.msra.mxu0 %v1044
    %1062 = vmatpush.msra.mxu0 %v1043
    %1063 = vmatpush.msra.mxu0 %v1042
    %1064 = vmatpush.msra.mxu0 %v1041
    %1065 = vmatpush.msra.mxu0 %v1040
    %1066 = vmatpush.msra.mxu0 %v1039
    %1067 = vmatpush.msra.mxu0 %v1038
    %1068 = vmatpush.msra.mxu0 %v1037
    %1069 = vmatmul.f32.gmra.mxu0 %v1035
    %v1070 = vpop.f32.mrf.mxu0
    %v1071 = vadd.f32 0.0, %v1070
    %1072 = vdwg.mxu0
    %v1073 = vadd.f32 %v1026, %v1071
    %v1074 = vmax.f32 %v1073, 0.0
    %v1075 = vadd.f32 %v1074, %v674
    %v1076 = vld [vmem:[%s6] sm:$0xff]
    %v1077 = vld [vmem:[%s6 + $0x8] sm:$0xff]
    %v1078 = vld [vmem:[%s6 + $0x10] sm:$0xff]
    %v1079 = vld [vmem:[%s6 + $0x18] sm:$0xff]
    %v1080 = vld [vmem:[%s6 + $0x20] sm:$0xff]
    %v1081 = vld [vmem:[%s6 + $0x28] sm:$0xff]
    %v1082 = vld [vmem:[%s6 + $0x30] sm:$0xff]
    %v1083 = vld [vmem:[%s6 + $0x38] sm:$0xff]
    %v1084 = vld [vmem:[%s6 + $0x40] sm:$0xff]
    %v1085 = vld [vmem:[%s6 + $0x48] sm:$0xff]
    %v1086 = vld [vmem:[%s6 + $0x50] sm:$0xff]
    %v1087 = vld [vmem:[%s6 + $0x58] sm:$0xff]
    %v1088 = vld [vmem:[%s6 + $0x60] sm:$0xff]
    %v1089 = vld [vmem:[%s6 + $0x68] sm:$0xff]
    %v1090 = vld [vmem:[%s6 + $0x70] sm:$0xff]
    %v1091 = vld [vmem:[%s6 + $0x78] sm:$0xff]
    %1092 = vmatpush.msra.mxu0 %v1091
    %1093 = vmatpush.msra.mxu0 %v1090
    %1094 = vmatpush.msra.mxu0 %v1089
    %1095 = vmatpush.msra.mxu0 %v1088
    %1096 = vmatpush.msra.mxu0 %v1087
    %1097 = vmatpush.msra.mxu0 %v1086
    %1098 = vmatpush.msra.mxu0 %v1085
    %1099 = vmatpush.msra.mxu0 %v1084
    %1100 = vmatpush.msra.mxu0 %v1083
    %1101 = vmatpush.msra.mxu0 %v1082
    %1102 = vmatpush.msra.mxu0 %v1081
    %1103 = vmatpush.msra.mxu0 %v1080
    %1104 = vmatpush.msra.mxu0 %v1079
    %1105 = vmatpush.msra.mxu0 %v1078
    %1106 = vmatpush.msra.mxu0 %v1077
    %1107 = vmatpush.msra.mxu0 %v1076
    %1108 = vmatmul.f32.gmra.mxu0 %v1075
    %v1109 = vpop.f32.mrf.mxu0
    %v1110 = vadd.f32 0.0, %v1109
    %1111 = vdwg.mxu0
    %v1112 = vld [vmem:[%s5] sm:$0xff]
    %v1113 = vld [vmem:[%s5 + $0x8] sm:$0xff]
    %v1114 = vld [vmem:[%s5 + $0x10] sm:$0xff]
    %v1115 = vld [vmem:[%s5 + $0x18] sm:$0xff]
    %v1117 = vsel %vm849, %v1110, 0
    %1119 = vmatpush.msra.mxu0 0.0
    %1120 = vmatpush.msra.mxu0 0.0
    %1121 = vmatpush.msra.mxu0 0.0
    %1122 = vmatpush.msra.mxu0 0.0
    %1123 = vmatpush.msra.mxu0 0.0
    %1124 = vmatpush.msra.mxu0 0.0
    %1125 = vmatpush.msra.mxu0 0.0
    %1126 = vmatpush.msra.mxu0 0.0
    %1127 = vmatpush.msra.mxu0 0.0
    %1128 = vmatpush.msra.mxu0 0.0
    %1129 = vmatpush.msra.mxu0 0.0
    %1130 = vmatpush.msra.mxu0 0.0
    %1131 = vmatpush.msra.mxu0 %v1115
    %1132 = vmatpush.msra.mxu0 %v1114
    %1133 = vmatpush.msra.mxu0 %v1113
    %1134 = vmatpush.msra.mxu0 %v1112
    %1135 = vmatmul.f32.gmra.mxu0 %v1117
    %v1136 = vpop.f32.mrf.mxu0
    %v1137 = vadd.f32 0.0, %v1136
    %1138 = vdwg.mxu0
    %v1139 = vrot.slane %v1137, 4
    %v1140 = vadd.f32 %v1137, %v1139
    %v1141 = vrot.slane %v1140, 2
    %v1142 = vadd.f32 %v1140, %v1141
    %v1143 = vrot.slane %v1142, 1
    %v1144 = vadd.f32 %v1142, %v1143
    %v1145 = vmul.f32 %v1144, 0.03125
    %v1146 = vsub.f32 %v1075, %v1145
    %v1147 = vmul.f32 %v1146, %v1146
    %1148 = vmatpush.msra.mxu0 %v1091
    %1149 = vmatpush.msra.mxu0 %v1090
    %1150 = vmatpush.msra.mxu0 %v1089
    %1151 = vmatpush.msra.mxu0 %v1088
    %1152 = vmatpush.msra.mxu0 %v1087
    %1153 = vmatpush.msra.mxu0 %v1086
    %1154 = vmatpush.msra.mxu0 %v1085
    %1155 = vmatpush.msra.mxu0 %v1084
    %1156 = vmatpush.msra.mxu0 %v1083
    %1157 = vmatpush.msra.mxu0 %v1082
    %1158 = vmatpush.msra.mxu0 %v1081
    %1159 = vmatpush.msra.mxu0 %v1080
    %1160 = vmatpush.msra.mxu0 %v1079
    %1161 = vmatpush.msra.mxu0 %v1078
    %1162 = vmatpush.msra.mxu0 %v1077
    %1163 = vmatpush.msra.mxu0 %v1076
    %1164 = vmatmul.f32.gmra.mxu0 %v1147
    %v1165 = vpop.f32.mrf.mxu0
    %v1166 = vadd.f32 0.0, %v1165
    %1167 = vdwg.mxu0
    %v1169 = vsel %vm849, %v1166, 0
    %1171 = vmatpush.msra.mxu0 0.0
    %1172 = vmatpush.msra.mxu0 0.0
    %1173 = vmatpush.msra.mxu0 0.0
    %1174 = vmatpush.msra.mxu0 0.0
    %1175 = vmatpush.msra.mxu0 0.0
    %1176 = vmatpush.msra.mxu0 0.0
    %1177 = vmatpush.msra.mxu0 0.0
    %1178 = vmatpush.msra.mxu0 0.0
    %1179 = vmatpush.msra.mxu0 0.0
    %1180 = vmatpush.msra.mxu0 0.0
    %1181 = vmatpush.msra.mxu0 0.0
    %1182 = vmatpush.msra.mxu0 0.0
    %1183 = vmatpush.msra.mxu0 %v1115
    %1184 = vmatpush.msra.mxu0 %v1114
    %1185 = vmatpush.msra.mxu0 %v1113
    %1186 = vmatpush.msra.mxu0 %v1112
    %1187 = vmatmul.f32.gmra.mxu0 %v1169
    %v1188 = vpop.f32.mrf.mxu0
    %v1189 = vadd.f32 0.0, %v1188
    %1190 = vdwg.mxu0
    %v1191 = vrot.slane %v1189, 4
    %v1192 = vadd.f32 %v1189, %v1191
    %v1193 = vrot.slane %v1192, 2
    %v1194 = vadd.f32 %v1192, %v1193
    %v1195 = vrot.slane %v1194, 1
    %v1196 = vadd.f32 %v1194, %v1195
    %v1197 = vmul.f32 %v1196, 0.03125
    %v1198 = vadd.f32 %v1197, 1e-05
    %v1199 = vrsqrt.pop %v1198
    %v1200 = vmul.f32 %v1199, %v1198
    %v1201 = vmul.f32 %v1200, %v1199
    %v1202 = vmul.f32 0.5, %v1201
    %v1203 = vsub.f32 1.5, %v1202
    %v1204 = vmul.f32 %v1199, %v1203
    %vm1205 = vweird.f32 %v1198
    %vm1206 = vweird.f32 %v1199
    %vm1207 = vmor %vm1205, %vm1206
    %v1208 = vsel %vm1207, %v1199, %v1204
    %v1209 = vmul.f32 %v1146, %v1208
    %1210 = vst [vmem:[#allocation2 + $0x1] sm:$0xff] %v1209
    %v1211 = vld [vmem:[%s8] sm:$0xff]
    %v1212 = vld [vmem:[#allocation2] sm:$0xff]
    %1214 = vset.pattern.permute.xlu0 0
    %1215 = vperm.xlu0 %1214, %v1211
    %v1216 = vpop.permute.xlu0 %1215
    %v1218 = vmul.f32 %v1216, %v1212
    %s1219 = scalar_lea.vmem %s2, 768
    %v1220 = vld [vmem:[%s1219] sm:$0xff]
    %v1221 = vld [vmem:[%s1219 + $0x8] sm:$0xff]
    %v1222 = vld [vmem:[%s1219 + $0x10] sm:$0xff]
    %v1223 = vld [vmem:[%s1219 + $0x18] sm:$0xff]
    %v1224 = vld [vmem:[%s1219 + $0x20] sm:$0xff]
    %v1225 = vld [vmem:[%s1219 + $0x28] sm:$0xff]
    %v1226 = vld [vmem:[%s1219 + $0x30] sm:$0xff]
    %v1227 = vld [vmem:[%s1219 + $0x38] sm:$0xff]
    %v1228 = vld [vmem:[%s1219 + $0x40] sm:$0xff]
    %v1229 = vld [vmem:[%s1219 + $0x48] sm:$0xff]
    %v1230 = vld [vmem:[%s1219 + $0x50] sm:$0xff]
    %v1231 = vld [vmem:[%s1219 + $0x58] sm:$0xff]
    %v1232 = vld [vmem:[%s1219 + $0x60] sm:$0xff]
    %v1233 = vld [vmem:[%s1219 + $0x68] sm:$0xff]
    %v1234 = vld [vmem:[%s1219 + $0x70] sm:$0xff]
    %v1235 = vld [vmem:[%s1219 + $0x78] sm:$0xff]
    %v1236 = vld [vmem:[#allocation2 + $0x1] sm:$0xff]
    %s1237 = scalar_lea.vmem %s2, 896
    %v1238 = vld [vmem:[%s1237] sm:$0xff]
    %v1239 = vld [vmem:[%s1237 + $0x8] sm:$0xff]
    %v1240 = vld [vmem:[%s1237 + $0x10] sm:$0xff]
    %v1241 = vld [vmem:[%s1237 + $0x18] sm:$0xff]
    %v1242 = vld [vmem:[%s1237 + $0x20] sm:$0xff]
    %v1243 = vld [vmem:[%s1237 + $0x28] sm:$0xff]
    %v1244 = vld [vmem:[%s1237 + $0x30] sm:$0xff]
    %v1245 = vld [vmem:[%s1237 + $0x38] sm:$0xff]
    %v1246 = vld [vmem:[%s1237 + $0x40] sm:$0xff]
    %v1247 = vld [vmem:[%s1237 + $0x48] sm:$0xff]
    %v1248 = vld [vmem:[%s1237 + $0x50] sm:$0xff]
    %v1249 = vld [vmem:[%s1237 + $0x58] sm:$0xff]
    %v1250 = vld [vmem:[%s1237 + $0x60] sm:$0xff]
    %v1251 = vld [vmem:[%s1237 + $0x68] sm:$0xff]
    %v1252 = vld [vmem:[%s1237 + $0x70] sm:$0xff]
    %v1253 = vld [vmem:[%s1237 + $0x78] sm:$0xff]
    %1254 = vmatpush.msra.mxu0 %v1253
    %1255 = vmatpush.msra.mxu0 %v1252
    %1256 = vmatpush.msra.mxu0 %v1251
    %1257 = vmatpush.msra.mxu0 %v1250
    %1258 = vmatpush.msra.mxu0 %v1249
    %1259 = vmatpush.msra.mxu0 %v1248
    %1260 = vmatpush.msra.mxu0 %v1247
    %1261 = vmatpush.msra.mxu0 %v1246
    %1262 = vmatpush.msra.mxu0 %v1245
    %1263 = vmatpush.msra.mxu0 %v1244
    %1264 = vmatpush.msra.mxu0 %v1243
    %1265 = vmatpush.msra.mxu0 %v1242
    %1266 = vmatpush.msra.mxu0 %v1241
    %1267 = vmatpush.msra.mxu0 %v1240
    %1268 = vmatpush.msra.mxu0 %v1239
    %1269 = vmatpush.msra.mxu0 %v1238
    %1270 = vmatmul.f32.gmra.mxu0 %v1236
    %v1271 = vpop.f32.mrf.mxu0
    %v1272 = vadd.f32 0.0, %v1271
    %1273 = vdwg.mxu0
    %1274 = vmatpush.msra.mxu0 %v1235
    %1275 = vmatpush.msra.mxu0 %v1234
    %1276 = vmatpush.msra.mxu0 %v1233
    %1277 = vmatpush.msra.mxu0 %v1232
    %1278 = vmatpush.msra.mxu0 %v1231
    %1279 = vmatpush.msra.mxu0 %v1230
    %1280 = vmatpush.msra.mxu0 %v1229
    %1281 = vmatpush.msra.mxu0 %v1228
    %1282 = vmatpush.msra.mxu0 %v1227
    %1283 = vmatpush.msra.mxu0 %v1226
    %1284 = vmatpush.msra.mxu0 %v1225
    %1285 = vmatpush.msra.mxu0 %v1224
    %1286 = vmatpush.msra.mxu0 %v1223
    %1287 = vmatpush.msra.mxu0 %v1222
    %1288 = vmatpush.msra.mxu0 %v1221
    %1289 = vmatpush.msra.mxu0 %v1220
    %1290 = vmatmul.f32.gmra.mxu0 %v1218
    %v1291 = vpop.f32.mrf.mxu0
    %v1292 = vadd.f32 %v1272, %v1291
    %1293 = vdwg.mxu0
    %v1294 = vld [vmem:[%s761] sm:$0xff]
    %v1295 = vld [vmem:[#allocation2 + $0x2] sm:$0xff]
    %1297 = vset.pattern.permute.xlu0 0
    %1298 = vperm.xlu0 %1297, %v1294
    %v1299 = vpop.permute.xlu0 %1298
    %v1301 = vmul.f32 %v1299, %v1295
    %s1302 = scalar_lea.vmem %s2, 1024
    %v1303 = vld [vmem:[%s1302] sm:$0xff]
    %v1304 = vld [vmem:[%s1302 + $0x8] sm:$0xff]
    %v1305 = vld [vmem:[%s1302 + $0x10] sm:$0xff]
    %v1306 = vld [vmem:[%s1302 + $0x18] sm:$0xff]
    %v1307 = vld [vmem:[%s1302 + $0x20] sm:$0xff]
    %v1308 = vld [vmem:[%s1302 + $0x28] sm:$0xff]
    %v1309 = vld [vmem:[%s1302 + $0x30] sm:$0xff]
    %v1310 = vld [vmem:[%s1302 + $0x38] sm:$0xff]
    %v1311 = vld [vmem:[%s1302 + $0x40] sm:$0xff]
    %v1312 = vld [vmem:[%s1302 + $0x48] sm:$0xff]
    %v1313 = vld [vmem:[%s1302 + $0x50] sm:$0xff]
    %v1314 = vld [vmem:[%s1302 + $0x58] sm:$0xff]
    %v1315 = vld [vmem:[%s1302 + $0x60] sm:$0xff]
    %v1316 = vld [vmem:[%s1302 + $0x68] sm:$0xff]
    %v1317 = vld [vmem:[%s1302 + $0x70] sm:$0xff]
    %v1318 = vld [vmem:[%s1302 + $0x78] sm:$0xff]
    %1319 = vmatpush.msra.mxu0 %v1318
    %1320 = vmatpush.msra.mxu0 %v1317
    %1321 = vmatpush.msra.mxu0 %v1316
    %1322 = vmatpush.msra.mxu0 %v1315
    %1323 = vmatpush.msra.mxu0 %v1314
    %1324 = vmatpush.msra.mxu0 %v1313
    %1325 = vmatpush.msra.mxu0 %v1312
    %1326 = vmatpush.msra.mxu0 %v1311
    %1327 = vmatpush.msra.mxu0 %v1310
    %1328 = vmatpush.msra.mxu0 %v1309
    %1329 = vmatpush.msra.mxu0 %v1308
    %1330 = vmatpush.msra.mxu0 %v1307
    %1331 = vmatpush.msra.mxu0 %v1306
    %1332 = vmatpush.msra.mxu0 %v1305
    %1333 = vmatpush.msra.mxu0 %v1304
    %1334 = vmatpush.msra.mxu0 %v1303
    %1335 = vmatmul.f32.gmra.mxu0 %v1301
    %v1336 = vpop.f32.mrf.mxu0
    %v1337 = vadd.f32 0.0, %v1336
    %1338 = vdwg.mxu0
    %v1339 = vadd.f32 %v1292, %v1337
    %v1340 = vmax.f32 %v1339, 0.0
    %v1341 = vld [vmem:[%s6] sm:$0xff]
    %v1342 = vld [vmem:[%s6 + $0x8] sm:$0xff]
    %v1343 = vld [vmem:[%s6 + $0x10] sm:$0xff]
    %v1344 = vld [vmem:[%s6 + $0x18] sm:$0xff]
    %v1345 = vld [vmem:[%s6 + $0x20] sm:$0xff]
    %v1346 = vld [vmem:[%s6 + $0x28] sm:$0xff]
    %v1347 = vld [vmem:[%s6 + $0x30] sm:$0xff]
    %v1348 = vld [vmem:[%s6 + $0x38] sm:$0xff]
    %v1349 = vld [vmem:[%s6 + $0x40] sm:$0xff]
    %v1350 = vld [vmem:[%s6 + $0x48] sm:$0xff]
    %v1351 = vld [vmem:[%s6 + $0x50] sm:$0xff]
    %v1352 = vld [vmem:[%s6 + $0x58] sm:$0xff]
    %v1353 = vld [vmem:[%s6 + $0x60] sm:$0xff]
    %v1354 = vld [vmem:[%s6 + $0x68] sm:$0xff]
    %v1355 = vld [vmem:[%s6 + $0x70] sm:$0xff]
    %v1356 = vld [vmem:[%s6 + $0x78] sm:$0xff]
    %1357 = vmatpush.msra.mxu0 %v1356
    %1358 = vmatpush.msra.mxu0 %v1355
    %1359 = vmatpush.msra.mxu0 %v1354
    %1360 = vmatpush.msra.mxu0 %v1353
    %1361 = vmatpush.msra.mxu0 %v1352
    %1362 = vmatpush.msra.mxu0 %v1351
    %1363 = vmatpush.msra.mxu0 %v1350
    %1364 = vmatpush.msra.mxu0 %v1349
    %1365 = vmatpush.msra.mxu0 %v1348
    %1366 = vmatpush.msra.mxu0 %v1347
    %1367 = vmatpush.msra.mxu0 %v1346
    %1368 = vmatpush.msra.mxu0 %v1345
    %1369 = vmatpush.msra.mxu0 %v1344
    %1370 = vmatpush.msra.mxu0 %v1343
    %1371 = vmatpush.msra.mxu0 %v1342
    %1372 = vmatpush.msra.mxu0 %v1341
    %1373 = vmatmul.f32.gmra.mxu0 %v1340
    %v1374 = vpop.f32.mrf.mxu0
    %v1375 = vadd.f32 0.0, %v1374
    %1376 = vdwg.mxu0
    %v1377 = vld [vmem:[%s5] sm:$0xff]
    %v1378 = vld [vmem:[%s5 + $0x8] sm:$0xff]
    %v1379 = vld [vmem:[%s5 + $0x10] sm:$0xff]
    %v1380 = vld [vmem:[%s5 + $0x18] sm:$0xff]
    %v1382 = vsel %vm849, %v1375, 0
    %1384 = vmatpush.msra.mxu0 0.0
    %1385 = vmatpush.msra.mxu0 0.0
    %1386 = vmatpush.msra.mxu0 0.0
    %1387 = vmatpush.msra.mxu0 0.0
    %1388 = vmatpush.msra.mxu0 0.0
    %1389 = vmatpush.msra.mxu0 0.0
    %1390 = vmatpush.msra.mxu0 0.0
    %1391 = vmatpush.msra.mxu0 0.0
    %1392 = vmatpush.msra.mxu0 0.0
    %1393 = vmatpush.msra.mxu0 0.0
    %1394 = vmatpush.msra.mxu0 0.0
    %1395 = vmatpush.msra.mxu0 0.0
    %1396 = vmatpush.msra.mxu0 %v1380
    %1397 = vmatpush.msra.mxu0 %v1379
    %1398 = vmatpush.msra.mxu0 %v1378
    %1399 = vmatpush.msra.mxu0 %v1377
    %1400 = vmatmul.f32.gmra.mxu0 %v1382
    %v1401 = vpop.f32.mrf.mxu0
    %v1402 = vadd.f32 0.0, %v1401
    %1403 = vdwg.mxu0
    %v1404 = vrot.slane %v1402, 4
    %v1405 = vadd.f32 %v1402, %v1404
    %v1406 = vrot.slane %v1405, 2
    %v1407 = vadd.f32 %v1405, %v1406
    %v1408 = vrot.slane %v1407, 1
    %v1409 = vadd.f32 %v1407, %v1408
    %v1410 = vmul.f32 %v1409, 0.03125
    %v1411 = vsub.f32 %v1340, %v1410
    %v1412 = vmul.f32 %v1411, %v1411
    %1413 = vmatpush.msra.mxu0 %v1356
    %1414 = vmatpush.msra.mxu0 %v1355
    %1415 = vmatpush.msra.mxu0 %v1354
    %1416 = vmatpush.msra.mxu0 %v1353
    %1417 = vmatpush.msra.mxu0 %v1352
    %1418 = vmatpush.msra.mxu0 %v1351
    %1419 = vmatpush.msra.mxu0 %v1350
    %1420 = vmatpush.msra.mxu0 %v1349
    %1421 = vmatpush.msra.mxu0 %v1348
    %1422 = vmatpush.msra.mxu0 %v1347
    %1423 = vmatpush.msra.mxu0 %v1346
    %1424 = vmatpush.msra.mxu0 %v1345
    %1425 = vmatpush.msra.mxu0 %v1344
    %1426 = vmatpush.msra.mxu0 %v1343
    %1427 = vmatpush.msra.mxu0 %v1342
    %1428 = vmatpush.msra.mxu0 %v1341
    %1429 = vmatmul.f32.gmra.mxu0 %v1412
    %v1430 = vpop.f32.mrf.mxu0
    %v1431 = vadd.f32 0.0, %v1430
    %1432 = vdwg.mxu0
    %v1434 = vsel %vm849, %v1431, 0
    %1436 = vmatpush.msra.mxu0 0.0
    %1437 = vmatpush.msra.mxu0 0.0
    %1438 = vmatpush.msra.mxu0 0.0
    %1439 = vmatpush.msra.mxu0 0.0
    %1440 = vmatpush.msra.mxu0 0.0
    %1441 = vmatpush.msra.mxu0 0.0
    %1442 = vmatpush.msra.mxu0 0.0
    %1443 = vmatpush.msra.mxu0 0.0
    %1444 = vmatpush.msra.mxu0 0.0
    %1445 = vmatpush.msra.mxu0 0.0
    %1446 = vmatpush.msra.mxu0 0.0
    %1447 = vmatpush.msra.mxu0 0.0
    %1448 = vmatpush.msra.mxu0 %v1380
    %1449 = vmatpush.msra.mxu0 %v1379
    %1450 = vmatpush.msra.mxu0 %v1378
    %1451 = vmatpush.msra.mxu0 %v1377
    %1452 = vmatmul.f32.gmra.mxu0 %v1434
    %v1453 = vpop.f32.mrf.mxu0
    %v1454 = vadd.f32 0.0, %v1453
    %1455 = vdwg.mxu0
    %v1456 = vrot.slane %v1454, 4
    %v1457 = vadd.f32 %v1454, %v1456
    %v1458 = vrot.slane %v1457, 2
    %v1459 = vadd.f32 %v1457, %v1458
    %v1460 = vrot.slane %v1459, 1
    %v1461 = vadd.f32 %v1459, %v1460
    %v1462 = vmul.f32 %v1461, 0.03125
    %v1463 = vadd.f32 %v1462, 1e-05
    %v1464 = vrsqrt.pop %v1463
    %v1465 = vmul.f32 %v1464, %v1463
    %v1466 = vmul.f32 %v1465, %v1464
    %v1467 = vmul.f32 0.5, %v1466
    %v1468 = vsub.f32 1.5, %v1467
    %v1469 = vmul.f32 %v1464, %v1468
    %vm1470 = vweird.f32 %v1463
    %vm1471 = vweird.f32 %v1464
    %vm1472 = vmor %vm1470, %vm1471
    %v1473 = vsel %vm1472, %v1464, %v1469
    %v1474 = vmul.f32 %v1411, %v1473
    %1475 = vst [vmem:[#allocation2 + $0x1] sm:$0xff] %v1474
    %v1476 = vld [vmem:[%s8] sm:$0xff]
    %v1477 = vld [vmem:[#allocation2] sm:$0xff]
    %1479 = vset.pattern.permute.xlu0 0
    %1480 = vperm.xlu0 %1479, %v1476
    %v1481 = vpop.permute.xlu0 %1480
    %v1483 = vmul.f32 %v1481, %v1477
    %s1484 = scalar_lea.vmem %s2, 1152
    %v1485 = vld [vmem:[%s1484] sm:$0xff]
    %v1486 = vld [vmem:[%s1484 + $0x8] sm:$0xff]
    %v1487 = vld [vmem:[%s1484 + $0x10] sm:$0xff]
    %v1488 = vld [vmem:[%s1484 + $0x18] sm:$0xff]
    %v1489 = vld [vmem:[%s1484 + $0x20] sm:$0xff]
    %v1490 = vld [vmem:[%s1484 + $0x28] sm:$0xff]
    %v1491 = vld [vmem:[%s1484 + $0x30] sm:$0xff]
    %v1492 = vld [vmem:[%s1484 + $0x38] sm:$0xff]
    %v1493 = vld [vmem:[%s1484 + $0x40] sm:$0xff]
    %v1494 = vld [vmem:[%s1484 + $0x48] sm:$0xff]
    %v1495 = vld [vmem:[%s1484 + $0x50] sm:$0xff]
    %v1496 = vld [vmem:[%s1484 + $0x58] sm:$0xff]
    %v1497 = vld [vmem:[%s1484 + $0x60] sm:$0xff]
    %v1498 = vld [vmem:[%s1484 + $0x68] sm:$0xff]
    %v1499 = vld [vmem:[%s1484 + $0x70] sm:$0xff]
    %v1500 = vld [vmem:[%s1484 + $0x78] sm:$0xff]
    %v1501 = vld [vmem:[#allocation2 + $0x1] sm:$0xff]
    %s1502 = scalar_lea.vmem %s2, 1280
    %v1503 = vld [vmem:[%s1502] sm:$0xff]
    %v1504 = vld [vmem:[%s1502 + $0x8] sm:$0xff]
    %v1505 = vld [vmem:[%s1502 + $0x10] sm:$0xff]
    %v1506 = vld [vmem:[%s1502 + $0x18] sm:$0xff]
    %v1507 = vld [vmem:[%s1502 + $0x20] sm:$0xff]
    %v1508 = vld [vmem:[%s1502 + $0x28] sm:$0xff]
    %v1509 = vld [vmem:[%s1502 + $0x30] sm:$0xff]
    %v1510 = vld [vmem:[%s1502 + $0x38] sm:$0xff]
    %v1511 = vld [vmem:[%s1502 + $0x40] sm:$0xff]
    %v1512 = vld [vmem:[%s1502 + $0x48] sm:$0xff]
    %v1513 = vld [vmem:[%s1502 + $0x50] sm:$0xff]
    %v1514 = vld [vmem:[%s1502 + $0x58] sm:$0xff]
    %v1515 = vld [vmem:[%s1502 + $0x60] sm:$0xff]
    %v1516 = vld [vmem:[%s1502 + $0x68] sm:$0xff]
    %v1517 = vld [vmem:[%s1502 + $0x70] sm:$0xff]
    %v1518 = vld [vmem:[%s1502 + $0x78] sm:$0xff]
    %1519 = vmatpush.msra.mxu0 %v1518
    %1520 = vmatpush.msra.mxu0 %v1517
    %1521 = vmatpush.msra.mxu0 %v1516
    %1522 = vmatpush.msra.mxu0 %v1515
    %1523 = vmatpush.msra.mxu0 %v1514
    %1524 = vmatpush.msra.mxu0 %v1513
    %1525 = vmatpush.msra.mxu0 %v1512
    %1526 = vmatpush.msra.mxu0 %v1511
    %1527 = vmatpush.msra.mxu0 %v1510
    %1528 = vmatpush.msra.mxu0 %v1509
    %1529 = vmatpush.msra.mxu0 %v1508
    %1530 = vmatpush.msra.mxu0 %v1507
    %1531 = vmatpush.msra.mxu0 %v1506
    %1532 = vmatpush.msra.mxu0 %v1505
    %1533 = vmatpush.msra.mxu0 %v1504
    %1534 = vmatpush.msra.mxu0 %v1503
    %1535 = vmatmul.f32.gmra.mxu0 %v1501
    %v1536 = vpop.f32.mrf.mxu0
    %v1537 = vadd.f32 0.0, %v1536
    %1538 = vdwg.mxu0
    %1539 = vmatpush.msra.mxu0 %v1500
    %1540 = vmatpush.msra.mxu0 %v1499
    %1541 = vmatpush.msra.mxu0 %v1498
    %1542 = vmatpush.msra.mxu0 %v1497
    %1543 = vmatpush.msra.mxu0 %v1496
    %1544 = vmatpush.msra.mxu0 %v1495
    %1545 = vmatpush.msra.mxu0 %v1494
    %1546 = vmatpush.msra.mxu0 %v1493
    %1547 = vmatpush.msra.mxu0 %v1492
    %1548 = vmatpush.msra.mxu0 %v1491
    %1549 = vmatpush.msra.mxu0 %v1490
    %1550 = vmatpush.msra.mxu0 %v1489
    %1551 = vmatpush.msra.mxu0 %v1488
    %1552 = vmatpush.msra.mxu0 %v1487
    %1553 = vmatpush.msra.mxu0 %v1486
    %1554 = vmatpush.msra.mxu0 %v1485
    %1555 = vmatmul.f32.gmra.mxu0 %v1483
    %v1556 = vpop.f32.mrf.mxu0
    %v1557 = vadd.f32 %v1537, %v1556
    %1558 = vdwg.mxu0
    %v1559 = vld [vmem:[%s761] sm:$0xff]
    %v1560 = vld [vmem:[#allocation2 + $0x2] sm:$0xff]
    %1562 = vset.pattern.permute.xlu0 0
    %1563 = vperm.xlu0 %1562, %v1559
    %v1564 = vpop.permute.xlu0 %1563
    %v1566 = vmul.f32 %v1564, %v1560
    %s1567 = scalar_lea.vmem %s2, 1408
    %v1568 = vld [vmem:[%s1567] sm:$0xff]
    %v1569 = vld [vmem:[%s1567 + $0x8] sm:$0xff]
    %v1570 = vld [vmem:[%s1567 + $0x10] sm:$0xff]
    %v1571 = vld [vmem:[%s1567 + $0x18] sm:$0xff]
    %v1572 = vld [vmem:[%s1567 + $0x20] sm:$0xff]
    %v1573 = vld [vmem:[%s1567 + $0x28] sm:$0xff]
    %v1574 = vld [vmem:[%s1567 + $0x30] sm:$0xff]
    %v1575 = vld [vmem:[%s1567 + $0x38] sm:$0xff]
    %v1576 = vld [vmem:[%s1567 + $0x40] sm:$0xff]
    %v1577 = vld [vmem:[%s1567 + $0x48] sm:$0xff]
    %v1578 = vld [vmem:[%s1567 + $0x50] sm:$0xff]
    %v1579 = vld [vmem:[%s1567 + $0x58] sm:$0xff]
    %v1580 = vld [vmem:[%s1567 + $0x60] sm:$0xff]
    %v1581 = vld [vmem:[%s1567 + $0x68] sm:$0xff]
    %v1582 = vld [vmem:[%s1567 + $0x70] sm:$0xff]
    %v1583 = vld [vmem:[%s1567 + $0x78] sm:$0xff]
    %1584 = vmatpush.msra.mxu0 %v1583
    %1585 = vmatpush.msra.mxu0 %v1582
    %1586 = vmatpush.msra.mxu0 %v1581
    %1587 = vmatpush.msra.mxu0 %v1580
    %1588 = vmatpush.msra.mxu0 %v1579
    %1589 = vmatpush.msra.mxu0 %v1578
    %1590 = vmatpush.msra.mxu0 %v1577
    %1591 = vmatpush.msra.mxu0 %v1576
    %1592 = vmatpush.msra.mxu0 %v1575
    %1593 = vmatpush.msra.mxu0 %v1574
    %1594 = vmatpush.msra.mxu0 %v1573
    %1595 = vmatpush.msra.mxu0 %v1572
    %1596 = vmatpush.msra.mxu0 %v1571
    %1597 = vmatpush.msra.mxu0 %v1570
    %1598 = vmatpush.msra.mxu0 %v1569
    %1599 = vmatpush.msra.mxu0 %v1568
    %1600 = vmatmul.f32.gmra.mxu0 %v1566
    %v1601 = vpop.f32.mrf.mxu0
    %v1602 = vadd.f32 0.0, %v1601
    %1603 = vdwg.mxu0
    %v1604 = vadd.f32 %v1557, %v1602
    %v1605 = vmax.f32 %v1604, 0.0
    %v1606 = vadd.f32 %v1605, %v1075
    %v1607 = vld [vmem:[%s6] sm:$0xff]
    %v1608 = vld [vmem:[%s6 + $0x8] sm:$0xff]
    %v1609 = vld [vmem:[%s6 + $0x10] sm:$0xff]
    %v1610 = vld [vmem:[%s6 + $0x18] sm:$0xff]
    %v1611 = vld [vmem:[%s6 + $0x20] sm:$0xff]
    %v1612 = vld [vmem:[%s6 + $0x28] sm:$0xff]
    %v1613 = vld [vmem:[%s6 + $0x30] sm:$0xff]
    %v1614 = vld [vmem:[%s6 + $0x38] sm:$0xff]
    %v1615 = vld [vmem:[%s6 + $0x40] sm:$0xff]
    %v1616 = vld [vmem:[%s6 + $0x48] sm:$0xff]
    %v1617 = vld [vmem:[%s6 + $0x50] sm:$0xff]
    %v1618 = vld [vmem:[%s6 + $0x58] sm:$0xff]
    %v1619 = vld [vmem:[%s6 + $0x60] sm:$0xff]
    %v1620 = vld [vmem:[%s6 + $0x68] sm:$0xff]
    %v1621 = vld [vmem:[%s6 + $0x70] sm:$0xff]
    %v1622 = vld [vmem:[%s6 + $0x78] sm:$0xff]
    %1623 = vmatpush.msra.mxu0 %v1622
    %1624 = vmatpush.msra.mxu0 %v1621
    %1625 = vmatpush.msra.mxu0 %v1620
    %1626 = vmatpush.msra.mxu0 %v1619
    %1627 = vmatpush.msra.mxu0 %v1618
    %1628 = vmatpush.msra.mxu0 %v1617
    %1629 = vmatpush.msra.mxu0 %v1616
    %1630 = vmatpush.msra.mxu0 %v1615
    %1631 = vmatpush.msra.mxu0 %v1614
    %1632 = vmatpush.msra.mxu0 %v1613
    %1633 = vmatpush.msra.mxu0 %v1612
    %1634 = vmatpush.msra.mxu0 %v1611
    %1635 = vmatpush.msra.mxu0 %v1610
    %1636 = vmatpush.msra.mxu0 %v1609
    %1637 = vmatpush.msra.mxu0 %v1608
    %1638 = vmatpush.msra.mxu0 %v1607
    %1639 = vmatmul.f32.gmra.mxu0 %v1606
    %v1640 = vpop.f32.mrf.mxu0
    %v1641 = vadd.f32 0.0, %v1640
    %1642 = vdwg.mxu0
    %v1643 = vld [vmem:[%s5] sm:$0xff]
    %v1644 = vld [vmem:[%s5 + $0x8] sm:$0xff]
    %v1645 = vld [vmem:[%s5 + $0x10] sm:$0xff]
    %v1646 = vld [vmem:[%s5 + $0x18] sm:$0xff]
    %v1648 = vsel %vm849, %v1641, 0
    %1650 = vmatpush.msra.mxu0 0.0
    %1651 = vmatpush.msra.mxu0 0.0
    %1652 = vmatpush.msra.mxu0 0.0
    %1653 = vmatpush.msra.mxu0 0.0
    %1654 = vmatpush.msra.mxu0 0.0
    %1655 = vmatpush.msra.mxu0 0.0
    %1656 = vmatpush.msra.mxu0 0.0
    %1657 = vmatpush.msra.mxu0 0.0
    %1658 = vmatpush.msra.mxu0 0.0
    %1659 = vmatpush.msra.mxu0 0.0
    %1660 = vmatpush.msra.mxu0 0.0
    %1661 = vmatpush.msra.mxu0 0.0
    %1662 = vmatpush.msra.mxu0 %v1646
    %1663 = vmatpush.msra.mxu0 %v1645
    %1664 = vmatpush.msra.mxu0 %v1644
    %1665 = vmatpush.msra.mxu0 %v1643
    %1666 = vmatmul.f32.gmra.mxu0 %v1648
    %v1667 = vpop.f32.mrf.mxu0
    %v1668 = vadd.f32 0.0, %v1667
    %1669 = vdwg.mxu0
    %v1670 = vrot.slane %v1668, 4
    %v1671 = vadd.f32 %v1668, %v1670
    %v1672 = vrot.slane %v1671, 2
    %v1673 = vadd.f32 %v1671, %v1672
    %v1674 = vrot.slane %v1673, 1
    %v1675 = vadd.f32 %v1673, %v1674
    %v1676 = vmul.f32 %v1675, 0.03125
    %v1677 = vsub.f32 %v1606, %v1676
    %v1678 = vmul.f32 %v1677, %v1677
    %1679 = vmatpush.msra.mxu0 %v1622
    %1680 = vmatpush.msra.mxu0 %v1621
    %1681 = vmatpush.msra.mxu0 %v1620
    %1682 = vmatpush.msra.mxu0 %v1619
    %1683 = vmatpush.msra.mxu0 %v1618
    %1684 = vmatpush.msra.mxu0 %v1617
    %1685 = vmatpush.msra.mxu0 %v1616
    %1686 = vmatpush.msra.mxu0 %v1615
    %1687 = vmatpush.msra.mxu0 %v1614
    %1688 = vmatpush.msra.mxu0 %v1613
    %1689 = vmatpush.msra.mxu0 %v1612
    %1690 = vmatpush.msra.mxu0 %v1611
    %1691 = vmatpush.msra.mxu0 %v1610
    %1692 = vmatpush.msra.mxu0 %v1609
    %1693 = vmatpush.msra.mxu0 %v1608
    %1694 = vmatpush.msra.mxu0 %v1607
    %1695 = vmatmul.f32.gmra.mxu0 %v1678
    %v1696 = vpop.f32.mrf.mxu0
    %v1697 = vadd.f32 0.0, %v1696
    %1698 = vdwg.mxu0
    %v1700 = vsel %vm849, %v1697, 0
    %1702 = vmatpush.msra.mxu0 0.0
    %1703 = vmatpush.msra.mxu0 0.0
    %1704 = vmatpush.msra.mxu0 0.0
    %1705 = vmatpush.msra.mxu0 0.0
    %1706 = vmatpush.msra.mxu0 0.0
    %1707 = vmatpush.msra.mxu0 0.0
    %1708 = vmatpush.msra.mxu0 0.0
    %1709 = vmatpush.msra.mxu0 0.0
    %1710 = vmatpush.msra.mxu0 0.0
    %1711 = vmatpush.msra.mxu0 0.0
    %1712 = vmatpush.msra.mxu0 0.0
    %1713 = vmatpush.msra.mxu0 0.0
    %1714 = vmatpush.msra.mxu0 %v1646
    %1715 = vmatpush.msra.mxu0 %v1645
    %1716 = vmatpush.msra.mxu0 %v1644
    %1717 = vmatpush.msra.mxu0 %v1643
    %1718 = vmatmul.f32.gmra.mxu0 %v1700
    %v1719 = vpop.f32.mrf.mxu0
    %v1720 = vadd.f32 0.0, %v1719
    %1721 = vdwg.mxu0
    %v1722 = vrot.slane %v1720, 4
    %v1723 = vadd.f32 %v1720, %v1722
    %v1724 = vrot.slane %v1723, 2
    %v1725 = vadd.f32 %v1723, %v1724
    %v1726 = vrot.slane %v1725, 1
    %v1727 = vadd.f32 %v1725, %v1726
    %v1728 = vmul.f32 %v1727, 0.03125
    %v1729 = vadd.f32 %v1728, 1e-05
    %v1730 = vrsqrt.pop %v1729
    %v1731 = vmul.f32 %v1730, %v1729
    %v1732 = vmul.f32 %v1731, %v1730
    %v1733 = vmul.f32 0.5, %v1732
    %v1734 = vsub.f32 1.5, %v1733
    %v1735 = vmul.f32 %v1730, %v1734
    %vm1736 = vweird.f32 %v1729
    %vm1737 = vweird.f32 %v1730
    %vm1738 = vmor %vm1736, %vm1737
    %v1739 = vsel %vm1738, %v1730, %v1735
    %v1740 = vmul.f32 %v1677, %v1739
    %1741 = vst [vmem:[#allocation2 + $0x1] sm:$0xff] %v1740
    %v1742 = vld [vmem:[%s8] sm:$0xff]
    %v1743 = vld [vmem:[#allocation2] sm:$0xff]
    %1745 = vset.pattern.permute.xlu0 0
    %1746 = vperm.xlu0 %1745, %v1742
    %v1747 = vpop.permute.xlu0 %1746
    %v1749 = vmul.f32 %v1747, %v1743
    %s1750 = scalar_lea.vmem %s2, 1536
    %v1751 = vld [vmem:[%s1750] sm:$0xff]
    %v1752 = vld [vmem:[%s1750 + $0x8] sm:$0xff]
    %v1753 = vld [vmem:[%s1750 + $0x10] sm:$0xff]
    %v1754 = vld [vmem:[%s1750 + $0x18] sm:$0xff]
    %v1755 = vld [vmem:[%s1750 + $0x20] sm:$0xff]
    %v1756 = vld [vmem:[%s1750 + $0x28] sm:$0xff]
    %v1757 = vld [vmem:[%s1750 + $0x30] sm:$0xff]
    %v1758 = vld [vmem:[%s1750 + $0x38] sm:$0xff]
    %v1759 = vld [vmem:[%s1750 + $0x40] sm:$0xff]
    %v1760 = vld [vmem:[%s1750 + $0x48] sm:$0xff]
    %v1761 = vld [vmem:[%s1750 + $0x50] sm:$0xff]
    %v1762 = vld [vmem:[%s1750 + $0x58] sm:$0xff]
    %v1763 = vld [vmem:[%s1750 + $0x60] sm:$0xff]
    %v1764 = vld [vmem:[%s1750 + $0x68] sm:$0xff]
    %v1765 = vld [vmem:[%s1750 + $0x70] sm:$0xff]
    %v1766 = vld [vmem:[%s1750 + $0x78] sm:$0xff]
    %v1767 = vld [vmem:[#allocation2 + $0x1] sm:$0xff]
    %s1768 = scalar_lea.vmem %s2, 1664
    %v1769 = vld [vmem:[%s1768] sm:$0xff]
    %v1770 = vld [vmem:[%s1768 + $0x8] sm:$0xff]
    %v1771 = vld [vmem:[%s1768 + $0x10] sm:$0xff]
    %v1772 = vld [vmem:[%s1768 + $0x18] sm:$0xff]
    %v1773 = vld [vmem:[%s1768 + $0x20] sm:$0xff]
    %v1774 = vld [vmem:[%s1768 + $0x28] sm:$0xff]
    %v1775 = vld [vmem:[%s1768 + $0x30] sm:$0xff]
    %v1776 = vld [vmem:[%s1768 + $0x38] sm:$0xff]
    %v1777 = vld [vmem:[%s1768 + $0x40] sm:$0xff]
    %v1778 = vld [vmem:[%s1768 + $0x48] sm:$0xff]
    %v1779 = vld [vmem:[%s1768 + $0x50] sm:$0xff]
    %v1780 = vld [vmem:[%s1768 + $0x58] sm:$0xff]
    %v1781 = vld [vmem:[%s1768 + $0x60] sm:$0xff]
    %v1782 = vld [vmem:[%s1768 + $0x68] sm:$0xff]
    %v1783 = vld [vmem:[%s1768 + $0x70] sm:$0xff]
    %v1784 = vld [vmem:[%s1768 + $0x78] sm:$0xff]
    %1785 = vmatpush.msra.mxu0 %v1784
    %1786 = vmatpush.msra.mxu0 %v1783
    %1787 = vmatpush.msra.mxu0 %v1782
    %1788 = vmatpush.msra.mxu0 %v1781
    %1789 = vmatpush.msra.mxu0 %v1780
    %1790 = vmatpush.msra.mxu0 %v1779
    %1791 = vmatpush.msra.mxu0 %v1778
    %1792 = vmatpush.msra.mxu0 %v1777
    %1793 = vmatpush.msra.mxu0 %v1776
    %1794 = vmatpush.msra.mxu0 %v1775
    %1795 = vmatpush.msra.mxu0 %v1774
    %1796 = vmatpush.msra.mxu0 %v1773
    %1797 = vmatpush.msra.mxu0 %v1772
    %1798 = vmatpush.msra.mxu0 %v1771
    %1799 = vmatpush.msra.mxu0 %v1770
    %1800 = vmatpush.msra.mxu0 %v1769
    %1801 = vmatmul.f32.gmra.mxu0 %v1767
    %v1802 = vpop.f32.mrf.mxu0
    %v1803 = vadd.f32 0.0, %v1802
    %1804 = vdwg.mxu0
    %1805 = vmatpush.msra.mxu0 %v1766
    %1806 = vmatpush.msra.mxu0 %v1765
    %1807 = vmatpush.msra.mxu0 %v1764
    %1808 = vmatpush.msra.mxu0 %v1763
    %1809 = vmatpush.msra.mxu0 %v1762
    %1810 = vmatpush.msra.mxu0 %v1761
    %1811 = vmatpush.msra.mxu0 %v1760
    %1812 = vmatpush.msra.mxu0 %v1759
    %1813 = vmatpush.msra.mxu0 %v1758
    %1814 = vmatpush.msra.mxu0 %v1757
    %1815 = vmatpush.msra.mxu0 %v1756
    %1816 = vmatpush.msra.mxu0 %v1755
    %1817 = vmatpush.msra.mxu0 %v1754
    %1818 = vmatpush.msra.mxu0 %v1753
    %1819 = vmatpush.msra.mxu0 %v1752
    %1820 = vmatpush.msra.mxu0 %v1751
    %1821 = vmatmul.f32.gmra.mxu0 %v1749
    %v1822 = vpop.f32.mrf.mxu0
    %v1823 = vadd.f32 %v1803, %v1822
    %1824 = vdwg.mxu0
    %v1825 = vld [vmem:[%s761] sm:$0xff]
    %v1826 = vld [vmem:[#allocation2 + $0x2] sm:$0xff]
    %1828 = vset.pattern.permute.xlu0 0
    %1829 = vperm.xlu0 %1828, %v1825
    %v1830 = vpop.permute.xlu0 %1829
    %v1832 = vmul.f32 %v1830, %v1826
    %s1833 = scalar_lea.vmem %s2, 1792
    %v1834 = vld [vmem:[%s1833] sm:$0xff]
    %v1835 = vld [vmem:[%s1833 + $0x8] sm:$0xff]
    %v1836 = vld [vmem:[%s1833 + $0x10] sm:$0xff]
    %v1837 = vld [vmem:[%s1833 + $0x18] sm:$0xff]
    %v1838 = vld [vmem:[%s1833 + $0x20] sm:$0xff]
    %v1839 = vld [vmem:[%s1833 + $0x28] sm:$0xff]
    %v1840 = vld [vmem:[%s1833 + $0x30] sm:$0xff]
    %v1841 = vld [vmem:[%s1833 + $0x38] sm:$0xff]
    %v1842 = vld [vmem:[%s1833 + $0x40] sm:$0xff]
    %v1843 = vld [vmem:[%s1833 + $0x48] sm:$0xff]
    %v1844 = vld [vmem:[%s1833 + $0x50] sm:$0xff]
    %v1845 = vld [vmem:[%s1833 + $0x58] sm:$0xff]
    %v1846 = vld [vmem:[%s1833 + $0x60] sm:$0xff]
    %v1847 = vld [vmem:[%s1833 + $0x68] sm:$0xff]
    %v1848 = vld [vmem:[%s1833 + $0x70] sm:$0xff]
    %v1849 = vld [vmem:[%s1833 + $0x78] sm:$0xff]
    %1850 = vmatpush.msra.mxu0 %v1849
    %1851 = vmatpush.msra.mxu0 %v1848
    %1852 = vmatpush.msra.mxu0 %v1847
    %1853 = vmatpush.msra.mxu0 %v1846
    %1854 = vmatpush.msra.mxu0 %v1845
    %1855 = vmatpush.msra.mxu0 %v1844
    %1856 = vmatpush.msra.mxu0 %v1843
    %1857 = vmatpush.msra.mxu0 %v1842
    %1858 = vmatpush.msra.mxu0 %v1841
    %1859 = vmatpush.msra.mxu0 %v1840
    %1860 = vmatpush.msra.mxu0 %v1839
    %1861 = vmatpush.msra.mxu0 %v1838
    %1862 = vmatpush.msra.mxu0 %v1837
    %1863 = vmatpush.msra.mxu0 %v1836
    %1864 = vmatpush.msra.mxu0 %v1835
    %1865 = vmatpush.msra.mxu0 %v1834
    %1866 = vmatmul.f32.gmra.mxu0 %v1832
    %v1867 = vpop.f32.mrf.mxu0
    %v1868 = vadd.f32 0.0, %v1867
    %1869 = vdwg.mxu0
    %v1870 = vadd.f32 %v1823, %v1868
    %v1871 = vmax.f32 %v1870, 0.0
    %v1872 = vld [vmem:[%s6] sm:$0xff]
    %v1873 = vld [vmem:[%s6 + $0x8] sm:$0xff]
    %v1874 = vld [vmem:[%s6 + $0x10] sm:$0xff]
    %v1875 = vld [vmem:[%s6 + $0x18] sm:$0xff]
    %v1876 = vld [vmem:[%s6 + $0x20] sm:$0xff]
    %v1877 = vld [vmem:[%s6 + $0x28] sm:$0xff]
    %v1878 = vld [vmem:[%s6 + $0x30] sm:$0xff]
    %v1879 = vld [vmem:[%s6 + $0x38] sm:$0xff]
    %v1880 = vld [vmem:[%s6 + $0x40] sm:$0xff]
    %v1881 = vld [vmem:[%s6 + $0x48] sm:$0xff]
    %v1882 = vld [vmem:[%s6 + $0x50] sm:$0xff]
    %v1883 = vld [vmem:[%s6 + $0x58] sm:$0xff]
    %v1884 = vld [vmem:[%s6 + $0x60] sm:$0xff]
    %v1885 = vld [vmem:[%s6 + $0x68] sm:$0xff]
    %v1886 = vld [vmem:[%s6 + $0x70] sm:$0xff]
    %v1887 = vld [vmem:[%s6 + $0x78] sm:$0xff]
    %1888 = vmatpush.msra.mxu0 %v1887
    %1889 = vmatpush.msra.mxu0 %v1886
    %1890 = vmatpush.msra.mxu0 %v1885
    %1891 = vmatpush.msra.mxu0 %v1884
    %1892 = vmatpush.msra.mxu0 %v1883
    %1893 = vmatpush.msra.mxu0 %v1882
    %1894 = vmatpush.msra.mxu0 %v1881
    %1895 = vmatpush.msra.mxu0 %v1880
    %1896 = vmatpush.msra.mxu0 %v1879
    %1897 = vmatpush.msra.mxu0 %v1878
    %1898 = vmatpush.msra.mxu0 %v1877
    %1899 = vmatpush.msra.mxu0 %v1876
    %1900 = vmatpush.msra.mxu0 %v1875
    %1901 = vmatpush.msra.mxu0 %v1874
    %1902 = vmatpush.msra.mxu0 %v1873
    %1903 = vmatpush.msra.mxu0 %v1872
    %1904 = vmatmul.f32.gmra.mxu0 %v1871
    %v1905 = vpop.f32.mrf.mxu0
    %v1906 = vadd.f32 0.0, %v1905
    %1907 = vdwg.mxu0
    %v1908 = vld [vmem:[%s5] sm:$0xff]
    %v1909 = vld [vmem:[%s5 + $0x8] sm:$0xff]
    %v1910 = vld [vmem:[%s5 + $0x10] sm:$0xff]
    %v1911 = vld [vmem:[%s5 + $0x18] sm:$0xff]
    %v1913 = vsel %vm849, %v1906, 0
    %1915 = vmatpush.msra.mxu0 0.0
    %1916 = vmatpush.msra.mxu0 0.0
    %1917 = vmatpush.msra.mxu0 0.0
    %1918 = vmatpush.msra.mxu0 0.0
    %1919 = vmatpush.msra.mxu0 0.0
    %1920 = vmatpush.msra.mxu0 0.0
    %1921 = vmatpush.msra.mxu0 0.0
    %1922 = vmatpush.msra.mxu0 0.0
    %1923 = vmatpush.msra.mxu0 0.0
    %1924 = vmatpush.msra.mxu0 0.0
    %1925 = vmatpush.msra.mxu0 0.0
    %1926 = vmatpush.msra.mxu0 0.0
    %1927 = vmatpush.msra.mxu0 %v1911
    %1928 = vmatpush.msra.mxu0 %v1910
    %1929 = vmatpush.msra.mxu0 %v1909
    %1930 = vmatpush.msra.mxu0 %v1908
    %1931 = vmatmul.f32.gmra.mxu0 %v1913
    %v1932 = vpop.f32.mrf.mxu0
    %v1933 = vadd.f32 0.0, %v1932
    %1934 = vdwg.mxu0
    %v1935 = vrot.slane %v1933, 4
    %v1936 = vadd.f32 %v1933, %v1935
    %v1937 = vrot.slane %v1936, 2
    %v1938 = vadd.f32 %v1936, %v1937
    %v1939 = vrot.slane %v1938, 1
    %v1940 = vadd.f32 %v1938, %v1939
    %v1941 = vmul.f32 %v1940, 0.03125
    %v1942 = vsub.f32 %v1871, %v1941
    %v1943 = vmul.f32 %v1942, %v1942
    %1944 = vmatpush.msra.mxu0 %v1887
    %1945 = vmatpush.msra.mxu0 %v1886
    %1946 = vmatpush.msra.mxu0 %v1885
    %1947 = vmatpush.msra.mxu0 %v1884
    %1948 = vmatpush.msra.mxu0 %v1883
    %1949 = vmatpush.msra.mxu0 %v1882
    %1950 = vmatpush.msra.mxu0 %v1881
    %1951 = vmatpush.msra.mxu0 %v1880
    %1952 = vmatpush.msra.mxu0 %v1879
    %1953 = vmatpush.msra.mxu0 %v1878
    %1954 = vmatpush.msra.mxu0 %v1877
    %1955 = vmatpush.msra.mxu0 %v1876
    %1956 = vmatpush.msra.mxu0 %v1875
    %1957 = vmatpush.msra.mxu0 %v1874
    %1958 = vmatpush.msra.mxu0 %v1873
    %1959 = vmatpush.msra.mxu0 %v1872
    %1960 = vmatmul.f32.gmra.mxu0 %v1943
    %v1961 = vpop.f32.mrf.mxu0
    %v1962 = vadd.f32 0.0, %v1961
    %1963 = vdwg.mxu0
    %v1965 = vsel %vm849, %v1962, 0
    %1967 = vmatpush.msra.mxu0 0.0
    %1968 = vmatpush.msra.mxu0 0.0
    %1969 = vmatpush.msra.mxu0 0.0
    %1970 = vmatpush.msra.mxu0 0.0
    %1971 = vmatpush.msra.mxu0 0.0
    %1972 = vmatpush.msra.mxu0 0.0
    %1973 = vmatpush.msra.mxu0 0.0
    %1974 = vmatpush.msra.mxu0 0.0
    %1975 = vmatpush.msra.mxu0 0.0
    %1976 = vmatpush.msra.mxu0 0.0
    %1977 = vmatpush.msra.mxu0 0.0
    %1978 = vmatpush.msra.mxu0 0.0
    %1979 = vmatpush.msra.mxu0 %v1911
    %1980 = vmatpush.msra.mxu0 %v1910
    %1981 = vmatpush.msra.mxu0 %v1909
    %1982 = vmatpush.msra.mxu0 %v1908
    %1983 = vmatmul.f32.gmra.mxu0 %v1965
    %v1984 = vpop.f32.mrf.mxu0
    %v1985 = vadd.f32 0.0, %v1984
    %1986 = vdwg.mxu0
    %v1987 = vrot.slane %v1985, 4
    %v1988 = vadd.f32 %v1985, %v1987
    %v1989 = vrot.slane %v1988, 2
    %v1990 = vadd.f32 %v1988, %v1989
    %v1991 = vrot.slane %v1990, 1
    %v1992 = vadd.f32 %v1990, %v1991
    %v1993 = vmul.f32 %v1992, 0.03125
    %v1994 = vadd.f32 %v1993, 1e-05
    %v1995 = vrsqrt.pop %v1994
    %v1996 = vmul.f32 %v1995, %v1994
    %v1997 = vmul.f32 %v1996, %v1995
    %v1998 = vmul.f32 0.5, %v1997
    %v1999 = vsub.f32 1.5, %v1998
    %v2000 = vmul.f32 %v1995, %v1999
    %vm2001 = vweird.f32 %v1994
    %vm2002 = vweird.f32 %v1995
    %vm2003 = vmor %vm2001, %vm2002
    %v2004 = vsel %vm2003, %v1995, %v2000
    %v2005 = vmul.f32 %v1942, %v2004
    %2006 = vst [vmem:[#allocation2 + $0x1] sm:$0xff] %v2005
    %v2007 = vld [vmem:[%s8] sm:$0xff]
    %v2008 = vld [vmem:[#allocation2] sm:$0xff]
    %2010 = vset.pattern.permute.xlu0 0
    %2011 = vperm.xlu0 %2010, %v2007
    %v2012 = vpop.permute.xlu0 %2011
    %v2014 = vmul.f32 %v2012, %v2008
    %s2015 = scalar_lea.vmem %s2, 1920
    %v2016 = vld [vmem:[%s2015] sm:$0xff]
    %v2017 = vld [vmem:[%s2015 + $0x8] sm:$0xff]
    %v2018 = vld [vmem:[%s2015 + $0x10] sm:$0xff]
    %v2019 = vld [vmem:[%s2015 + $0x18] sm:$0xff]
    %v2020 = vld [vmem:[%s2015 + $0x20] sm:$0xff]
    %v2021 = vld [vmem:[%s2015 + $0x28] sm:$0xff]
    %v2022 = vld [vmem:[%s2015 + $0x30] sm:$0xff]
    %v2023 = vld [vmem:[%s2015 + $0x38] sm:$0xff]
    %v2024 = vld [vmem:[%s2015 + $0x40] sm:$0xff]
    %v2025 = vld [vmem:[%s2015 + $0x48] sm:$0xff]
    %v2026 = vld [vmem:[%s2015 + $0x50] sm:$0xff]
    %v2027 = vld [vmem:[%s2015 + $0x58] sm:$0xff]
    %v2028 = vld [vmem:[%s2015 + $0x60] sm:$0xff]
    %v2029 = vld [vmem:[%s2015 + $0x68] sm:$0xff]
    %v2030 = vld [vmem:[%s2015 + $0x70] sm:$0xff]
    %v2031 = vld [vmem:[%s2015 + $0x78] sm:$0xff]
    %v2032 = vld [vmem:[#allocation2 + $0x1] sm:$0xff]
    %s2033 = scalar_lea.vmem %s2, 2048
    %v2034 = vld [vmem:[%s2033] sm:$0xff]
    %v2035 = vld [vmem:[%s2033 + $0x8] sm:$0xff]
    %v2036 = vld [vmem:[%s2033 + $0x10] sm:$0xff]
    %v2037 = vld [vmem:[%s2033 + $0x18] sm:$0xff]
    %v2038 = vld [vmem:[%s2033 + $0x20] sm:$0xff]
    %v2039 = vld [vmem:[%s2033 + $0x28] sm:$0xff]
    %v2040 = vld [vmem:[%s2033 + $0x30] sm:$0xff]
    %v2041 = vld [vmem:[%s2033 + $0x38] sm:$0xff]
    %v2042 = vld [vmem:[%s2033 + $0x40] sm:$0xff]
    %v2043 = vld [vmem:[%s2033 + $0x48] sm:$0xff]
    %v2044 = vld [vmem:[%s2033 + $0x50] sm:$0xff]
    %v2045 = vld [vmem:[%s2033 + $0x58] sm:$0xff]
    %v2046 = vld [vmem:[%s2033 + $0x60] sm:$0xff]
    %v2047 = vld [vmem:[%s2033 + $0x68] sm:$0xff]
    %v2048 = vld [vmem:[%s2033 + $0x70] sm:$0xff]
    %v2049 = vld [vmem:[%s2033 + $0x78] sm:$0xff]
    %2050 = vmatpush.msra.mxu0 %v2049
    %2051 = vmatpush.msra.mxu0 %v2048
    %2052 = vmatpush.msra.mxu0 %v2047
    %2053 = vmatpush.msra.mxu0 %v2046
    %2054 = vmatpush.msra.mxu0 %v2045
    %2055 = vmatpush.msra.mxu0 %v2044
    %2056 = vmatpush.msra.mxu0 %v2043
    %2057 = vmatpush.msra.mxu0 %v2042
    %2058 = vmatpush.msra.mxu0 %v2041
    %2059 = vmatpush.msra.mxu0 %v2040
    %2060 = vmatpush.msra.mxu0 %v2039
    %2061 = vmatpush.msra.mxu0 %v2038
    %2062 = vmatpush.msra.mxu0 %v2037
    %2063 = vmatpush.msra.mxu0 %v2036
    %2064 = vmatpush.msra.mxu0 %v2035
    %2065 = vmatpush.msra.mxu0 %v2034
    %2066 = vmatmul.f32.gmra.mxu0 %v2032
    %v2067 = vpop.f32.mrf.mxu0
    %v2068 = vadd.f32 0.0, %v2067
    %2069 = vdwg.mxu0
    %2070 = vmatpush.msra.mxu0 %v2031
    %2071 = vmatpush.msra.mxu0 %v2030
    %2072 = vmatpush.msra.mxu0 %v2029
    %2073 = vmatpush.msra.mxu0 %v2028
    %2074 = vmatpush.msra.mxu0 %v2027
    %2075 = vmatpush.msra.mxu0 %v2026
    %2076 = vmatpush.msra.mxu0 %v2025
    %2077 = vmatpush.msra.mxu0 %v2024
    %2078 = vmatpush.msra.mxu0 %v2023
    %2079 = vmatpush.msra.mxu0 %v2022
    %2080 = vmatpush.msra.mxu0 %v2021
    %2081 = vmatpush.msra.mxu0 %v2020
    %2082 = vmatpush.msra.mxu0 %v2019
    %2083 = vmatpush.msra.mxu0 %v2018
    %2084 = vmatpush.msra.mxu0 %v2017
    %2085 = vmatpush.msra.mxu0 %v2016
    %2086 = vmatmul.f32.gmra.mxu0 %v2014
    %v2087 = vpop.f32.mrf.mxu0
    %v2088 = vadd.f32 %v2068, %v2087
    %2089 = vdwg.mxu0
    %v2090 = vld [vmem:[%s761] sm:$0xff]
    %v2091 = vld [vmem:[#allocation2 + $0x2] sm:$0xff]
    %2093 = vset.pattern.permute.xlu0 0
    %2094 = vperm.xlu0 %2093, %v2090
    %v2095 = vpop.permute.xlu0 %2094
    %v2097 = vmul.f32 %v2095, %v2091
    %s2098 = scalar_lea.vmem %s2, 2176
    %v2099 = vld [vmem:[%s2098] sm:$0xff]
    %v2100 = vld [vmem:[%s2098 + $0x8] sm:$0xff]
    %v2101 = vld [vmem:[%s2098 + $0x10] sm:$0xff]
    %v2102 = vld [vmem:[%s2098 + $0x18] sm:$0xff]
    %v2103 = vld [vmem:[%s2098 + $0x20] sm:$0xff]
    %v2104 = vld [vmem:[%s2098 + $0x28] sm:$0xff]
    %v2105 = vld [vmem:[%s2098 + $0x30] sm:$0xff]
    %v2106 = vld [vmem:[%s2098 + $0x38] sm:$0xff]
    %v2107 = vld [vmem:[%s2098 + $0x40] sm:$0xff]
    %v2108 = vld [vmem:[%s2098 + $0x48] sm:$0xff]
    %v2109 = vld [vmem:[%s2098 + $0x50] sm:$0xff]
    %v2110 = vld [vmem:[%s2098 + $0x58] sm:$0xff]
    %v2111 = vld [vmem:[%s2098 + $0x60] sm:$0xff]
    %v2112 = vld [vmem:[%s2098 + $0x68] sm:$0xff]
    %v2113 = vld [vmem:[%s2098 + $0x70] sm:$0xff]
    %v2114 = vld [vmem:[%s2098 + $0x78] sm:$0xff]
    %2115 = vmatpush.msra.mxu0 %v2114
    %2116 = vmatpush.msra.mxu0 %v2113
    %2117 = vmatpush.msra.mxu0 %v2112
    %2118 = vmatpush.msra.mxu0 %v2111
    %2119 = vmatpush.msra.mxu0 %v2110
    %2120 = vmatpush.msra.mxu0 %v2109
    %2121 = vmatpush.msra.mxu0 %v2108
    %2122 = vmatpush.msra.mxu0 %v2107
    %2123 = vmatpush.msra.mxu0 %v2106
    %2124 = vmatpush.msra.mxu0 %v2105
    %2125 = vmatpush.msra.mxu0 %v2104
    %2126 = vmatpush.msra.mxu0 %v2103
    %2127 = vmatpush.msra.mxu0 %v2102
    %2128 = vmatpush.msra.mxu0 %v2101
    %2129 = vmatpush.msra.mxu0 %v2100
    %2130 = vmatpush.msra.mxu0 %v2099
    %2131 = vmatmul.f32.gmra.mxu0 %v2097
    %v2132 = vpop.f32.mrf.mxu0
    %v2133 = vadd.f32 0.0, %v2132
    %2134 = vdwg.mxu0
    %v2135 = vadd.f32 %v2088, %v2133
    %v2136 = vmax.f32 %v2135, 0.0
    %v2137 = vadd.f32 %v2136, %v1606
    %v2138 = vld [vmem:[%s6] sm:$0xff]
    %v2139 = vld [vmem:[%s6 + $0x8] sm:$0xff]
    %v2140 = vld [vmem:[%s6 + $0x10] sm:$0xff]
    %v2141 = vld [vmem:[%s6 + $0x18] sm:$0xff]
    %v2142 = vld [vmem:[%s6 + $0x20] sm:$0xff]
    %v2143 = vld [vmem:[%s6 + $0x28] sm:$0xff]
    %v2144 = vld [vmem:[%s6 + $0x30] sm:$0xff]
    %v2145 = vld [vmem:[%s6 + $0x38] sm:$0xff]
    %v2146 = vld [vmem:[%s6 + $0x40] sm:$0xff]
    %v2147 = vld [vmem:[%s6 + $0x48] sm:$0xff]
    %v2148 = vld [vmem:[%s6 + $0x50] sm:$0xff]
    %v2149 = vld [vmem:[%s6 + $0x58] sm:$0xff]
    %v2150 = vld [vmem:[%s6 + $0x60] sm:$0xff]
    %v2151 = vld [vmem:[%s6 + $0x68] sm:$0xff]
    %v2152 = vld [vmem:[%s6 + $0x70] sm:$0xff]
    %v2153 = vld [vmem:[%s6 + $0x78] sm:$0xff]
    %2154 = vmatpush.msra.mxu0 %v2153
    %2155 = vmatpush.msra.mxu0 %v2152
    %2156 = vmatpush.msra.mxu0 %v2151
    %2157 = vmatpush.msra.mxu0 %v2150
    %2158 = vmatpush.msra.mxu0 %v2149
    %2159 = vmatpush.msra.mxu0 %v2148
    %2160 = vmatpush.msra.mxu0 %v2147
    %2161 = vmatpush.msra.mxu0 %v2146
    %2162 = vmatpush.msra.mxu0 %v2145
    %2163 = vmatpush.msra.mxu0 %v2144
    %2164 = vmatpush.msra.mxu0 %v2143
    %2165 = vmatpush.msra.mxu0 %v2142
    %2166 = vmatpush.msra.mxu0 %v2141
    %2167 = vmatpush.msra.mxu0 %v2140
    %2168 = vmatpush.msra.mxu0 %v2139
    %2169 = vmatpush.msra.mxu0 %v2138
    %2170 = vmatmul.f32.gmra.mxu0 %v2137
    %v2171 = vpop.f32.mrf.mxu0
    %v2172 = vadd.f32 0.0, %v2171
    %2173 = vdwg.mxu0
    %v2174 = vld [vmem:[%s5] sm:$0xff]
    %v2175 = vld [vmem:[%s5 + $0x8] sm:$0xff]
    %v2176 = vld [vmem:[%s5 + $0x10] sm:$0xff]
    %v2177 = vld [vmem:[%s5 + $0x18] sm:$0xff]
    %v2179 = vsel %vm849, %v2172, 0
    %2181 = vmatpush.msra.mxu0 0.0
    %2182 = vmatpush.msra.mxu0 0.0
    %2183 = vmatpush.msra.mxu0 0.0
    %2184 = vmatpush.msra.mxu0 0.0
    %2185 = vmatpush.msra.mxu0 0.0
    %2186 = vmatpush.msra.mxu0 0.0
    %2187 = vmatpush.msra.mxu0 0.0
    %2188 = vmatpush.msra.mxu0 0.0
    %2189 = vmatpush.msra.mxu0 0.0
    %2190 = vmatpush.msra.mxu0 0.0
    %2191 = vmatpush.msra.mxu0 0.0
    %2192 = vmatpush.msra.mxu0 0.0
    %2193 = vmatpush.msra.mxu0 %v2177
    %2194 = vmatpush.msra.mxu0 %v2176
    %2195 = vmatpush.msra.mxu0 %v2175
    %2196 = vmatpush.msra.mxu0 %v2174
    %2197 = vmatmul.f32.gmra.mxu0 %v2179
    %v2198 = vpop.f32.mrf.mxu0
    %v2199 = vadd.f32 0.0, %v2198
    %2200 = vdwg.mxu0
    %v2201 = vrot.slane %v2199, 4
    %v2202 = vadd.f32 %v2199, %v2201
    %v2203 = vrot.slane %v2202, 2
    %v2204 = vadd.f32 %v2202, %v2203
    %v2205 = vrot.slane %v2204, 1
    %v2206 = vadd.f32 %v2204, %v2205
    %v2207 = vmul.f32 %v2206, 0.03125
    %v2208 = vsub.f32 %v2137, %v2207
    %v2209 = vmul.f32 %v2208, %v2208
    %2210 = vmatpush.msra.mxu0 %v2153
    %2211 = vmatpush.msra.mxu0 %v2152
    %2212 = vmatpush.msra.mxu0 %v2151
    %2213 = vmatpush.msra.mxu0 %v2150
    %2214 = vmatpush.msra.mxu0 %v2149
    %2215 = vmatpush.msra.mxu0 %v2148
    %2216 = vmatpush.msra.mxu0 %v2147
    %2217 = vmatpush.msra.mxu0 %v2146
    %2218 = vmatpush.msra.mxu0 %v2145
    %2219 = vmatpush.msra.mxu0 %v2144
    %2220 = vmatpush.msra.mxu0 %v2143
    %2221 = vmatpush.msra.mxu0 %v2142
    %2222 = vmatpush.msra.mxu0 %v2141
    %2223 = vmatpush.msra.mxu0 %v2140
    %2224 = vmatpush.msra.mxu0 %v2139
    %2225 = vmatpush.msra.mxu0 %v2138
    %2226 = vmatmul.f32.gmra.mxu0 %v2209
    %v2227 = vpop.f32.mrf.mxu0
    %v2228 = vadd.f32 0.0, %v2227
    %2229 = vdwg.mxu0
    %v2231 = vsel %vm849, %v2228, 0
    %2233 = vmatpush.msra.mxu0 0.0
    %2234 = vmatpush.msra.mxu0 0.0
    %2235 = vmatpush.msra.mxu0 0.0
    %2236 = vmatpush.msra.mxu0 0.0
    %2237 = vmatpush.msra.mxu0 0.0
    %2238 = vmatpush.msra.mxu0 0.0
    %2239 = vmatpush.msra.mxu0 0.0
    %2240 = vmatpush.msra.mxu0 0.0
    %2241 = vmatpush.msra.mxu0 0.0
    %2242 = vmatpush.msra.mxu0 0.0
    %2243 = vmatpush.msra.mxu0 0.0
    %2244 = vmatpush.msra.mxu0 0.0
    %2245 = vmatpush.msra.mxu0 %v2177
    %2246 = vmatpush.msra.mxu0 %v2176
    %2247 = vmatpush.msra.mxu0 %v2175
    %2248 = vmatpush.msra.mxu0 %v2174
    %2249 = vmatmul.f32.gmra.mxu0 %v2231
    %v2250 = vpop.f32.mrf.mxu0
    %v2251 = vadd.f32 0.0, %v2250
    %2252 = vdwg.mxu0
    %v2253 = vrot.slane %v2251, 4
    %v2254 = vadd.f32 %v2251, %v2253
    %v2255 = vrot.slane %v2254, 2
    %v2256 = vadd.f32 %v2254, %v2255
    %v2257 = vrot.slane %v2256, 1
    %v2258 = vadd.f32 %v2256, %v2257
    %v2259 = vmul.f32 %v2258, 0.03125
    %v2260 = vadd.f32 %v2259, 1e-05
    %v2261 = vrsqrt.pop %v2260
    %v2262 = vmul.f32 %v2261, %v2260
    %v2263 = vmul.f32 %v2262, %v2261
    %v2264 = vmul.f32 0.5, %v2263
    %v2265 = vsub.f32 1.5, %v2264
    %v2266 = vmul.f32 %v2261, %v2265
    %vm2267 = vweird.f32 %v2260
    %vm2268 = vweird.f32 %v2261
    %vm2269 = vmor %vm2267, %vm2268
    %v2270 = vsel %vm2269, %v2261, %v2266
    %v2271 = vmul.f32 %v2208, %v2270
    %2272 = vmatpush.msra.mxu0 %v2153
    %2273 = vmatpush.msra.mxu0 %v2152
    %2274 = vmatpush.msra.mxu0 %v2151
    %2275 = vmatpush.msra.mxu0 %v2150
    %2276 = vmatpush.msra.mxu0 %v2149
    %2277 = vmatpush.msra.mxu0 %v2148
    %2278 = vmatpush.msra.mxu0 %v2147
    %2279 = vmatpush.msra.mxu0 %v2146
    %2280 = vmatpush.msra.mxu0 %v2145
    %2281 = vmatpush.msra.mxu0 %v2144
    %2282 = vmatpush.msra.mxu0 %v2143
    %2283 = vmatpush.msra.mxu0 %v2142
    %2284 = vmatpush.msra.mxu0 %v2141
    %2285 = vmatpush.msra.mxu0 %v2140
    %2286 = vmatpush.msra.mxu0 %v2139
    %2287 = vmatpush.msra.mxu0 %v2138
    %2288 = vmatmul.f32.gmra.mxu0 %v2271
    %v2289 = vpop.f32.mrf.mxu0
    %v2290 = vadd.f32 0.0, %v2289
    %2291 = vdwg.mxu0
    %v2292 = vld [vmem:[%s7] sm:$0x3]
    %vm2293 = vcmask 64512
    %v2295 = vsel %vm2293, %v2292, 0
    %2297 = vmatpush.msra.mxu0 0.0
    %2298 = vmatpush.msra.mxu0 0.0
    %2299 = vmatpush.msra.mxu0 0.0
    %2300 = vmatpush.msra.mxu0 0.0
    %2301 = vmatpush.msra.mxu0 0.0
    %2302 = vmatpush.msra.mxu0 0.0
    %2303 = vmatpush.msra.mxu0 0.0
    %2304 = vmatpush.msra.mxu0 0.0
    %2305 = vmatpush.msra.mxu0 0.0
    %2306 = vmatpush.msra.mxu0 0.0
    %2307 = vmatpush.msra.mxu0 0.0
    %2308 = vmatpush.msra.mxu0 0.0
    %2309 = vmatpush.msra.mxu0 0.0
    %2310 = vmatpush.msra.mxu0 0.0
    %2311 = vmatpush.msra.mxu0 0.0
    %2312 = vmatpush.msra.mxu0 %v2290
    %2313 = vmatmul.f32.gmra.mxu0 %v2295
    %v2314 = vpop.f32.mrf.mxu0
    %v2315 = vadd.f32 0.0, %v2314
    %2316 = vdwg.mxu0
    %vm2317 = vcmask 254976
    %2318 = vst.msk [vmem:[#allocation3] sm:$0x3] %vm2317, %v2315
    // Predicated region
    $region38: #{res8_forward.1} parent=1 // pred_check
      _
    $region39: #{res8_forward.1} parent=1 // pred_check_branch
      %2320 = sbr.rel (0) target = $region41
    $region40: #{res8_forward.1} parent=1 // pred_region
      %2322 = vsyncadd [#allocation4], 0
      %s2324 = sshll.u32 [#allocation3], 4
      %s2325 = int_to_ptr.vmem [resolvable:$true] %s2324
      %s2326 = sshll.u32 %s9, 4
      %s2327 = int_to_ptr.hbm [resolvable:$true] %s2326
      %2329 = dma.vmem_to_hbm [thread:$0]  %s2325, 32, %s2327, [#allocation4]
    $region41: #{res8_forward.1} parent=1 // pred_fallthru
      _
    // Predicated region
    $region42: #{res8_forward.1} parent=1 // pred_check
      _
    $region43: #{res8_forward.1} parent=1 // pred_check_branch
      %2331 = sbr.rel (0) target = $region45
    $region44: #{res8_forward.1} parent=1 // pred_region
      %2333 = dma.done [#allocation4], 32
    $region45: #{res8_forward.1} parent=1 // pred_fallthru
      _
    %2334 = vsyncpa [#allocation4], 1

</llo_original>
